<compile_context>
chip_gen: v6e
topology: v6e:2x2x1
jax: 0.10.0
libtpu: 0.0.40
codegen_flags: <defaults>
</compile_context>

<pallas_src>
import jax
import jax.numpy as jnp
from jax.experimental import pallas as pl
from jax.experimental.pallas import tpu as pltpu


def _round_up(x, m):
    return (x + m - 1) // m * m


def _feature_processor_kernel(x_ref, wa_ref, ba_ref, w2_ref, b2_ref,
                              feat_ref, conf_ref):
    """One batch tile.

    x_ref   : (TB, d_in)   f32   streamed input rows
    wa_ref  : (d_in, NP)   bf16  cols [0:d_out]=W1, col d_out=Wc, rest 0 (resident)
    ba_ref  : (1, NP)      f32   cols [0:d_out]=b1, col d_out=bc, rest 0 (resident)
    w2_ref  : (NP, d_out)  bf16  rows [0:d_out]=W2, rest 0               (resident)
    b2_ref  : (1, d_out)   f32                                           (resident)
    feat_ref: (TB, d_out)  f32   processed features
    conf_ref: (TB, 1)      f32   sigmoid confidence
    """
    d_out = feat_ref.shape[-1]

    # Cast streamed f32 rows to bf16 on the VPU (free under the HBM roofline).
    xb = x_ref[...].astype(jnp.bfloat16)

    # Layer 1 + confidence logit, fused into one MXU pass over x (f32 accumulate).
    hc = jnp.dot(xb, wa_ref[...], preferred_element_type=jnp.float32) + ba_ref[...]

    # Confidence: pick the pre-ReLU logit at lane d_out (masked lane-reduce on the
    # XLU), then sigmoid only that (TB, 1) column on the EUP.
    col = jax.lax.broadcasted_iota(jnp.int32, hc.shape, 1)
    logit = jnp.sum(jnp.where(col == d_out, hc, 0.0), axis=-1, keepdims=True)
    conf_ref[...] = jax.nn.sigmoid(logit)

    # Layer 2 (bf16 operands, f32 accumulate). ReLU'ing the confidence / padding
    # columns is harmless: the matching rows of w2_ref are zero.
    h = jnp.maximum(hc, 0.0).astype(jnp.bfloat16)
    feat_ref[...] = jnp.dot(h, w2_ref[...],
                            preferred_element_type=jnp.float32) + b2_ref[...]


def prepare_params(params):
    """One-time packing of raw (w1, b1, w2, b2, wc, bc) into the kernel layout."""
    w1, b1, w2, b2, wc, bc = params
    d_in, d_out = w1.shape
    NP = _round_up(d_out + 1, 128)            # lane-aligned fused layer-1 width

    wa = (jnp.zeros((d_in, NP), jnp.float32)
          .at[:, :d_out].set(w1)
          .at[:, d_out].set(wc[:, 0]))
    ba = (jnp.zeros((1, NP), jnp.float32)
          .at[:, :d_out].set(b1)
          .at[:, d_out].set(bc[0, 0]))
    w2p = jnp.zeros((NP, d_out), jnp.float32).at[:d_out, :].set(w2)

    return (wa.astype(jnp.bfloat16), ba,
            w2p.astype(jnp.bfloat16), b2.reshape(1, d_out).astype(jnp.float32))


def feature_processor(x, prepared, *, block_b=1024):
    """x: (B, d_in) f32. Returns (processed (B, d_out) f32, confidence (B,) f32)."""
    wa, ba, w2p, b2 = prepared
    B, d_in = x.shape
    NP = wa.shape[1]
    d_out = w2p.shape[1]

    # Batch tiling: large tiles amortize the ~0.35us per-grid-step cost. Ragged
    # batches are handled by Pallas block masking (rows are independent; OOB
    # output rows are discarded), so x is never padded/copied.
    # v7x note: for large B pick block_b so the grid length is an even multiple
    # (>=4 steps) to load-balance the "parallel" axis across both TensorCores.
    TB = min(block_b, _round_up(B, 8))
    grid = (pl.cdiv(B, TB),)

    flops = 2 * B * (d_in * NP + NP * d_out)
    bytes_accessed = (B * d_in * 4                    # streamed x (f32)
                      + B * d_out * 4 + B * 4         # split outputs (f32)
                      + wa.size * 2 + w2p.size * 2
                      + ba.size * 4 + b2.size * 4)

    feat, conf = pl.pallas_call(
        _feature_processor_kernel,
        out_shape=(jax.ShapeDtypeStruct((B, d_out), jnp.float32),
                   jax.ShapeDtypeStruct((B, 1), jnp.float32)),
        grid=grid,
        in_specs=[
            pl.BlockSpec((TB, d_in), lambda i: (i, 0)),    # x: streamed per tile
            pl.BlockSpec((d_in, NP), lambda i: (0, 0)),    # fused W1|Wc: resident
            pl.BlockSpec((1, NP), lambda i: (0, 0)),       # fused b1|bc: resident
            pl.BlockSpec((NP, d_out), lambda i: (0, 0)),   # padded W2  : resident
            pl.BlockSpec((1, d_out), lambda i: (0, 0)),    # b2         : resident
        ],
        out_specs=(pl.BlockSpec((TB, d_out), lambda i: (i, 0)),
                   pl.BlockSpec((TB, 1), lambda i: (i, 0))),
        compiler_params=pltpu.CompilerParams(
            dimension_semantics=("parallel",),     # shard batch over v7x's 2 TCs
            vmem_limit_bytes=32 * 1024 * 1024,
        ),
        cost_estimate=pl.CostEstimate(
            flops=flops,
            transcendentals=B,                     # sigmoid on one lane per row
            bytes_accessed=bytes_accessed,
        ),
    )(x, wa, ba, w2p, b2)

    return feat, conf.reshape(B)


def init_params(key, input_dim, output_dim):
    """Deterministic synthetic init mimicking nn.Linear's uniform(-1/sqrt(fan_in))."""
    ks = jax.random.split(key, 6)

    def lin(kw, kb, fan_in, fan_out):
        bound = 1.0 / jnp.sqrt(fan_in)
        w = jax.random.uniform(kw, (fan_in, fan_out), jnp.float32, -bound, bound)
        b = jax.random.uniform(kb, (1, fan_out), jnp.float32, -bound, bound)
        return w, b

    w1, b1 = lin(ks[0], ks[1], input_dim, output_dim)
    w2, b2 = lin(ks[2], ks[3], output_dim, output_dim)
    wc, bc = lin(ks[4], ks[5], input_dim, 1)
    return (w1, b1, w2, b2, wc, bc)


def _reference(x, params):
    """Pure-JAX reference with the same bf16-operand / f32-accumulate recipe.

    (vs. the f32 torch module this introduces ~1e-2 relative drift, accepted.)
    """
    w1, b1, w2, b2, wc, bc = params
    xb = x.astype(jnp.bfloat16)
    h = jnp.dot(xb, w1.astype(jnp.bfloat16), preferred_element_type=jnp.float32) + b1
    h = jnp.maximum(h, 0.0)
    y = jnp.dot(h.astype(jnp.bfloat16), w2.astype(jnp.bfloat16),
                preferred_element_type=jnp.float32) + b2
    c = jnp.dot(xb, wc.astype(jnp.bfloat16), preferred_element_type=jnp.float32) + bc
    return y, jax.nn.sigmoid(c)[:, 0]


if __name__ == "__main__":
    key = jax.random.PRNGKey(0)
    k_x, k_p = jax.random.split(key)

    # batch=1000, d_in=d_out=32 — matches the torch module's Linear widths and
    # exercises both the single-tile default path and (below) a 4-step grid with
    # a ragged last block.
    batch, input_dim, output_dim = 1000, 32, 32
    x = jax.random.normal(k_x, (batch, input_dim), jnp.float32)
    params = init_params(k_p, input_dim, output_dim)
    prepared = prepare_params(params)          # one-time weight packing (hoisted)

    feat, conf = feature_processor(x, prepared)                      # grid=(1,)
    feat_mt, conf_mt = feature_processor(x, prepared, block_b=256)   # grid=(4,), ragged tail
    jax.block_until_ready((feat, conf, feat_mt, conf_mt))

    # Shapes match the torch module's outputs.
    assert feat.shape == (batch, output_dim)
    assert conf.shape == (batch,)

    # Numerics match a same-precision pure-JAX reference on both tiling paths.
    ref_feat, ref_conf = _reference(x, params)
    assert jnp.allclose(feat, ref_feat, rtol=1e-3, atol=1e-3)
    assert jnp.allclose(conf, ref_conf, rtol=1e-3, atol=1e-3)
    assert jnp.allclose(feat_mt, ref_feat, rtol=1e-3, atol=1e-3)
    assert jnp.allclose(conf_mt, ref_conf, rtol=1e-3, atol=1e-3)

    print("KERNEL_OK")
</pallas_src>

<mosaic_0001>
module attributes {stable_mosaic.version = 11 : i64} {
  func.func @_feature_processor_kernel(%arg0: i32, %arg1: memref<1000x32xf32, #tpu.memory_space<vmem>>, %arg2: memref<32x128xbf16, #tpu.memory_space<vmem>>, %arg3: memref<1x128xf32, #tpu.memory_space<vmem>>, %arg4: memref<128x32xbf16, #tpu.memory_space<vmem>>, %arg5: memref<1x32xf32, #tpu.memory_space<vmem>>, %arg6: memref<1000x32xf32, #tpu.memory_space<vmem>>, %arg7: memref<1000x1xf32, #tpu.memory_space<vmem>>) attributes {dimension_semantics = [#tpu.dimension_semantics<parallel>], iteration_bounds = array<i64: 1>, scalar_prefetch = 0 : i64, scratch_operands = 0 : i64, tpu.core_type = #tpu.core_type<tc>, window_params = [{transform_indices = @transform_0, window_bounds = array<i64: 1000, 32>}, {pipeline_mode = #tpu.pipeline_mode<synchronous>, transform_indices = @transform_1, window_bounds = array<i64: 32, 128>}, {pipeline_mode = #tpu.pipeline_mode<synchronous>, transform_indices = @transform_2, window_bounds = array<i64: 1, 128>}, {pipeline_mode = #tpu.pipeline_mode<synchronous>, transform_indices = @transform_3, window_bounds = array<i64: 128, 32>}, {pipeline_mode = #tpu.pipeline_mode<synchronous>, transform_indices = @transform_4, window_bounds = array<i64: 1, 32>}, {transform_indices = @transform_5, window_bounds = array<i64: 1000, 32>}, {transform_indices = @transform_6, window_bounds = array<i64: 1000, 1>}]} {
    %c0 = arith.constant 0 : index
    %c0_0 = arith.constant 0 : index
    %0 = vector.load %arg1[%c0, %c0_0] : memref<1000x32xf32, #tpu.memory_space<vmem>>, vector<1000x32xf32>
    %1 = arith.truncf %0 : vector<1000x32xf32> to vector<1000x32xbf16>
    %c0_1 = arith.constant 0 : index
    %c0_2 = arith.constant 0 : index
    %2 = vector.load %arg2[%c0_1, %c0_2] : memref<32x128xbf16, #tpu.memory_space<vmem>>, vector<32x128xbf16>
    %cst = arith.constant dense<0.000000e+00> : vector<1000x128xf32>
    %3 = tpu.matmul %1, %2, %cst {dimension_numbers = #tpu.dot_dimension_numbers<[1], [0], [0], [1], [0, 0, 1, 1], [], []>} : vector<1000x32xbf16>, vector<32x128xbf16>, vector<1000x128xf32> -> vector<1000x128xf32>
    %c0_3 = arith.constant 0 : index
    %c0_4 = arith.constant 0 : index
    %4 = vector.load %arg3[%c0_3, %c0_4] : memref<1x128xf32, #tpu.memory_space<vmem>>, vector<1x128xf32>
    %5 = vector.broadcast %4 : vector<1x128xf32> to vector<1000x128xf32>
    %6 = arith.addf %3, %5 : vector<1000x128xf32>
    %7 = tpu.iota {dimensions = array<i32: 1>} : vector<1000x128xi32>
    %c32_i32 = arith.constant 32 : i32
    %8 = vector.broadcast %c32_i32 : i32 to vector<1000x128xi32>
    %9 = arith.cmpi eq, %7, %8 : vector<1000x128xi32>
    %cst_5 = arith.constant 0.000000e+00 : f32
    %10 = vector.broadcast %cst_5 : f32 to vector<1000x128xf32>
    %11 = arith.select %9, %6, %10 : vector<1000x128xi1>, vector<1000x128xf32>
    %cst_6 = arith.constant dense<0.000000e+00> : vector<1000xf32>
    %12 = vector.multi_reduction <add>, %11, %cst_6 [1] : vector<1000x128xf32> to vector<1000xf32>
    %13 = vector.shape_cast %12 : vector<1000xf32> to vector<1000x1xf32>
    %14 = arith.negf %13 : vector<1000x1xf32>
    %15 = math.exp %14 : vector<1000x1xf32>
    %cst_7 = arith.constant 1.000000e+00 : f32
    %16 = vector.broadcast %cst_7 : f32 to vector<1000x1xf32>
    %17 = arith.addf %16, %15 : vector<1000x1xf32>
    %18 = arith.divf %16, %17 : vector<1000x1xf32>
    %c0_8 = arith.constant 0 : index
    %c0_9 = arith.constant 0 : index
    %19 = vector.load %arg7[%c0_8, %c0_9] : memref<1000x1xf32, #tpu.memory_space<vmem>>, vector<1000x1xf32>
    tpu.vector_store %arg7[%c0_8, %c0_9], %18 {strides = array<i32>} : memref<1000x1xf32, #tpu.memory_space<vmem>>, vector<1000x1xf32>,
    %cst_10 = arith.constant 0.000000e+00 : f32
    %20 = vector.broadcast %cst_10 : f32 to vector<1000x128xf32>
    %21 = arith.maximumf %6, %20 : vector<1000x128xf32>
    %22 = arith.truncf %21 : vector<1000x128xf32> to vector<1000x128xbf16>
    %c0_11 = arith.constant 0 : index
    %c0_12 = arith.constant 0 : index
    %23 = vector.load %arg4[%c0_11, %c0_12] : memref<128x32xbf16, #tpu.memory_space<vmem>>, vector<128x32xbf16>
    %cst_13 = arith.constant dense<0.000000e+00> : vector<1000x32xf32>
    %24 = tpu.matmul %22, %23, %cst_13 {dimension_numbers = #tpu.dot_dimension_numbers<[1], [0], [0], [1], [0, 0, 1, 1], [], []>} : vector<1000x128xbf16>, vector<128x32xbf16>, vector<1000x32xf32> -> vector<1000x32xf32>
    %c0_14 = arith.constant 0 : index
    %c0_15 = arith.constant 0 : index
    %25 = vector.load %arg5[%c0_14, %c0_15] : memref<1x32xf32, #tpu.memory_space<vmem>>, vector<1x32xf32>
    %26 = vector.broadcast %25 : vector<1x32xf32> to vector<1000x32xf32>
    %27 = arith.addf %24, %26 : vector<1000x32xf32>
    %c0_16 = arith.constant 0 : index
    %c0_17 = arith.constant 0 : index
    %28 = vector.load %arg6[%c0_16, %c0_17] : memref<1000x32xf32, #tpu.memory_space<vmem>>, vector<1000x32xf32>
    tpu.vector_store %arg6[%c0_16, %c0_17], %27 {strides = array<i32>} : memref<1000x32xf32, #tpu.memory_space<vmem>>, vector<1000x32xf32>,
    return
  }
  func.func @transform_0(%arg0: i32) -> (i32, i32) {
    %c0_i32 = arith.constant 0 : i32
    %c0_i32_0 = arith.constant 0 : i32
    return %arg0, %c0_i32 : i32, i32
  }
  func.func @transform_1(%arg0: i32) -> (i32, i32) {
    %c0_i32 = arith.constant 0 : i32
    %c0_i32_0 = arith.constant 0 : i32
    %c0_i32_1 = arith.constant 0 : i32
    return %c0_i32, %c0_i32_0 : i32, i32
  }
  func.func @transform_2(%arg0: i32) -> (i32, i32) {
    %c0_i32 = arith.constant 0 : i32
    %c0_i32_0 = arith.constant 0 : i32
    %c0_i32_1 = arith.constant 0 : i32
    return %c0_i32, %c0_i32_0 : i32, i32
  }
  func.func @transform_3(%arg0: i32) -> (i32, i32) {
    %c0_i32 = arith.constant 0 : i32
    %c0_i32_0 = arith.constant 0 : i32
    %c0_i32_1 = arith.constant 0 : i32
    return %c0_i32, %c0_i32_0 : i32, i32
  }
  func.func @transform_4(%arg0: i32) -> (i32, i32) {
    %c0_i32 = arith.constant 0 : i32
    %c0_i32_0 = arith.constant 0 : i32
    %c0_i32_1 = arith.constant 0 : i32
    return %c0_i32, %c0_i32_0 : i32, i32
  }
  func.func @transform_5(%arg0: i32) -> (i32, i32) {
    %c0_i32 = arith.constant 0 : i32
    %c0_i32_0 = arith.constant 0 : i32
    return %arg0, %c0_i32 : i32, i32
  }
  func.func @transform_6(%arg0: i32) -> (i32, i32) {
    %c0_i32 = arith.constant 0 : i32
    %c0_i32_0 = arith.constant 0 : i32
    return %arg0, %c0_i32 : i32, i32
  }
}

</mosaic_0001>

<llo_original>
// kernel: tpu_custom_call.1
$region0: #{tpu_custom_call.1}
  #allocation0 [shape = 'u32[]', space=smem, size = 0x4, offset = 0x4, fixed_abs, tag = 'smem constant byte address 0x4 - core index']
  #allocation1 [shape = 'u32[144,128]{1,0:T(1,128)}', space=vmem, size = 0x12000, scoped, tag = 'internal scratch']
  %s0 = inlined_call_operand.vmem [shape: f32[1000,32], index: 0, kind: input, shape index: {}]
  %s1 = inlined_call_operand.vmem [shape: bf16[32,128], index: 1, kind: input, shape index: {}]
  %s2 = inlined_call_operand.vmem [shape: f32[1,128], index: 2, kind: input, shape index: {}]
  %s3 = inlined_call_operand.vmem [shape: bf16[128,32], index: 3, kind: input, shape index: {}]
  %s4 = inlined_call_operand.vmem [shape: f32[1,32], index: 4, kind: input, shape index: {}]
  %s5 = inlined_call_operand.vmem [shape: f32[1000,32], index: 5, kind: output, shape index: {0}]
  %s6 = inlined_call_operand.vmem [shape: f32[1000,1], index: 6, kind: output, shape index: {1}]
  %7 = xla_tuple %s5, %s6
  %s8 = sld [smem:[#allocation0]]
  $region38: #{tpu_custom_call.1} parent=0
    _
  %s10 = ssub.s32 1, %s8
  %s11 = scalar_select 0, %s10, %s8
  // Predicated region
  $region2: #{tpu_custom_call.1} parent=0 // pred_check
    _
  $region3: #{tpu_custom_call.1} parent=0 // pred_check_branch
    %13 = sbr.rel (0) target = $region5
  $region4: #{tpu_custom_call.1} parent=0 // pred_region
    _
  $region5: #{tpu_custom_call.1} parent=0 // pred_fallthru
    _
  // Predicated region
  $region6: #{tpu_custom_call.1} parent=0 // pred_check
    _
  $region7: #{tpu_custom_call.1} parent=0 // pred_check_branch
    %15 = sbr.rel (0) target = $region9
  $region8: #{tpu_custom_call.1} parent=0 // pred_region
    _
  $region9: #{tpu_custom_call.1} parent=0 // pred_fallthru
    _
  // Predicated region
  $region10: #{tpu_custom_call.1} parent=0 // pred_check
    _
  $region11: #{tpu_custom_call.1} parent=0 // pred_check_branch
    %17 = sbr.rel (0) target = $region13
  $region12: #{tpu_custom_call.1} parent=0 // pred_region
    _
  $region13: #{tpu_custom_call.1} parent=0 // pred_fallthru
    _
  // Predicated region
  $region14: #{tpu_custom_call.1} parent=0 // pred_check
    _
  $region15: #{tpu_custom_call.1} parent=0 // pred_check_branch
    %19 = sbr.rel (0) target = $region17
  $region16: #{tpu_custom_call.1} parent=0 // pred_region
    _
  $region17: #{tpu_custom_call.1} parent=0 // pred_fallthru
    _
  // Predicated region
  $region18: #{tpu_custom_call.1} parent=0 // pred_check
    _
  $region19: #{tpu_custom_call.1} parent=0 // pred_check_branch
    %21 = sbr.rel (0) target = $region21
  $region20: #{tpu_custom_call.1} parent=0 // pred_region
    _
  $region21: #{tpu_custom_call.1} parent=0 // pred_fallthru
    _
  %v23 = vld [vmem:[%s0] sm:$0xff]
  %v24 = vld [vmem:[%s0 + $0x8] sm:$0xff]
  %v25 = vld [vmem:[%s0 + $0x10] sm:$0xff]
  %v26 = vld [vmem:[%s0 + $0x18] sm:$0xff]
  %v27 = vld [vmem:[%s0 + $0x20] sm:$0xff]
  %v28 = vld [vmem:[%s0 + $0x28] sm:$0xff]
  %v29 = vld [vmem:[%s0 + $0x30] sm:$0xff]
  %v30 = vld [vmem:[%s0 + $0x38] sm:$0xff]
  %v31 = vld [vmem:[%s0 + $0x40] sm:$0xff]
  %v32 = vld [vmem:[%s0 + $0x48] sm:$0xff]
  %v33 = vld [vmem:[%s0 + $0x50] sm:$0xff]
  %v34 = vld [vmem:[%s0 + $0x58] sm:$0xff]
  %v35 = vld [vmem:[%s0 + $0x60] sm:$0xff]
  %v36 = vld [vmem:[%s0 + $0x68] sm:$0xff]
  %v37 = vld [vmem:[%s0 + $0x70] sm:$0xff]
  %v38 = vld [vmem:[%s0 + $0x78] sm:$0xff]
  %v39 = vld [vmem:[%s0 + $0x80] sm:$0xff]
  %v40 = vld [vmem:[%s0 + $0x88] sm:$0xff]
  %v41 = vld [vmem:[%s0 + $0x90] sm:$0xff]
  %v42 = vld [vmem:[%s0 + $0x98] sm:$0xff]
  %v43 = vld [vmem:[%s0 + $0xa0] sm:$0xff]
  %v44 = vld [vmem:[%s0 + $0xa8] sm:$0xff]
  %v45 = vld [vmem:[%s0 + $0xb0] sm:$0xff]
  %v46 = vld [vmem:[%s0 + $0xb8] sm:$0xff]
  %v47 = vld [vmem:[%s0 + $0xc0] sm:$0xff]
  %v48 = vld [vmem:[%s0 + $0xc8] sm:$0xff]
  %v49 = vld [vmem:[%s0 + $0xd0] sm:$0xff]
  %v50 = vld [vmem:[%s0 + $0xd8] sm:$0xff]
  %v51 = vld [vmem:[%s0 + $0xe0] sm:$0xff]
  %v52 = vld [vmem:[%s0 + $0xe8] sm:$0xff]
  %v53 = vld [vmem:[%s0 + $0xf0] sm:$0xff]
  %v54 = vld [vmem:[%s0 + $0xf8] sm:$0xff]
  %v55 = vld [vmem:[%s0 + $0x100] sm:$0xff]
  %v56 = vld [vmem:[%s0 + $0x108] sm:$0xff]
  %v57 = vld [vmem:[%s0 + $0x110] sm:$0xff]
  %v58 = vld [vmem:[%s0 + $0x118] sm:$0xff]
  %v59 = vld [vmem:[%s0 + $0x120] sm:$0xff]
  %v60 = vld [vmem:[%s0 + $0x128] sm:$0xff]
  %v61 = vld [vmem:[%s0 + $0x130] sm:$0xff]
  %v62 = vld [vmem:[%s0 + $0x138] sm:$0xff]
  %v63 = vld [vmem:[%s0 + $0x140] sm:$0xff]
  %v64 = vld [vmem:[%s0 + $0x148] sm:$0xff]
  %v65 = vld [vmem:[%s0 + $0x150] sm:$0xff]
  %v66 = vld [vmem:[%s0 + $0x158] sm:$0xff]
  %v67 = vld [vmem:[%s0 + $0x160] sm:$0xff]
  %v68 = vld [vmem:[%s0 + $0x168] sm:$0xff]
  %v69 = vld [vmem:[%s0 + $0x170] sm:$0xff]
  %v70 = vld [vmem:[%s0 + $0x178] sm:$0xff]
  %v71 = vld [vmem:[%s0 + $0x180] sm:$0xff]
  %v72 = vld [vmem:[%s0 + $0x188] sm:$0xff]
  %v73 = vld [vmem:[%s0 + $0x190] sm:$0xff]
  %v74 = vld [vmem:[%s0 + $0x198] sm:$0xff]
  %v75 = vld [vmem:[%s0 + $0x1a0] sm:$0xff]
  %v76 = vld [vmem:[%s0 + $0x1a8] sm:$0xff]
  %v77 = vld [vmem:[%s0 + $0x1b0] sm:$0xff]
  %v78 = vld [vmem:[%s0 + $0x1b8] sm:$0xff]
  %v79 = vld [vmem:[%s0 + $0x1c0] sm:$0xff]
  %v80 = vld [vmem:[%s0 + $0x1c8] sm:$0xff]
  %v81 = vld [vmem:[%s0 + $0x1d0] sm:$0xff]
  %v82 = vld [vmem:[%s0 + $0x1d8] sm:$0xff]
  %v83 = vld [vmem:[%s0 + $0x1e0] sm:$0xff]
  %v84 = vld [vmem:[%s0 + $0x1e8] sm:$0xff]
  %v85 = vld [vmem:[%s0 + $0x1f0] sm:$0xff]
  %v86 = vld [vmem:[%s0 + $0x1f8] sm:$0xff]
  %v87 = vld [vmem:[%s0 + $0x200] sm:$0xff]
  %v88 = vld [vmem:[%s0 + $0x208] sm:$0xff]
  %v89 = vld [vmem:[%s0 + $0x210] sm:$0xff]
  %v90 = vld [vmem:[%s0 + $0x218] sm:$0xff]
  %v91 = vld [vmem:[%s0 + $0x220] sm:$0xff]
  %v92 = vld [vmem:[%s0 + $0x228] sm:$0xff]
  %v93 = vld [vmem:[%s0 + $0x230] sm:$0xff]
  %v94 = vld [vmem:[%s0 + $0x238] sm:$0xff]
  %v95 = vld [vmem:[%s0 + $0x240] sm:$0xff]
  %v96 = vld [vmem:[%s0 + $0x248] sm:$0xff]
  %v97 = vld [vmem:[%s0 + $0x250] sm:$0xff]
  %v98 = vld [vmem:[%s0 + $0x258] sm:$0xff]
  %v99 = vld [vmem:[%s0 + $0x260] sm:$0xff]
  %v100 = vld [vmem:[%s0 + $0x268] sm:$0xff]
  %v101 = vld [vmem:[%s0 + $0x270] sm:$0xff]
  %v102 = vld [vmem:[%s0 + $0x278] sm:$0xff]
  %v103 = vld [vmem:[%s0 + $0x280] sm:$0xff]
  %v104 = vld [vmem:[%s0 + $0x288] sm:$0xff]
  %v105 = vld [vmem:[%s0 + $0x290] sm:$0xff]
  %v106 = vld [vmem:[%s0 + $0x298] sm:$0xff]
  %v107 = vld [vmem:[%s0 + $0x2a0] sm:$0xff]
  %v108 = vld [vmem:[%s0 + $0x2a8] sm:$0xff]
  %v109 = vld [vmem:[%s0 + $0x2b0] sm:$0xff]
  %v110 = vld [vmem:[%s0 + $0x2b8] sm:$0xff]
  %v111 = vld [vmem:[%s0 + $0x2c0] sm:$0xff]
  %v112 = vld [vmem:[%s0 + $0x2c8] sm:$0xff]
  %v113 = vld [vmem:[%s0 + $0x2d0] sm:$0xff]
  %v114 = vld [vmem:[%s0 + $0x2d8] sm:$0xff]
  %v115 = vld [vmem:[%s0 + $0x2e0] sm:$0xff]
  %v116 = vld [vmem:[%s0 + $0x2e8] sm:$0xff]
  %v117 = vld [vmem:[%s0 + $0x2f0] sm:$0xff]
  %v118 = vld [vmem:[%s0 + $0x2f8] sm:$0xff]
  %v119 = vld [vmem:[%s0 + $0x300] sm:$0xff]
  %v120 = vld [vmem:[%s0 + $0x308] sm:$0xff]
  %v121 = vld [vmem:[%s0 + $0x310] sm:$0xff]
  %v122 = vld [vmem:[%s0 + $0x318] sm:$0xff]
  %v123 = vld [vmem:[%s0 + $0x320] sm:$0xff]
  %v124 = vld [vmem:[%s0 + $0x328] sm:$0xff]
  %v125 = vld [vmem:[%s0 + $0x330] sm:$0xff]
  %v126 = vld [vmem:[%s0 + $0x338] sm:$0xff]
  %v127 = vld [vmem:[%s0 + $0x340] sm:$0xff]
  %v128 = vld [vmem:[%s0 + $0x348] sm:$0xff]
  %v129 = vld [vmem:[%s0 + $0x350] sm:$0xff]
  %v130 = vld [vmem:[%s0 + $0x358] sm:$0xff]
  %v131 = vld [vmem:[%s0 + $0x360] sm:$0xff]
  %v132 = vld [vmem:[%s0 + $0x368] sm:$0xff]
  %v133 = vld [vmem:[%s0 + $0x370] sm:$0xff]
  %v134 = vld [vmem:[%s0 + $0x378] sm:$0xff]
  %v135 = vld [vmem:[%s0 + $0x380] sm:$0xff]
  %v136 = vld [vmem:[%s0 + $0x388] sm:$0xff]
  %v137 = vld [vmem:[%s0 + $0x390] sm:$0xff]
  %v138 = vld [vmem:[%s0 + $0x398] sm:$0xff]
  %v139 = vld [vmem:[%s0 + $0x3a0] sm:$0xff]
  %v140 = vld [vmem:[%s0 + $0x3a8] sm:$0xff]
  %v141 = vld [vmem:[%s0 + $0x3b0] sm:$0xff]
  %v142 = vld [vmem:[%s0 + $0x3b8] sm:$0xff]
  %v143 = vld [vmem:[%s0 + $0x3c0] sm:$0xff]
  %v144 = vld [vmem:[%s0 + $0x3c8] sm:$0xff]
  %v145 = vld [vmem:[%s0 + $0x3d0] sm:$0xff]
  %v146 = vld [vmem:[%s0 + $0x3d8] sm:$0xff]
  %v147 = vld [vmem:[%s0 + $0x3e0] sm:$0xff]
  %v148 = vpack.c.bf16 %v24, %v23
  %v149 = vpack.c.bf16 %v26, %v25
  %v150 = vpack.c.bf16 %v28, %v27
  %v151 = vpack.c.bf16 %v30, %v29
  %v152 = vpack.c.bf16 %v32, %v31
  %v153 = vpack.c.bf16 %v34, %v33
  %v154 = vpack.c.bf16 %v36, %v35
  %v155 = vpack.c.bf16 %v38, %v37
  %v156 = vpack.c.bf16 %v40, %v39
  %v157 = vpack.c.bf16 %v42, %v41
  %v158 = vpack.c.bf16 %v44, %v43
  %v159 = vpack.c.bf16 %v46, %v45
  %v160 = vpack.c.bf16 %v48, %v47
  %v161 = vpack.c.bf16 %v50, %v49
  %v162 = vpack.c.bf16 %v52, %v51
  %v163 = vpack.c.bf16 %v54, %v53
  %v164 = vpack.c.bf16 %v56, %v55
  %v165 = vpack.c.bf16 %v58, %v57
  %v166 = vpack.c.bf16 %v60, %v59
  %v167 = vpack.c.bf16 %v62, %v61
  %v168 = vpack.c.bf16 %v64, %v63
  %v169 = vpack.c.bf16 %v66, %v65
  %v170 = vpack.c.bf16 %v68, %v67
  %v171 = vpack.c.bf16 %v70, %v69
  %v172 = vpack.c.bf16 %v72, %v71
  %v173 = vpack.c.bf16 %v74, %v73
  %v174 = vpack.c.bf16 %v76, %v75
  %v175 = vpack.c.bf16 %v78, %v77
  %v176 = vpack.c.bf16 %v80, %v79
  %v177 = vpack.c.bf16 %v82, %v81
  %v178 = vpack.c.bf16 %v84, %v83
  %v179 = vpack.c.bf16 %v86, %v85
  %v180 = vpack.c.bf16 %v88, %v87
  %v181 = vpack.c.bf16 %v90, %v89
  %v182 = vpack.c.bf16 %v92, %v91
  %v183 = vpack.c.bf16 %v94, %v93
  %v184 = vpack.c.bf16 %v96, %v95
  %v185 = vpack.c.bf16 %v98, %v97
  %v186 = vpack.c.bf16 %v100, %v99
  %v187 = vpack.c.bf16 %v102, %v101
  %v188 = vpack.c.bf16 %v104, %v103
  %v189 = vpack.c.bf16 %v106, %v105
  %v190 = vpack.c.bf16 %v108, %v107
  %v191 = vpack.c.bf16 %v110, %v109
  %v192 = vpack.c.bf16 %v112, %v111
  %v193 = vpack.c.bf16 %v114, %v113
  %v194 = vpack.c.bf16 %v116, %v115
  %v195 = vpack.c.bf16 %v118, %v117
  %v196 = vpack.c.bf16 %v120, %v119
  %v197 = vpack.c.bf16 %v122, %v121
  %v198 = vpack.c.bf16 %v124, %v123
  %v199 = vpack.c.bf16 %v126, %v125
  %v200 = vpack.c.bf16 %v128, %v127
  %v201 = vpack.c.bf16 %v130, %v129
  %v202 = vpack.c.bf16 %v132, %v131
  %v203 = vpack.c.bf16 %v134, %v133
  %v204 = vpack.c.bf16 %v136, %v135
  %v205 = vpack.c.bf16 %v138, %v137
  %v206 = vpack.c.bf16 %v140, %v139
  %v207 = vpack.c.bf16 %v142, %v141
  %v208 = vpack.c.bf16 %v144, %v143
  %v209 = vpack.c.bf16 %v146, %v145
  %v210 = vpack.c.bf16 %v147, %v147
  %v211 = vld [vmem:[%s1] sm:$0xf]
  %v212 = vld [vmem:[%s1 + $0x4] sm:$0xf]
  %v213 = vld [vmem:[%s1 + $0x8] sm:$0xf]
  %v214 = vld [vmem:[%s1 + $0xc] sm:$0xf]
  %v215 = vld [vmem:[%s2] sm:$0x1]
  %v217 = vlaneseq
  %v218 = vshrl.u32 %v217, 7
  %v219 = vsub.s32 0, %v218
  %v220 = vrot.slane %v215, %v219
  %v226 = vunpack.c.l.b16 %v211
  %v227 = vunpack.c.l.b16 %v212
  %v228 = vunpack.c.l.b16 %v213
  %v229 = vunpack.c.l.b16 %v214
  %v230 = vpack.c.b16 %v227, %v226
  %v231 = vpack.c.b16 %v229, %v228
  %vm234 = vcmask 261120
  %v236 = vsel %vm234, %v148, 0
  %v239 = vsel %vm234, %v149, 0
  %v242 = vsel %vm234, %v150, 0
  %v245 = vsel %vm234, %v151, 0
  %v248 = vsel %vm234, %v152, 0
  %v251 = vsel %vm234, %v153, 0
  %v254 = vsel %vm234, %v154, 0
  %v257 = vsel %vm234, %v155, 0
  %v260 = vsel %vm234, %v156, 0
  %v263 = vsel %vm234, %v157, 0
  %v266 = vsel %vm234, %v158, 0
  %v269 = vsel %vm234, %v159, 0
  %v272 = vsel %vm234, %v160, 0
  %v275 = vsel %vm234, %v161, 0
  %v278 = vsel %vm234, %v162, 0
  %v281 = vsel %vm234, %v163, 0
  %v284 = vsel %vm234, %v164, 0
  %v287 = vsel %vm234, %v165, 0
  %v290 = vsel %vm234, %v166, 0
  %v293 = vsel %vm234, %v167, 0
  %v296 = vsel %vm234, %v168, 0
  %v299 = vsel %vm234, %v169, 0
  %v302 = vsel %vm234, %v170, 0
  %v305 = vsel %vm234, %v171, 0
  %v308 = vsel %vm234, %v172, 0
  %v311 = vsel %vm234, %v173, 0
  %v314 = vsel %vm234, %v174, 0
  %v317 = vsel %vm234, %v175, 0
  %v320 = vsel %vm234, %v176, 0
  %v323 = vsel %vm234, %v177, 0
  %v326 = vsel %vm234, %v178, 0
  %v329 = vsel %vm234, %v179, 0
  %v332 = vsel %vm234, %v180, 0
  %v335 = vsel %vm234, %v181, 0
  %v338 = vsel %vm234, %v182, 0
  %v341 = vsel %vm234, %v183, 0
  %v344 = vsel %vm234, %v184, 0
  %v347 = vsel %vm234, %v185, 0
  %v350 = vsel %vm234, %v186, 0
  %v353 = vsel %vm234, %v187, 0
  %v356 = vsel %vm234, %v188, 0
  %v359 = vsel %vm234, %v189, 0
  %v362 = vsel %vm234, %v190, 0
  %v365 = vsel %vm234, %v191, 0
  %v368 = vsel %vm234, %v192, 0
  %v371 = vsel %vm234, %v193, 0
  %v374 = vsel %vm234, %v194, 0
  %v377 = vsel %vm234, %v195, 0
  %v380 = vsel %vm234, %v196, 0
  %v383 = vsel %vm234, %v197, 0
  %v386 = vsel %vm234, %v198, 0
  %v389 = vsel %vm234, %v199, 0
  %v392 = vsel %vm234, %v200, 0
  %v395 = vsel %vm234, %v201, 0
  %v398 = vsel %vm234, %v202, 0
  %v401 = vsel %vm234, %v203, 0
  %v404 = vsel %vm234, %v204, 0
  %v407 = vsel %vm234, %v205, 0
  %v410 = vsel %vm234, %v206, 0
  %v413 = vsel %vm234, %v207, 0
  %v416 = vsel %vm234, %v208, 0
  %v419 = vsel %vm234, %v209, 0
  %v422 = vsel %vm234, %v210, 0
  %424 = vmatprep.subr.bf16.mxu0 0
  %425 = vmatpush1.bf16.msra.mxu0 0
  %426 = vmatprep.subr.bf16.mxu0 0
  %427 = vmatpush1.bf16.msra.mxu0 0
  %428 = vmatprep.subr.bf16.mxu0 0
  %429 = vmatpush1.bf16.msra.mxu0 0
  %430 = vmatprep.subr.bf16.mxu0 0
  %431 = vmatpush1.bf16.msra.mxu0 0
  %432 = vmatprep.subr.bf16.mxu0 0
  %433 = vmatpush1.bf16.msra.mxu0 0
  %434 = vmatprep.subr.bf16.mxu0 0
  %435 = vmatpush1.bf16.msra.mxu0 0
  %436 = vmatprep.subr.bf16.mxu0 0
  %437 = vmatpush1.bf16.msra.mxu0 %v231
  %438 = vmatprep.subr.bf16.mxu0 0
  %439 = vmatpush1.bf16.msra.mxu0 %v230
  %440 = vmatprep.subr.bf16.mxu0 0
  %441 = vmatpush2.bf16.msra.mxu0 0
  %442 = vmatprep.subr.bf16.mxu0 0
  %443 = vmatpush2.bf16.msra.mxu0 0
  %444 = vmatprep.subr.bf16.mxu0 0
  %445 = vmatpush2.bf16.msra.mxu0 0
  %446 = vmatprep.subr.bf16.mxu0 0
  %447 = vmatpush2.bf16.msra.mxu0 0
  %448 = vmatprep.subr.bf16.mxu0 0
  %449 = vmatpush2.bf16.msra.mxu0 0
  %450 = vmatprep.subr.bf16.mxu0 0
  %451 = vmatpush2.bf16.msra.mxu0 0
  %452 = vmatprep.subr.bf16.mxu0 0
  %453 = vmatpush2.bf16.msra.mxu0 0
  %454 = vmatprep.subr.bf16.mxu0 0
  %455 = vmatpush2.bf16.msra.mxu0 0
  %456 = vmatprep.mubr.bf16.mxu0 0
  %457 = vmatmul.mubr.bf16.gmra.mxu0 %v236
  %v458 = vpop.f32.mrf.mxu0
  %v459 = vadd.f32 %v220, %v458
  %v460 = vpop.f32.mrf.mxu0
  %v461 = vpop.f32.mrf.mxu0
  %v462 = vadd.f32 %v220, %v461
  %v463 = vpop.f32.mrf.mxu0
  %464 = vmatprep.mubr.bf16.mxu0 0
  %465 = vmatmul.mubr.bf16.gmra.mxu0 %v239
  %v466 = vpop.f32.mrf.mxu0
  %v467 = vadd.f32 %v220, %v466
  %v468 = vpop.f32.mrf.mxu0
  %v469 = vpop.f32.mrf.mxu0
  %v470 = vadd.f32 %v220, %v469
  %v471 = vpop.f32.mrf.mxu0
  %472 = vmatprep.mubr.bf16.mxu0 0
  %473 = vmatmul.mubr.bf16.gmra.mxu0 %v242
  %v474 = vpop.f32.mrf.mxu0
  %v475 = vadd.f32 %v220, %v474
  %v476 = vpop.f32.mrf.mxu0
  %v477 = vpop.f32.mrf.mxu0
  %v478 = vadd.f32 %v220, %v477
  %v479 = vpop.f32.mrf.mxu0
  %480 = vmatprep.mubr.bf16.mxu0 0
  %481 = vmatmul.mubr.bf16.gmra.mxu0 %v245
  %v482 = vpop.f32.mrf.mxu0
  %v483 = vadd.f32 %v220, %v482
  %v484 = vpop.f32.mrf.mxu0
  %v485 = vpop.f32.mrf.mxu0
  %v486 = vadd.f32 %v220, %v485
  %v487 = vpop.f32.mrf.mxu0
  %488 = vmatprep.mubr.bf16.mxu0 0
  %489 = vmatmul.mubr.bf16.gmra.mxu0 %v248
  %v490 = vpop.f32.mrf.mxu0
  %v491 = vadd.f32 %v220, %v490
  %v492 = vpop.f32.mrf.mxu0
  %v493 = vpop.f32.mrf.mxu0
  %v494 = vadd.f32 %v220, %v493
  %v495 = vpop.f32.mrf.mxu0
  %496 = vmatprep.mubr.bf16.mxu0 0
  %497 = vmatmul.mubr.bf16.gmra.mxu0 %v251
  %v498 = vpop.f32.mrf.mxu0
  %v499 = vadd.f32 %v220, %v498
  %v500 = vpop.f32.mrf.mxu0
  %v501 = vpop.f32.mrf.mxu0
  %v502 = vadd.f32 %v220, %v501
  %v503 = vpop.f32.mrf.mxu0
  %504 = vmatprep.mubr.bf16.mxu0 0
  %505 = vmatmul.mubr.bf16.gmra.mxu0 %v254
  %v506 = vpop.f32.mrf.mxu0
  %v507 = vadd.f32 %v220, %v506
  %v508 = vpop.f32.mrf.mxu0
  %v509 = vpop.f32.mrf.mxu0
  %v510 = vadd.f32 %v220, %v509
  %v511 = vpop.f32.mrf.mxu0
  %512 = vmatprep.mubr.bf16.mxu0 0
  %513 = vmatmul.mubr.bf16.gmra.mxu0 %v257
  %v514 = vpop.f32.mrf.mxu0
  %v515 = vadd.f32 %v220, %v514
  %v516 = vpop.f32.mrf.mxu0
  %v517 = vpop.f32.mrf.mxu0
  %v518 = vadd.f32 %v220, %v517
  %v519 = vpop.f32.mrf.mxu0
  %520 = vmatprep.mubr.bf16.mxu0 0
  %521 = vmatmul.mubr.bf16.gmra.mxu0 %v260
  %v522 = vpop.f32.mrf.mxu0
  %v523 = vadd.f32 %v220, %v522
  %v524 = vpop.f32.mrf.mxu0
  %v525 = vpop.f32.mrf.mxu0
  %v526 = vadd.f32 %v220, %v525
  %v527 = vpop.f32.mrf.mxu0
  %528 = vmatprep.mubr.bf16.mxu0 0
  %529 = vmatmul.mubr.bf16.gmra.mxu0 %v263
  %v530 = vpop.f32.mrf.mxu0
  %v531 = vadd.f32 %v220, %v530
  %v532 = vpop.f32.mrf.mxu0
  %v533 = vpop.f32.mrf.mxu0
  %v534 = vadd.f32 %v220, %v533
  %v535 = vpop.f32.mrf.mxu0
  %536 = vmatprep.mubr.bf16.mxu0 0
  %537 = vmatmul.mubr.bf16.gmra.mxu0 %v266
  %v538 = vpop.f32.mrf.mxu0
  %v539 = vadd.f32 %v220, %v538
  %v540 = vpop.f32.mrf.mxu0
  %v541 = vpop.f32.mrf.mxu0
  %v542 = vadd.f32 %v220, %v541
  %v543 = vpop.f32.mrf.mxu0
  %544 = vmatprep.mubr.bf16.mxu0 0
  %545 = vmatmul.mubr.bf16.gmra.mxu0 %v269
  %v546 = vpop.f32.mrf.mxu0
  %v547 = vadd.f32 %v220, %v546
  %v548 = vpop.f32.mrf.mxu0
  %v549 = vpop.f32.mrf.mxu0
  %v550 = vadd.f32 %v220, %v549
  %v551 = vpop.f32.mrf.mxu0
  %552 = vmatprep.mubr.bf16.mxu0 0
  %553 = vmatmul.mubr.bf16.gmra.mxu0 %v272
  %v554 = vpop.f32.mrf.mxu0
  %v555 = vadd.f32 %v220, %v554
  %v556 = vpop.f32.mrf.mxu0
  %v557 = vpop.f32.mrf.mxu0
  %v558 = vadd.f32 %v220, %v557
  %v559 = vpop.f32.mrf.mxu0
  %560 = vmatprep.mubr.bf16.mxu0 0
  %561 = vmatmul.mubr.bf16.gmra.mxu0 %v275
  %v562 = vpop.f32.mrf.mxu0
  %v563 = vadd.f32 %v220, %v562
  %v564 = vpop.f32.mrf.mxu0
  %v565 = vpop.f32.mrf.mxu0
  %v566 = vadd.f32 %v220, %v565
  %v567 = vpop.f32.mrf.mxu0
  %568 = vmatprep.mubr.bf16.mxu0 0
  %569 = vmatmul.mubr.bf16.gmra.mxu0 %v278
  %v570 = vpop.f32.mrf.mxu0
  %v571 = vadd.f32 %v220, %v570
  %v572 = vpop.f32.mrf.mxu0
  %v573 = vpop.f32.mrf.mxu0
  %v574 = vadd.f32 %v220, %v573
  %v575 = vpop.f32.mrf.mxu0
  %576 = vmatprep.mubr.bf16.mxu0 0
  %577 = vmatmul.mubr.bf16.gmra.mxu0 %v281
  %v578 = vpop.f32.mrf.mxu0
  %v579 = vadd.f32 %v220, %v578
  %v580 = vpop.f32.mrf.mxu0
  %v581 = vpop.f32.mrf.mxu0
  %v582 = vadd.f32 %v220, %v581
  %v583 = vpop.f32.mrf.mxu0
  %584 = vmatprep.mubr.bf16.mxu0 0
  %585 = vmatmul.mubr.bf16.gmra.mxu0 %v284
  %v586 = vpop.f32.mrf.mxu0
  %v587 = vadd.f32 %v220, %v586
  %v588 = vpop.f32.mrf.mxu0
  %v589 = vpop.f32.mrf.mxu0
  %v590 = vadd.f32 %v220, %v589
  %v591 = vpop.f32.mrf.mxu0
  %592 = vmatprep.mubr.bf16.mxu0 0
  %593 = vmatmul.mubr.bf16.gmra.mxu0 %v287
  %v594 = vpop.f32.mrf.mxu0
  %v595 = vadd.f32 %v220, %v594
  %v596 = vpop.f32.mrf.mxu0
  %v597 = vpop.f32.mrf.mxu0
  %v598 = vadd.f32 %v220, %v597
  %v599 = vpop.f32.mrf.mxu0
  %600 = vmatprep.mubr.bf16.mxu0 0
  %601 = vmatmul.mubr.bf16.gmra.mxu0 %v290
  %v602 = vpop.f32.mrf.mxu0
  %v603 = vadd.f32 %v220, %v602
  %v604 = vpop.f32.mrf.mxu0
  %v605 = vpop.f32.mrf.mxu0
  %v606 = vadd.f32 %v220, %v605
  %v607 = vpop.f32.mrf.mxu0
  %608 = vmatprep.mubr.bf16.mxu0 0
  %609 = vmatmul.mubr.bf16.gmra.mxu0 %v293
  %v610 = vpop.f32.mrf.mxu0
  %v611 = vadd.f32 %v220, %v610
  %v612 = vpop.f32.mrf.mxu0
  %v613 = vpop.f32.mrf.mxu0
  %v614 = vadd.f32 %v220, %v613
  %v615 = vpop.f32.mrf.mxu0
  %616 = vmatprep.mubr.bf16.mxu0 0
  %617 = vmatmul.mubr.bf16.gmra.mxu0 %v296
  %v618 = vpop.f32.mrf.mxu0
  %v619 = vadd.f32 %v220, %v618
  %v620 = vpop.f32.mrf.mxu0
  %v621 = vpop.f32.mrf.mxu0
  %v622 = vadd.f32 %v220, %v621
  %v623 = vpop.f32.mrf.mxu0
  %624 = vmatprep.mubr.bf16.mxu0 0
  %625 = vmatmul.mubr.bf16.gmra.mxu0 %v299
  %v626 = vpop.f32.mrf.mxu0
  %v627 = vadd.f32 %v220, %v626
  %v628 = vpop.f32.mrf.mxu0
  %v629 = vpop.f32.mrf.mxu0
  %v630 = vadd.f32 %v220, %v629
  %v631 = vpop.f32.mrf.mxu0
  %632 = vmatprep.mubr.bf16.mxu0 0
  %633 = vmatmul.mubr.bf16.gmra.mxu0 %v302
  %v634 = vpop.f32.mrf.mxu0
  %v635 = vadd.f32 %v220, %v634
  %v636 = vpop.f32.mrf.mxu0
  %v637 = vpop.f32.mrf.mxu0
  %v638 = vadd.f32 %v220, %v637
  %v639 = vpop.f32.mrf.mxu0
  %640 = vmatprep.mubr.bf16.mxu0 0
  %641 = vmatmul.mubr.bf16.gmra.mxu0 %v305
  %v642 = vpop.f32.mrf.mxu0
  %v643 = vadd.f32 %v220, %v642
  %v644 = vpop.f32.mrf.mxu0
  %v645 = vpop.f32.mrf.mxu0
  %v646 = vadd.f32 %v220, %v645
  %v647 = vpop.f32.mrf.mxu0
  %648 = vmatprep.mubr.bf16.mxu0 0
  %649 = vmatmul.mubr.bf16.gmra.mxu0 %v308
  %v650 = vpop.f32.mrf.mxu0
  %v651 = vadd.f32 %v220, %v650
  %v652 = vpop.f32.mrf.mxu0
  %v653 = vpop.f32.mrf.mxu0
  %v654 = vadd.f32 %v220, %v653
  %v655 = vpop.f32.mrf.mxu0
  %656 = vmatprep.mubr.bf16.mxu0 0
  %657 = vmatmul.mubr.bf16.gmra.mxu0 %v311
  %v658 = vpop.f32.mrf.mxu0
  %v659 = vadd.f32 %v220, %v658
  %v660 = vpop.f32.mrf.mxu0
  %v661 = vpop.f32.mrf.mxu0
  %v662 = vadd.f32 %v220, %v661
  %v663 = vpop.f32.mrf.mxu0
  %664 = vmatprep.mubr.bf16.mxu0 0
  %665 = vmatmul.mubr.bf16.gmra.mxu0 %v314
  %v666 = vpop.f32.mrf.mxu0
  %v667 = vadd.f32 %v220, %v666
  %v668 = vpop.f32.mrf.mxu0
  %v669 = vpop.f32.mrf.mxu0
  %v670 = vadd.f32 %v220, %v669
  %v671 = vpop.f32.mrf.mxu0
  %672 = vmatprep.mubr.bf16.mxu0 0
  %673 = vmatmul.mubr.bf16.gmra.mxu0 %v317
  %v674 = vpop.f32.mrf.mxu0
  %v675 = vadd.f32 %v220, %v674
  %v676 = vpop.f32.mrf.mxu0
  %v677 = vpop.f32.mrf.mxu0
  %v678 = vadd.f32 %v220, %v677
  %v679 = vpop.f32.mrf.mxu0
  %680 = vmatprep.mubr.bf16.mxu0 0
  %681 = vmatmul.mubr.bf16.gmra.mxu0 %v320
  %v682 = vpop.f32.mrf.mxu0
  %v683 = vadd.f32 %v220, %v682
  %v684 = vpop.f32.mrf.mxu0
  %v685 = vpop.f32.mrf.mxu0
  %v686 = vadd.f32 %v220, %v685
  %v687 = vpop.f32.mrf.mxu0
  %688 = vmatprep.mubr.bf16.mxu0 0
  %689 = vmatmul.mubr.bf16.gmra.mxu0 %v323
  %v690 = vpop.f32.mrf.mxu0
  %v691 = vadd.f32 %v220, %v690
  %v692 = vpop.f32.mrf.mxu0
  %v693 = vpop.f32.mrf.mxu0
  %v694 = vadd.f32 %v220, %v693
  %v695 = vpop.f32.mrf.mxu0
  %696 = vmatprep.mubr.bf16.mxu0 0
  %697 = vmatmul.mubr.bf16.gmra.mxu0 %v326
  %v698 = vpop.f32.mrf.mxu0
  %v699 = vadd.f32 %v220, %v698
  %v700 = vpop.f32.mrf.mxu0
  %v701 = vpop.f32.mrf.mxu0
  %v702 = vadd.f32 %v220, %v701
  %v703 = vpop.f32.mrf.mxu0
  %704 = vmatprep.mubr.bf16.mxu0 0
  %705 = vmatmul.mubr.bf16.gmra.mxu0 %v329
  %v706 = vpop.f32.mrf.mxu0
  %v707 = vadd.f32 %v220, %v706
  %v708 = vpop.f32.mrf.mxu0
  %v709 = vpop.f32.mrf.mxu0
  %v710 = vadd.f32 %v220, %v709
  %v711 = vpop.f32.mrf.mxu0
  %712 = vmatprep.mubr.bf16.mxu0 0
  %713 = vmatmul.mubr.bf16.gmra.mxu0 %v332
  %v714 = vpop.f32.mrf.mxu0
  %v715 = vadd.f32 %v220, %v714
  %v716 = vpop.f32.mrf.mxu0
  %v717 = vpop.f32.mrf.mxu0
  %v718 = vadd.f32 %v220, %v717
  %v719 = vpop.f32.mrf.mxu0
  %720 = vmatprep.mubr.bf16.mxu0 0
  %721 = vmatmul.mubr.bf16.gmra.mxu0 %v335
  %v722 = vpop.f32.mrf.mxu0
  %v723 = vadd.f32 %v220, %v722
  %v724 = vpop.f32.mrf.mxu0
  %v725 = vpop.f32.mrf.mxu0
  %v726 = vadd.f32 %v220, %v725
  %v727 = vpop.f32.mrf.mxu0
  %728 = vmatprep.mubr.bf16.mxu0 0
  %729 = vmatmul.mubr.bf16.gmra.mxu0 %v338
  %v730 = vpop.f32.mrf.mxu0
  %v731 = vadd.f32 %v220, %v730
  %v732 = vpop.f32.mrf.mxu0
  %v733 = vpop.f32.mrf.mxu0
  %v734 = vadd.f32 %v220, %v733
  %v735 = vpop.f32.mrf.mxu0
  %736 = vmatprep.mubr.bf16.mxu0 0
  %737 = vmatmul.mubr.bf16.gmra.mxu0 %v341
  %v738 = vpop.f32.mrf.mxu0
  %v739 = vadd.f32 %v220, %v738
  %v740 = vpop.f32.mrf.mxu0
  %v741 = vpop.f32.mrf.mxu0
  %v742 = vadd.f32 %v220, %v741
  %v743 = vpop.f32.mrf.mxu0
  %744 = vmatprep.mubr.bf16.mxu0 0
  %745 = vmatmul.mubr.bf16.gmra.mxu0 %v344
  %v746 = vpop.f32.mrf.mxu0
  %v747 = vadd.f32 %v220, %v746
  %v748 = vpop.f32.mrf.mxu0
  %v749 = vpop.f32.mrf.mxu0
  %v750 = vadd.f32 %v220, %v749
  %v751 = vpop.f32.mrf.mxu0
  %752 = vmatprep.mubr.bf16.mxu0 0
  %753 = vmatmul.mubr.bf16.gmra.mxu0 %v347
  %v754 = vpop.f32.mrf.mxu0
  %v755 = vadd.f32 %v220, %v754
  %v756 = vpop.f32.mrf.mxu0
  %v757 = vpop.f32.mrf.mxu0
  %v758 = vadd.f32 %v220, %v757
  %v759 = vpop.f32.mrf.mxu0
  %760 = vmatprep.mubr.bf16.mxu0 0
  %761 = vmatmul.mubr.bf16.gmra.mxu0 %v350
  %v762 = vpop.f32.mrf.mxu0
  %v763 = vadd.f32 %v220, %v762
  %v764 = vpop.f32.mrf.mxu0
  %v765 = vpop.f32.mrf.mxu0
  %v766 = vadd.f32 %v220, %v765
  %v767 = vpop.f32.mrf.mxu0
  %768 = vmatprep.mubr.bf16.mxu0 0
  %769 = vmatmul.mubr.bf16.gmra.mxu0 %v353
  %v770 = vpop.f32.mrf.mxu0
  %v771 = vadd.f32 %v220, %v770
  %v772 = vpop.f32.mrf.mxu0
  %v773 = vpop.f32.mrf.mxu0
  %v774 = vadd.f32 %v220, %v773
  %v775 = vpop.f32.mrf.mxu0
  %776 = vmatprep.mubr.bf16.mxu0 0
  %777 = vmatmul.mubr.bf16.gmra.mxu0 %v356
  %v778 = vpop.f32.mrf.mxu0
  %v779 = vadd.f32 %v220, %v778
  %v780 = vpop.f32.mrf.mxu0
  %v781 = vpop.f32.mrf.mxu0
  %v782 = vadd.f32 %v220, %v781
  %v783 = vpop.f32.mrf.mxu0
  %784 = vmatprep.mubr.bf16.mxu0 0
  %785 = vmatmul.mubr.bf16.gmra.mxu0 %v359
  %v786 = vpop.f32.mrf.mxu0
  %v787 = vadd.f32 %v220, %v786
  %v788 = vpop.f32.mrf.mxu0
  %v789 = vpop.f32.mrf.mxu0
  %v790 = vadd.f32 %v220, %v789
  %v791 = vpop.f32.mrf.mxu0
  %792 = vmatprep.mubr.bf16.mxu0 0
  %793 = vmatmul.mubr.bf16.gmra.mxu0 %v362
  %v794 = vpop.f32.mrf.mxu0
  %v795 = vadd.f32 %v220, %v794
  %v796 = vpop.f32.mrf.mxu0
  %v797 = vpop.f32.mrf.mxu0
  %v798 = vadd.f32 %v220, %v797
  %v799 = vpop.f32.mrf.mxu0
  %800 = vmatprep.mubr.bf16.mxu0 0
  %801 = vmatmul.mubr.bf16.gmra.mxu0 %v365
  %v802 = vpop.f32.mrf.mxu0
  %v803 = vadd.f32 %v220, %v802
  %v804 = vpop.f32.mrf.mxu0
  %v805 = vpop.f32.mrf.mxu0
  %v806 = vadd.f32 %v220, %v805
  %v807 = vpop.f32.mrf.mxu0
  %808 = vmatprep.mubr.bf16.mxu0 0
  %809 = vmatmul.mubr.bf16.gmra.mxu0 %v368
  %v810 = vpop.f32.mrf.mxu0
  %v811 = vadd.f32 %v220, %v810
  %v812 = vpop.f32.mrf.mxu0
  %v813 = vpop.f32.mrf.mxu0
  %v814 = vadd.f32 %v220, %v813
  %v815 = vpop.f32.mrf.mxu0
  %816 = vmatprep.mubr.bf16.mxu0 0
  %817 = vmatmul.mubr.bf16.gmra.mxu0 %v371
  %v818 = vpop.f32.mrf.mxu0
  %v819 = vadd.f32 %v220, %v818
  %v820 = vpop.f32.mrf.mxu0
  %v821 = vpop.f32.mrf.mxu0
  %v822 = vadd.f32 %v220, %v821
  %v823 = vpop.f32.mrf.mxu0
  %824 = vmatprep.mubr.bf16.mxu0 0
  %825 = vmatmul.mubr.bf16.gmra.mxu0 %v374
  %v826 = vpop.f32.mrf.mxu0
  %v827 = vadd.f32 %v220, %v826
  %v828 = vpop.f32.mrf.mxu0
  %v829 = vpop.f32.mrf.mxu0
  %v830 = vadd.f32 %v220, %v829
  %v831 = vpop.f32.mrf.mxu0
  %832 = vmatprep.mubr.bf16.mxu0 0
  %833 = vmatmul.mubr.bf16.gmra.mxu0 %v377
  %v834 = vpop.f32.mrf.mxu0
  %v835 = vadd.f32 %v220, %v834
  %v836 = vpop.f32.mrf.mxu0
  %v837 = vpop.f32.mrf.mxu0
  %v838 = vadd.f32 %v220, %v837
  %v839 = vpop.f32.mrf.mxu0
  %840 = vmatprep.mubr.bf16.mxu0 0
  %841 = vmatmul.mubr.bf16.gmra.mxu0 %v380
  %v842 = vpop.f32.mrf.mxu0
  %v843 = vadd.f32 %v220, %v842
  %v844 = vpop.f32.mrf.mxu0
  %v845 = vpop.f32.mrf.mxu0
  %v846 = vadd.f32 %v220, %v845
  %v847 = vpop.f32.mrf.mxu0
  %848 = vmatprep.mubr.bf16.mxu0 0
  %849 = vmatmul.mubr.bf16.gmra.mxu0 %v383
  %v850 = vpop.f32.mrf.mxu0
  %v851 = vadd.f32 %v220, %v850
  %v852 = vpop.f32.mrf.mxu0
  %v853 = vpop.f32.mrf.mxu0
  %v854 = vadd.f32 %v220, %v853
  %v855 = vpop.f32.mrf.mxu0
  %856 = vmatprep.mubr.bf16.mxu0 0
  %857 = vmatmul.mubr.bf16.gmra.mxu0 %v386
  %v858 = vpop.f32.mrf.mxu0
  %v859 = vadd.f32 %v220, %v858
  %v860 = vpop.f32.mrf.mxu0
  %v861 = vpop.f32.mrf.mxu0
  %v862 = vadd.f32 %v220, %v861
  %v863 = vpop.f32.mrf.mxu0
  %864 = vmatprep.mubr.bf16.mxu0 0
  %865 = vmatmul.mubr.bf16.gmra.mxu0 %v389
  %v866 = vpop.f32.mrf.mxu0
  %v867 = vadd.f32 %v220, %v866
  %v868 = vpop.f32.mrf.mxu0
  %v869 = vpop.f32.mrf.mxu0
  %v870 = vadd.f32 %v220, %v869
  %v871 = vpop.f32.mrf.mxu0
  %872 = vmatprep.mubr.bf16.mxu0 0
  %873 = vmatmul.mubr.bf16.gmra.mxu0 %v392
  %v874 = vpop.f32.mrf.mxu0
  %v875 = vadd.f32 %v220, %v874
  %v876 = vpop.f32.mrf.mxu0
  %v877 = vpop.f32.mrf.mxu0
  %v878 = vadd.f32 %v220, %v877
  %v879 = vpop.f32.mrf.mxu0
  %880 = vmatprep.mubr.bf16.mxu0 0
  %881 = vmatmul.mubr.bf16.gmra.mxu0 %v395
  %v882 = vpop.f32.mrf.mxu0
  %v883 = vadd.f32 %v220, %v882
  %v884 = vpop.f32.mrf.mxu0
  %v885 = vpop.f32.mrf.mxu0
  %v886 = vadd.f32 %v220, %v885
  %v887 = vpop.f32.mrf.mxu0
  %888 = vmatprep.mubr.bf16.mxu0 0
  %889 = vmatmul.mubr.bf16.gmra.mxu0 %v398
  %v890 = vpop.f32.mrf.mxu0
  %v891 = vadd.f32 %v220, %v890
  %v892 = vpop.f32.mrf.mxu0
  %v893 = vpop.f32.mrf.mxu0
  %v894 = vadd.f32 %v220, %v893
  %v895 = vpop.f32.mrf.mxu0
  %896 = vmatprep.mubr.bf16.mxu0 0
  %897 = vmatmul.mubr.bf16.gmra.mxu0 %v401
  %v898 = vpop.f32.mrf.mxu0
  %v899 = vadd.f32 %v220, %v898
  %v900 = vpop.f32.mrf.mxu0
  %v901 = vpop.f32.mrf.mxu0
  %v902 = vadd.f32 %v220, %v901
  %v903 = vpop.f32.mrf.mxu0
  %904 = vmatprep.mubr.bf16.mxu0 0
  %905 = vmatmul.mubr.bf16.gmra.mxu0 %v404
  %v906 = vpop.f32.mrf.mxu0
  %v907 = vadd.f32 %v220, %v906
  %v908 = vpop.f32.mrf.mxu0
  %v909 = vpop.f32.mrf.mxu0
  %v910 = vadd.f32 %v220, %v909
  %v911 = vpop.f32.mrf.mxu0
  %912 = vmatprep.mubr.bf16.mxu0 0
  %913 = vmatmul.mubr.bf16.gmra.mxu0 %v407
  %v914 = vpop.f32.mrf.mxu0
  %v915 = vadd.f32 %v220, %v914
  %v916 = vpop.f32.mrf.mxu0
  %v917 = vpop.f32.mrf.mxu0
  %v918 = vadd.f32 %v220, %v917
  %v919 = vpop.f32.mrf.mxu0
  %920 = vmatprep.mubr.bf16.mxu0 0
  %921 = vmatmul.mubr.bf16.gmra.mxu0 %v410
  %v922 = vpop.f32.mrf.mxu0
  %v923 = vadd.f32 %v220, %v922
  %v924 = vpop.f32.mrf.mxu0
  %v925 = vpop.f32.mrf.mxu0
  %v926 = vadd.f32 %v220, %v925
  %v927 = vpop.f32.mrf.mxu0
  %928 = vmatprep.mubr.bf16.mxu0 0
  %929 = vmatmul.mubr.bf16.gmra.mxu0 %v413
  %v930 = vpop.f32.mrf.mxu0
  %v931 = vadd.f32 %v220, %v930
  %v932 = vpop.f32.mrf.mxu0
  %v933 = vpop.f32.mrf.mxu0
  %v934 = vadd.f32 %v220, %v933
  %v935 = vpop.f32.mrf.mxu0
  %936 = vmatprep.mubr.bf16.mxu0 0
  %937 = vmatmul.mubr.bf16.gmra.mxu0 %v416
  %v938 = vpop.f32.mrf.mxu0
  %v939 = vadd.f32 %v220, %v938
  %v940 = vpop.f32.mrf.mxu0
  %v941 = vpop.f32.mrf.mxu0
  %v942 = vadd.f32 %v220, %v941
  %v943 = vpop.f32.mrf.mxu0
  %944 = vmatprep.mubr.bf16.mxu0 0
  %945 = vmatmul.mubr.bf16.gmra.mxu0 %v419
  %v946 = vpop.f32.mrf.mxu0
  %v947 = vadd.f32 %v220, %v946
  %v948 = vpop.f32.mrf.mxu0
  %v949 = vpop.f32.mrf.mxu0
  %v950 = vadd.f32 %v220, %v949
  %v951 = vpop.f32.mrf.mxu0
  %952 = vmatprep.mubr.bf16.mxu0 0
  %953 = vmatmul.mubr.bf16.gmra.mxu0 %v422
  %v954 = vpop.f32.mrf.mxu0
  %v955 = vadd.f32 %v220, %v954
  %v956 = vpop.f32.mrf.mxu0
  %v957 = vpop.f32.mrf.mxu0
  %v958 = vpop.f32.mrf.mxu0
  %959 = vdwg.mxu0
  %v960 = vlaneseq
  %v961 = vand.u32 %v960, 127
  %vm962 = vcmp.eq.s32.totalorder %v961, 32
  %v963 = vsel %vm962, %v459, 0.0
  %v964 = vsel %vm962, %v462, 0.0
  %v965 = vsel %vm962, %v467, 0.0
  %v966 = vsel %vm962, %v470, 0.0
  %v967 = vsel %vm962, %v475, 0.0
  %v968 = vsel %vm962, %v478, 0.0
  %v969 = vsel %vm962, %v483, 0.0
  %v970 = vsel %vm962, %v486, 0.0
  %v971 = vsel %vm962, %v491, 0.0
  %v972 = vsel %vm962, %v494, 0.0
  %v973 = vsel %vm962, %v499, 0.0
  %v974 = vsel %vm962, %v502, 0.0
  %v975 = vsel %vm962, %v507, 0.0
  %v976 = vsel %vm962, %v510, 0.0
  %v977 = vsel %vm962, %v515, 0.0
  %v978 = vsel %vm962, %v518, 0.0
  %v979 = vsel %vm962, %v523, 0.0
  %v980 = vsel %vm962, %v526, 0.0
  %v981 = vsel %vm962, %v531, 0.0
  %v982 = vsel %vm962, %v534, 0.0
  %v983 = vsel %vm962, %v539, 0.0
  %v984 = vsel %vm962, %v542, 0.0
  %v985 = vsel %vm962, %v547, 0.0
  %v986 = vsel %vm962, %v550, 0.0
  %v987 = vsel %vm962, %v555, 0.0
  %v988 = vsel %vm962, %v558, 0.0
  %v989 = vsel %vm962, %v563, 0.0
  %v990 = vsel %vm962, %v566, 0.0
  %v991 = vsel %vm962, %v571, 0.0
  %v992 = vsel %vm962, %v574, 0.0
  %v993 = vsel %vm962, %v579, 0.0
  %v994 = vsel %vm962, %v582, 0.0
  %v995 = vsel %vm962, %v587, 0.0
  %v996 = vsel %vm962, %v590, 0.0
  %v997 = vsel %vm962, %v595, 0.0
  %v998 = vsel %vm962, %v598, 0.0
  %v999 = vsel %vm962, %v603, 0.0
  %v1000 = vsel %vm962, %v606, 0.0
  %v1001 = vsel %vm962, %v611, 0.0
  %v1002 = vsel %vm962, %v614, 0.0
  %v1003 = vsel %vm962, %v619, 0.0
  %v1004 = vsel %vm962, %v622, 0.0
  %v1005 = vsel %vm962, %v627, 0.0
  %v1006 = vsel %vm962, %v630, 0.0
  %v1007 = vsel %vm962, %v635, 0.0
  %v1008 = vsel %vm962, %v638, 0.0
  %v1009 = vsel %vm962, %v643, 0.0
  %v1010 = vsel %vm962, %v646, 0.0
  %v1011 = vsel %vm962, %v651, 0.0
  %v1012 = vsel %vm962, %v654, 0.0
  %v1013 = vsel %vm962, %v659, 0.0
  %v1014 = vsel %vm962, %v662, 0.0
  %v1015 = vsel %vm962, %v667, 0.0
  %v1016 = vsel %vm962, %v670, 0.0
  %v1017 = vsel %vm962, %v675, 0.0
  %v1018 = vsel %vm962, %v678, 0.0
  %v1019 = vsel %vm962, %v683, 0.0
  %v1020 = vsel %vm962, %v686, 0.0
  %v1021 = vsel %vm962, %v691, 0.0
  %v1022 = vsel %vm962, %v694, 0.0
  %v1023 = vsel %vm962, %v699, 0.0
  %v1024 = vsel %vm962, %v702, 0.0
  %v1025 = vsel %vm962, %v707, 0.0
  %v1026 = vsel %vm962, %v710, 0.0
  %v1027 = vsel %vm962, %v715, 0.0
  %v1028 = vsel %vm962, %v718, 0.0
  %v1029 = vsel %vm962, %v723, 0.0
  %v1030 = vsel %vm962, %v726, 0.0
  %v1031 = vsel %vm962, %v731, 0.0
  %v1032 = vsel %vm962, %v734, 0.0
  %v1033 = vsel %vm962, %v739, 0.0
  %v1034 = vsel %vm962, %v742, 0.0
  %v1035 = vsel %vm962, %v747, 0.0
  %v1036 = vsel %vm962, %v750, 0.0
  %v1037 = vsel %vm962, %v755, 0.0
  %v1038 = vsel %vm962, %v758, 0.0
  %v1039 = vsel %vm962, %v763, 0.0
  %v1040 = vsel %vm962, %v766, 0.0
  %v1041 = vsel %vm962, %v771, 0.0
  %v1042 = vsel %vm962, %v774, 0.0
  %v1043 = vsel %vm962, %v779, 0.0
  %v1044 = vsel %vm962, %v782, 0.0
  %v1045 = vsel %vm962, %v787, 0.0
  %v1046 = vsel %vm962, %v790, 0.0
  %v1047 = vsel %vm962, %v795, 0.0
  %v1048 = vsel %vm962, %v798, 0.0
  %v1049 = vsel %vm962, %v803, 0.0
  %v1050 = vsel %vm962, %v806, 0.0
  %v1051 = vsel %vm962, %v811, 0.0
  %v1052 = vsel %vm962, %v814, 0.0
  %v1053 = vsel %vm962, %v819, 0.0
  %v1054 = vsel %vm962, %v822, 0.0
  %v1055 = vsel %vm962, %v827, 0.0
  %v1056 = vsel %vm962, %v830, 0.0
  %v1057 = vsel %vm962, %v835, 0.0
  %v1058 = vsel %vm962, %v838, 0.0
  %v1059 = vsel %vm962, %v843, 0.0
  %v1060 = vsel %vm962, %v846, 0.0
  %v1061 = vsel %vm962, %v851, 0.0
  %v1062 = vsel %vm962, %v854, 0.0
  %v1063 = vsel %vm962, %v859, 0.0
  %v1064 = vsel %vm962, %v862, 0.0
  %v1065 = vsel %vm962, %v867, 0.0
  %v1066 = vsel %vm962, %v870, 0.0
  %v1067 = vsel %vm962, %v875, 0.0
  %v1068 = vsel %vm962, %v878, 0.0
  %v1069 = vsel %vm962, %v883, 0.0
  %v1070 = vsel %vm962, %v886, 0.0
  %v1071 = vsel %vm962, %v891, 0.0
  %v1072 = vsel %vm962, %v894, 0.0
  %v1073 = vsel %vm962, %v899, 0.0
  %v1074 = vsel %vm962, %v902, 0.0
  %v1075 = vsel %vm962, %v907, 0.0
  %v1076 = vsel %vm962, %v910, 0.0
  %v1077 = vsel %vm962, %v915, 0.0
  %v1078 = vsel %vm962, %v918, 0.0
  %v1079 = vsel %vm962, %v923, 0.0
  %v1080 = vsel %vm962, %v926, 0.0
  %v1081 = vsel %vm962, %v931, 0.0
  %v1082 = vsel %vm962, %v934, 0.0
  %v1083 = vsel %vm962, %v939, 0.0
  %v1084 = vsel %vm962, %v942, 0.0
  %v1085 = vsel %vm962, %v947, 0.0
  %v1086 = vsel %vm962, %v950, 0.0
  %v1087 = vsel %vm962, %v955, 0.0
  %1088 = vadd.xlane.f32.xlu0 %v963
  %v1089 = vpop.xlane.xlu0 %1088
  %1090 = vadd.xlane.f32.xlu0 %v964
  %v1091 = vpop.xlane.xlu0 %1090
  %1092 = vadd.xlane.f32.xlu0 %v965
  %v1093 = vpop.xlane.xlu0 %1092
  %1094 = vadd.xlane.f32.xlu0 %v966
  %v1095 = vpop.xlane.xlu0 %1094
  %1096 = vadd.xlane.f32.xlu0 %v967
  %v1097 = vpop.xlane.xlu0 %1096
  %1098 = vadd.xlane.f32.xlu0 %v968
  %v1099 = vpop.xlane.xlu0 %1098
  %1100 = vadd.xlane.f32.xlu0 %v969
  %v1101 = vpop.xlane.xlu0 %1100
  %1102 = vadd.xlane.f32.xlu0 %v970
  %v1103 = vpop.xlane.xlu0 %1102
  %1104 = vadd.xlane.f32.xlu0 %v971
  %v1105 = vpop.xlane.xlu0 %1104
  %1106 = vadd.xlane.f32.xlu0 %v972
  %v1107 = vpop.xlane.xlu0 %1106
  %1108 = vadd.xlane.f32.xlu0 %v973
  %v1109 = vpop.xlane.xlu0 %1108
  %1110 = vadd.xlane.f32.xlu0 %v974
  %v1111 = vpop.xlane.xlu0 %1110
  %1112 = vadd.xlane.f32.xlu0 %v975
  %v1113 = vpop.xlane.xlu0 %1112
  %1114 = vadd.xlane.f32.xlu0 %v976
  %v1115 = vpop.xlane.xlu0 %1114
  %1116 = vadd.xlane.f32.xlu0 %v977
  %v1117 = vpop.xlane.xlu0 %1116
  %1118 = vadd.xlane.f32.xlu0 %v978
  %v1119 = vpop.xlane.xlu0 %1118
  %1120 = vadd.xlane.f32.xlu0 %v979
  %v1121 = vpop.xlane.xlu0 %1120
  %1122 = vadd.xlane.f32.xlu0 %v980
  %v1123 = vpop.xlane.xlu0 %1122
  %1124 = vadd.xlane.f32.xlu0 %v981
  %v1125 = vpop.xlane.xlu0 %1124
  %1126 = vadd.xlane.f32.xlu0 %v982
  %v1127 = vpop.xlane.xlu0 %1126
  %1128 = vadd.xlane.f32.xlu0 %v983
  %v1129 = vpop.xlane.xlu0 %1128
  %1130 = vadd.xlane.f32.xlu0 %v984
  %v1131 = vpop.xlane.xlu0 %1130
  %1132 = vadd.xlane.f32.xlu0 %v985
  %v1133 = vpop.xlane.xlu0 %1132
  %1134 = vadd.xlane.f32.xlu0 %v986
  %v1135 = vpop.xlane.xlu0 %1134
  %1136 = vadd.xlane.f32.xlu0 %v987
  %v1137 = vpop.xlane.xlu0 %1136
  %1138 = vadd.xlane.f32.xlu0 %v988
  %v1139 = vpop.xlane.xlu0 %1138
  %1140 = vadd.xlane.f32.xlu0 %v989
  %v1141 = vpop.xlane.xlu0 %1140
  %1142 = vadd.xlane.f32.xlu0 %v990
  %v1143 = vpop.xlane.xlu0 %1142
  %1144 = vadd.xlane.f32.xlu0 %v991
  %v1145 = vpop.xlane.xlu0 %1144
  %1146 = vadd.xlane.f32.xlu0 %v992
  %v1147 = vpop.xlane.xlu0 %1146
  %1148 = vadd.xlane.f32.xlu0 %v993
  %v1149 = vpop.xlane.xlu0 %1148
  %1150 = vadd.xlane.f32.xlu0 %v994
  %v1151 = vpop.xlane.xlu0 %1150
  %1152 = vadd.xlane.f32.xlu0 %v995
  %v1153 = vpop.xlane.xlu0 %1152
  %1154 = vadd.xlane.f32.xlu0 %v996
  %v1155 = vpop.xlane.xlu0 %1154
  %1156 = vadd.xlane.f32.xlu0 %v997
  %v1157 = vpop.xlane.xlu0 %1156
  %1158 = vadd.xlane.f32.xlu0 %v998
  %v1159 = vpop.xlane.xlu0 %1158
  %1160 = vadd.xlane.f32.xlu0 %v999
  %v1161 = vpop.xlane.xlu0 %1160
  %1162 = vadd.xlane.f32.xlu0 %v1000
  %v1163 = vpop.xlane.xlu0 %1162
  %1164 = vadd.xlane.f32.xlu0 %v1001
  %v1165 = vpop.xlane.xlu0 %1164
  %1166 = vadd.xlane.f32.xlu0 %v1002
  %v1167 = vpop.xlane.xlu0 %1166
  %1168 = vadd.xlane.f32.xlu0 %v1003
  %v1169 = vpop.xlane.xlu0 %1168
  %1170 = vadd.xlane.f32.xlu0 %v1004
  %v1171 = vpop.xlane.xlu0 %1170
  %1172 = vadd.xlane.f32.xlu0 %v1005
  %v1173 = vpop.xlane.xlu0 %1172
  %1174 = vadd.xlane.f32.xlu0 %v1006
  %v1175 = vpop.xlane.xlu0 %1174
  %1176 = vadd.xlane.f32.xlu0 %v1007
  %v1177 = vpop.xlane.xlu0 %1176
  %1178 = vadd.xlane.f32.xlu0 %v1008
  %v1179 = vpop.xlane.xlu0 %1178
  %1180 = vadd.xlane.f32.xlu0 %v1009
  %v1181 = vpop.xlane.xlu0 %1180
  %1182 = vadd.xlane.f32.xlu0 %v1010
  %v1183 = vpop.xlane.xlu0 %1182
  %1184 = vadd.xlane.f32.xlu0 %v1011
  %v1185 = vpop.xlane.xlu0 %1184
  %1186 = vadd.xlane.f32.xlu0 %v1012
  %v1187 = vpop.xlane.xlu0 %1186
  %1188 = vadd.xlane.f32.xlu0 %v1013
  %v1189 = vpop.xlane.xlu0 %1188
  %1190 = vadd.xlane.f32.xlu0 %v1014
  %v1191 = vpop.xlane.xlu0 %1190
  %1192 = vadd.xlane.f32.xlu0 %v1015
  %v1193 = vpop.xlane.xlu0 %1192
  %1194 = vadd.xlane.f32.xlu0 %v1016
  %v1195 = vpop.xlane.xlu0 %1194
  %1196 = vadd.xlane.f32.xlu0 %v1017
  %v1197 = vpop.xlane.xlu0 %1196
  %1198 = vadd.xlane.f32.xlu0 %v1018
  %v1199 = vpop.xlane.xlu0 %1198
  %1200 = vadd.xlane.f32.xlu0 %v1019
  %v1201 = vpop.xlane.xlu0 %1200
  %1202 = vadd.xlane.f32.xlu0 %v1020
  %v1203 = vpop.xlane.xlu0 %1202
  %1204 = vadd.xlane.f32.xlu0 %v1021
  %v1205 = vpop.xlane.xlu0 %1204
  %1206 = vadd.xlane.f32.xlu0 %v1022
  %v1207 = vpop.xlane.xlu0 %1206
  %1208 = vadd.xlane.f32.xlu0 %v1023
  %v1209 = vpop.xlane.xlu0 %1208
  %1210 = vadd.xlane.f32.xlu0 %v1024
  %v1211 = vpop.xlane.xlu0 %1210
  %1212 = vadd.xlane.f32.xlu0 %v1025
  %v1213 = vpop.xlane.xlu0 %1212
  %1214 = vadd.xlane.f32.xlu0 %v1026
  %v1215 = vpop.xlane.xlu0 %1214
  %1216 = vadd.xlane.f32.xlu0 %v1027
  %v1217 = vpop.xlane.xlu0 %1216
  %1218 = vadd.xlane.f32.xlu0 %v1028
  %v1219 = vpop.xlane.xlu0 %1218
  %1220 = vadd.xlane.f32.xlu0 %v1029
  %v1221 = vpop.xlane.xlu0 %1220
  %1222 = vadd.xlane.f32.xlu0 %v1030
  %v1223 = vpop.xlane.xlu0 %1222
  %1224 = vadd.xlane.f32.xlu0 %v1031
  %v1225 = vpop.xlane.xlu0 %1224
  %1226 = vadd.xlane.f32.xlu0 %v1032
  %v1227 = vpop.xlane.xlu0 %1226
  %1228 = vadd.xlane.f32.xlu0 %v1033
  %v1229 = vpop.xlane.xlu0 %1228
  %1230 = vadd.xlane.f32.xlu0 %v1034
  %v1231 = vpop.xlane.xlu0 %1230
  %1232 = vadd.xlane.f32.xlu0 %v1035
  %v1233 = vpop.xlane.xlu0 %1232
  %1234 = vadd.xlane.f32.xlu0 %v1036
  %v1235 = vpop.xlane.xlu0 %1234
  %1236 = vadd.xlane.f32.xlu0 %v1037
  %v1237 = vpop.xlane.xlu0 %1236
  %1238 = vadd.xlane.f32.xlu0 %v1038
  %v1239 = vpop.xlane.xlu0 %1238
  %1240 = vadd.xlane.f32.xlu0 %v1039
  %v1241 = vpop.xlane.xlu0 %1240
  %1242 = vadd.xlane.f32.xlu0 %v1040
  %v1243 = vpop.xlane.xlu0 %1242
  %1244 = vadd.xlane.f32.xlu0 %v1041
  %v1245 = vpop.xlane.xlu0 %1244
  %1246 = vadd.xlane.f32.xlu0 %v1042
  %v1247 = vpop.xlane.xlu0 %1246
  %1248 = vadd.xlane.f32.xlu0 %v1043
  %v1249 = vpop.xlane.xlu0 %1248
  %1250 = vadd.xlane.f32.xlu0 %v1044
  %v1251 = vpop.xlane.xlu0 %1250
  %1252 = vadd.xlane.f32.xlu0 %v1045
  %v1253 = vpop.xlane.xlu0 %1252
  %1254 = vadd.xlane.f32.xlu0 %v1046
  %v1255 = vpop.xlane.xlu0 %1254
  %1256 = vadd.xlane.f32.xlu0 %v1047
  %v1257 = vpop.xlane.xlu0 %1256
  %1258 = vadd.xlane.f32.xlu0 %v1048
  %v1259 = vpop.xlane.xlu0 %1258
  %1260 = vadd.xlane.f32.xlu0 %v1049
  %v1261 = vpop.xlane.xlu0 %1260
  %1262 = vadd.xlane.f32.xlu0 %v1050
  %v1263 = vpop.xlane.xlu0 %1262
  %1264 = vadd.xlane.f32.xlu0 %v1051
  %v1265 = vpop.xlane.xlu0 %1264
  %1266 = vadd.xlane.f32.xlu0 %v1052
  %v1267 = vpop.xlane.xlu0 %1266
  %1268 = vadd.xlane.f32.xlu0 %v1053
  %v1269 = vpop.xlane.xlu0 %1268
  %1270 = vadd.xlane.f32.xlu0 %v1054
  %v1271 = vpop.xlane.xlu0 %1270
  %1272 = vadd.xlane.f32.xlu0 %v1055
  %v1273 = vpop.xlane.xlu0 %1272
  %1274 = vadd.xlane.f32.xlu0 %v1056
  %v1275 = vpop.xlane.xlu0 %1274
  %1276 = vadd.xlane.f32.xlu0 %v1057
  %v1277 = vpop.xlane.xlu0 %1276
  %1278 = vadd.xlane.f32.xlu0 %v1058
  %v1279 = vpop.xlane.xlu0 %1278
  %1280 = vadd.xlane.f32.xlu0 %v1059
  %v1281 = vpop.xlane.xlu0 %1280
  %1282 = vadd.xlane.f32.xlu0 %v1060
  %v1283 = vpop.xlane.xlu0 %1282
  %1284 = vadd.xlane.f32.xlu0 %v1061
  %v1285 = vpop.xlane.xlu0 %1284
  %1286 = vadd.xlane.f32.xlu0 %v1062
  %v1287 = vpop.xlane.xlu0 %1286
  %1288 = vadd.xlane.f32.xlu0 %v1063
  %v1289 = vpop.xlane.xlu0 %1288
  %1290 = vadd.xlane.f32.xlu0 %v1064
  %v1291 = vpop.xlane.xlu0 %1290
  %1292 = vadd.xlane.f32.xlu0 %v1065
  %v1293 = vpop.xlane.xlu0 %1292
  %1294 = vadd.xlane.f32.xlu0 %v1066
  %v1295 = vpop.xlane.xlu0 %1294
  %1296 = vadd.xlane.f32.xlu0 %v1067
  %v1297 = vpop.xlane.xlu0 %1296
  %1298 = vadd.xlane.f32.xlu0 %v1068
  %v1299 = vpop.xlane.xlu0 %1298
  %1300 = vadd.xlane.f32.xlu0 %v1069
  %v1301 = vpop.xlane.xlu0 %1300
  %1302 = vadd.xlane.f32.xlu0 %v1070
  %v1303 = vpop.xlane.xlu0 %1302
  %1304 = vadd.xlane.f32.xlu0 %v1071
  %v1305 = vpop.xlane.xlu0 %1304
  %1306 = vadd.xlane.f32.xlu0 %v1072
  %v1307 = vpop.xlane.xlu0 %1306
  %1308 = vadd.xlane.f32.xlu0 %v1073
  %v1309 = vpop.xlane.xlu0 %1308
  %1310 = vadd.xlane.f32.xlu0 %v1074
  %v1311 = vpop.xlane.xlu0 %1310
  %1312 = vadd.xlane.f32.xlu0 %v1075
  %v1313 = vpop.xlane.xlu0 %1312
  %1314 = vadd.xlane.f32.xlu0 %v1076
  %v1315 = vpop.xlane.xlu0 %1314
  %1316 = vadd.xlane.f32.xlu0 %v1077
  %v1317 = vpop.xlane.xlu0 %1316
  %1318 = vadd.xlane.f32.xlu0 %v1078
  %v1319 = vpop.xlane.xlu0 %1318
  %1320 = vadd.xlane.f32.xlu0 %v1079
  %v1321 = vpop.xlane.xlu0 %1320
  %1322 = vadd.xlane.f32.xlu0 %v1080
  %v1323 = vpop.xlane.xlu0 %1322
  %1324 = vadd.xlane.f32.xlu0 %v1081
  %v1325 = vpop.xlane.xlu0 %1324
  %1326 = vadd.xlane.f32.xlu0 %v1082
  %v1327 = vpop.xlane.xlu0 %1326
  %1328 = vadd.xlane.f32.xlu0 %v1083
  %v1329 = vpop.xlane.xlu0 %1328
  %1330 = vadd.xlane.f32.xlu0 %v1084
  %v1331 = vpop.xlane.xlu0 %1330
  %1332 = vadd.xlane.f32.xlu0 %v1085
  %v1333 = vpop.xlane.xlu0 %1332
  %1334 = vadd.xlane.f32.xlu0 %v1086
  %v1335 = vpop.xlane.xlu0 %1334
  %1336 = vadd.xlane.f32.xlu0 %v1087
  %v1337 = vpop.xlane.xlu0 %1336
  %v1338 = vxor.u32 %v1089, 2147483648
  %v1339 = vxor.u32 %v1091, 2147483648
  %v1340 = vxor.u32 %v1093, 2147483648
  %v1341 = vxor.u32 %v1095, 2147483648
  %v1342 = vxor.u32 %v1097, 2147483648
  %v1343 = vxor.u32 %v1099, 2147483648
  %v1344 = vxor.u32 %v1101, 2147483648
  %v1345 = vxor.u32 %v1103, 2147483648
  %v1346 = vxor.u32 %v1105, 2147483648
  %v1347 = vxor.u32 %v1107, 2147483648
  %v1348 = vxor.u32 %v1109, 2147483648
  %v1349 = vxor.u32 %v1111, 2147483648
  %v1350 = vxor.u32 %v1113, 2147483648
  %v1351 = vxor.u32 %v1115, 2147483648
  %v1352 = vxor.u32 %v1117, 2147483648
  %v1353 = vxor.u32 %v1119, 2147483648
  %v1354 = vxor.u32 %v1121, 2147483648
  %v1355 = vxor.u32 %v1123, 2147483648
  %v1356 = vxor.u32 %v1125, 2147483648
  %v1357 = vxor.u32 %v1127, 2147483648
  %v1358 = vxor.u32 %v1129, 2147483648
  %v1359 = vxor.u32 %v1131, 2147483648
  %v1360 = vxor.u32 %v1133, 2147483648
  %v1361 = vxor.u32 %v1135, 2147483648
  %v1362 = vxor.u32 %v1137, 2147483648
  %v1363 = vxor.u32 %v1139, 2147483648
  %v1364 = vxor.u32 %v1141, 2147483648
  %v1365 = vxor.u32 %v1143, 2147483648
  %v1366 = vxor.u32 %v1145, 2147483648
  %v1367 = vxor.u32 %v1147, 2147483648
  %v1368 = vxor.u32 %v1149, 2147483648
  %v1369 = vxor.u32 %v1151, 2147483648
  %v1370 = vxor.u32 %v1153, 2147483648
  %v1371 = vxor.u32 %v1155, 2147483648
  %v1372 = vxor.u32 %v1157, 2147483648
  %v1373 = vxor.u32 %v1159, 2147483648
  %v1374 = vxor.u32 %v1161, 2147483648
  %v1375 = vxor.u32 %v1163, 2147483648
  %v1376 = vxor.u32 %v1165, 2147483648
  %v1377 = vxor.u32 %v1167, 2147483648
  %v1378 = vxor.u32 %v1169, 2147483648
  %v1379 = vxor.u32 %v1171, 2147483648
  %v1380 = vxor.u32 %v1173, 2147483648
  %v1381 = vxor.u32 %v1175, 2147483648
  %v1382 = vxor.u32 %v1177, 2147483648
  %v1383 = vxor.u32 %v1179, 2147483648
  %v1384 = vxor.u32 %v1181, 2147483648
  %v1385 = vxor.u32 %v1183, 2147483648
  %v1386 = vxor.u32 %v1185, 2147483648
  %v1387 = vxor.u32 %v1187, 2147483648
  %v1388 = vxor.u32 %v1189, 2147483648
  %v1389 = vxor.u32 %v1191, 2147483648
  %v1390 = vxor.u32 %v1193, 2147483648
  %v1391 = vxor.u32 %v1195, 2147483648
  %v1392 = vxor.u32 %v1197, 2147483648
  %v1393 = vxor.u32 %v1199, 2147483648
  %v1394 = vxor.u32 %v1201, 2147483648
  %v1395 = vxor.u32 %v1203, 2147483648
  %v1396 = vxor.u32 %v1205, 2147483648
  %v1397 = vxor.u32 %v1207, 2147483648
  %v1398 = vxor.u32 %v1209, 2147483648
  %v1399 = vxor.u32 %v1211, 2147483648
  %v1400 = vxor.u32 %v1213, 2147483648
  %v1401 = vxor.u32 %v1215, 2147483648
  %v1402 = vxor.u32 %v1217, 2147483648
  %v1403 = vxor.u32 %v1219, 2147483648
  %v1404 = vxor.u32 %v1221, 2147483648
  %v1405 = vxor.u32 %v1223, 2147483648
  %v1406 = vxor.u32 %v1225, 2147483648
  %v1407 = vxor.u32 %v1227, 2147483648
  %v1408 = vxor.u32 %v1229, 2147483648
  %v1409 = vxor.u32 %v1231, 2147483648
  %v1410 = vxor.u32 %v1233, 2147483648
  %v1411 = vxor.u32 %v1235, 2147483648
  %v1412 = vxor.u32 %v1237, 2147483648
  %v1413 = vxor.u32 %v1239, 2147483648
  %v1414 = vxor.u32 %v1241, 2147483648
  %v1415 = vxor.u32 %v1243, 2147483648
  %v1416 = vxor.u32 %v1245, 2147483648
  %v1417 = vxor.u32 %v1247, 2147483648
  %v1418 = vxor.u32 %v1249, 2147483648
  %v1419 = vxor.u32 %v1251, 2147483648
  %v1420 = vxor.u32 %v1253, 2147483648
  %v1421 = vxor.u32 %v1255, 2147483648
  %v1422 = vxor.u32 %v1257, 2147483648
  %v1423 = vxor.u32 %v1259, 2147483648
  %v1424 = vxor.u32 %v1261, 2147483648
  %v1425 = vxor.u32 %v1263, 2147483648
  %v1426 = vxor.u32 %v1265, 2147483648
  %v1427 = vxor.u32 %v1267, 2147483648
  %v1428 = vxor.u32 %v1269, 2147483648
  %v1429 = vxor.u32 %v1271, 2147483648
  %v1430 = vxor.u32 %v1273, 2147483648
  %v1431 = vxor.u32 %v1275, 2147483648
  %v1432 = vxor.u32 %v1277, 2147483648
  %v1433 = vxor.u32 %v1279, 2147483648
  %v1434 = vxor.u32 %v1281, 2147483648
  %v1435 = vxor.u32 %v1283, 2147483648
  %v1436 = vxor.u32 %v1285, 2147483648
  %v1437 = vxor.u32 %v1287, 2147483648
  %v1438 = vxor.u32 %v1289, 2147483648
  %v1439 = vxor.u32 %v1291, 2147483648
  %v1440 = vxor.u32 %v1293, 2147483648
  %v1441 = vxor.u32 %v1295, 2147483648
  %v1442 = vxor.u32 %v1297, 2147483648
  %v1443 = vxor.u32 %v1299, 2147483648
  %v1444 = vxor.u32 %v1301, 2147483648
  %v1445 = vxor.u32 %v1303, 2147483648
  %v1446 = vxor.u32 %v1305, 2147483648
  %v1447 = vxor.u32 %v1307, 2147483648
  %v1448 = vxor.u32 %v1309, 2147483648
  %v1449 = vxor.u32 %v1311, 2147483648
  %v1450 = vxor.u32 %v1313, 2147483648
  %v1451 = vxor.u32 %v1315, 2147483648
  %v1452 = vxor.u32 %v1317, 2147483648
  %v1453 = vxor.u32 %v1319, 2147483648
  %v1454 = vxor.u32 %v1321, 2147483648
  %v1455 = vxor.u32 %v1323, 2147483648
  %v1456 = vxor.u32 %v1325, 2147483648
  %v1457 = vxor.u32 %v1327, 2147483648
  %v1458 = vxor.u32 %v1329, 2147483648
  %v1459 = vxor.u32 %v1331, 2147483648
  %v1460 = vxor.u32 %v1333, 2147483648
  %v1461 = vxor.u32 %v1335, 2147483648
  %v1462 = vxor.u32 %v1337, 2147483648
  %v1463 = vmul.f32 %v1338, 1.442695
  %v1464 = vpow.pop %v1463
  %v1465 = vmul.f32 %v1339, 1.442695
  %v1466 = vpow.pop %v1465
  %v1467 = vmul.f32 %v1340, 1.442695
  %v1468 = vpow.pop %v1467
  %v1469 = vmul.f32 %v1341, 1.442695
  %v1470 = vpow.pop %v1469
  %v1471 = vmul.f32 %v1342, 1.442695
  %v1472 = vpow.pop %v1471
  %v1473 = vmul.f32 %v1343, 1.442695
  %v1474 = vpow.pop %v1473
  %v1475 = vmul.f32 %v1344, 1.442695
  %v1476 = vpow.pop %v1475
  %v1477 = vmul.f32 %v1345, 1.442695
  %v1478 = vpow.pop %v1477
  %v1479 = vmul.f32 %v1346, 1.442695
  %v1480 = vpow.pop %v1479
  %v1481 = vmul.f32 %v1347, 1.442695
  %v1482 = vpow.pop %v1481
  %v1483 = vmul.f32 %v1348, 1.442695
  %v1484 = vpow.pop %v1483
  %v1485 = vmul.f32 %v1349, 1.442695
  %v1486 = vpow.pop %v1485
  %v1487 = vmul.f32 %v1350, 1.442695
  %v1488 = vpow.pop %v1487
  %v1489 = vmul.f32 %v1351, 1.442695
  %v1490 = vpow.pop %v1489
  %v1491 = vmul.f32 %v1352, 1.442695
  %v1492 = vpow.pop %v1491
  %v1493 = vmul.f32 %v1353, 1.442695
  %v1494 = vpow.pop %v1493
  %v1495 = vmul.f32 %v1354, 1.442695
  %v1496 = vpow.pop %v1495
  %v1497 = vmul.f32 %v1355, 1.442695
  %v1498 = vpow.pop %v1497
  %v1499 = vmul.f32 %v1356, 1.442695
  %v1500 = vpow.pop %v1499
  %v1501 = vmul.f32 %v1357, 1.442695
  %v1502 = vpow.pop %v1501
  %v1503 = vmul.f32 %v1358, 1.442695
  %v1504 = vpow.pop %v1503
  %v1505 = vmul.f32 %v1359, 1.442695
  %v1506 = vpow.pop %v1505
  %v1507 = vmul.f32 %v1360, 1.442695
  %v1508 = vpow.pop %v1507
  %v1509 = vmul.f32 %v1361, 1.442695
  %v1510 = vpow.pop %v1509
  %v1511 = vmul.f32 %v1362, 1.442695
  %v1512 = vpow.pop %v1511
  %v1513 = vmul.f32 %v1363, 1.442695
  %v1514 = vpow.pop %v1513
  %v1515 = vmul.f32 %v1364, 1.442695
  %v1516 = vpow.pop %v1515
  %v1517 = vmul.f32 %v1365, 1.442695
  %v1518 = vpow.pop %v1517
  %v1519 = vmul.f32 %v1366, 1.442695
  %v1520 = vpow.pop %v1519
  %v1521 = vmul.f32 %v1367, 1.442695
  %v1522 = vpow.pop %v1521
  %v1523 = vmul.f32 %v1368, 1.442695
  %v1524 = vpow.pop %v1523
  %v1525 = vmul.f32 %v1369, 1.442695
  %v1526 = vpow.pop %v1525
  %v1527 = vmul.f32 %v1370, 1.442695
  %v1528 = vpow.pop %v1527
  %v1529 = vmul.f32 %v1371, 1.442695
  %v1530 = vpow.pop %v1529
  %v1531 = vmul.f32 %v1372, 1.442695
  %v1532 = vpow.pop %v1531
  %v1533 = vmul.f32 %v1373, 1.442695
  %v1534 = vpow.pop %v1533
  %v1535 = vmul.f32 %v1374, 1.442695
  %v1536 = vpow.pop %v1535
  %v1537 = vmul.f32 %v1375, 1.442695
  %v1538 = vpow.pop %v1537
  %v1539 = vmul.f32 %v1376, 1.442695
  %v1540 = vpow.pop %v1539
  %v1541 = vmul.f32 %v1377, 1.442695
  %v1542 = vpow.pop %v1541
  %v1543 = vmul.f32 %v1378, 1.442695
  %v1544 = vpow.pop %v1543
  %v1545 = vmul.f32 %v1379, 1.442695
  %v1546 = vpow.pop %v1545
  %v1547 = vmul.f32 %v1380, 1.442695
  %v1548 = vpow.pop %v1547
  %v1549 = vmul.f32 %v1381, 1.442695
  %v1550 = vpow.pop %v1549
  %v1551 = vmul.f32 %v1382, 1.442695
  %v1552 = vpow.pop %v1551
  %v1553 = vmul.f32 %v1383, 1.442695
  %v1554 = vpow.pop %v1553
  %v1555 = vmul.f32 %v1384, 1.442695
  %v1556 = vpow.pop %v1555
  %v1557 = vmul.f32 %v1385, 1.442695
  %v1558 = vpow.pop %v1557
  %v1559 = vmul.f32 %v1386, 1.442695
  %v1560 = vpow.pop %v1559
  %v1561 = vmul.f32 %v1387, 1.442695
  %v1562 = vpow.pop %v1561
  %v1563 = vmul.f32 %v1388, 1.442695
  %v1564 = vpow.pop %v1563
  %v1565 = vmul.f32 %v1389, 1.442695
  %v1566 = vpow.pop %v1565
  %v1567 = vmul.f32 %v1390, 1.442695
  %v1568 = vpow.pop %v1567
  %v1569 = vmul.f32 %v1391, 1.442695
  %v1570 = vpow.pop %v1569
  %v1571 = vmul.f32 %v1392, 1.442695
  %v1572 = vpow.pop %v1571
  %v1573 = vmul.f32 %v1393, 1.442695
  %v1574 = vpow.pop %v1573
  %v1575 = vmul.f32 %v1394, 1.442695
  %v1576 = vpow.pop %v1575
  %v1577 = vmul.f32 %v1395, 1.442695
  %v1578 = vpow.pop %v1577
  %v1579 = vmul.f32 %v1396, 1.442695
  %v1580 = vpow.pop %v1579
  %v1581 = vmul.f32 %v1397, 1.442695
  %v1582 = vpow.pop %v1581
  %v1583 = vmul.f32 %v1398, 1.442695
  %v1584 = vpow.pop %v1583
  %v1585 = vmul.f32 %v1399, 1.442695
  %v1586 = vpow.pop %v1585
  %v1587 = vmul.f32 %v1400, 1.442695
  %v1588 = vpow.pop %v1587
  %v1589 = vmul.f32 %v1401, 1.442695
  %v1590 = vpow.pop %v1589
  %v1591 = vmul.f32 %v1402, 1.442695
  %v1592 = vpow.pop %v1591
  %v1593 = vmul.f32 %v1403, 1.442695
  %v1594 = vpow.pop %v1593
  %v1595 = vmul.f32 %v1404, 1.442695
  %v1596 = vpow.pop %v1595
  %v1597 = vmul.f32 %v1405, 1.442695
  %v1598 = vpow.pop %v1597
  %v1599 = vmul.f32 %v1406, 1.442695
  %v1600 = vpow.pop %v1599
  %v1601 = vmul.f32 %v1407, 1.442695
  %v1602 = vpow.pop %v1601
  %v1603 = vmul.f32 %v1408, 1.442695
  %v1604 = vpow.pop %v1603
  %v1605 = vmul.f32 %v1409, 1.442695
  %v1606 = vpow.pop %v1605
  %v1607 = vmul.f32 %v1410, 1.442695
  %v1608 = vpow.pop %v1607
  %v1609 = vmul.f32 %v1411, 1.442695
  %v1610 = vpow.pop %v1609
  %v1611 = vmul.f32 %v1412, 1.442695
  %v1612 = vpow.pop %v1611
  %v1613 = vmul.f32 %v1413, 1.442695
  %v1614 = vpow.pop %v1613
  %v1615 = vmul.f32 %v1414, 1.442695
  %v1616 = vpow.pop %v1615
  %v1617 = vmul.f32 %v1415, 1.442695
  %v1618 = vpow.pop %v1617
  %v1619 = vmul.f32 %v1416, 1.442695
  %v1620 = vpow.pop %v1619
  %v1621 = vmul.f32 %v1417, 1.442695
  %v1622 = vpow.pop %v1621
  %v1623 = vmul.f32 %v1418, 1.442695
  %v1624 = vpow.pop %v1623
  %v1625 = vmul.f32 %v1419, 1.442695
  %v1626 = vpow.pop %v1625
  %v1627 = vmul.f32 %v1420, 1.442695
  %v1628 = vpow.pop %v1627
  %v1629 = vmul.f32 %v1421, 1.442695
  %v1630 = vpow.pop %v1629
  %v1631 = vmul.f32 %v1422, 1.442695
  %v1632 = vpow.pop %v1631
  %v1633 = vmul.f32 %v1423, 1.442695
  %v1634 = vpow.pop %v1633
  %v1635 = vmul.f32 %v1424, 1.442695
  %v1636 = vpow.pop %v1635
  %v1637 = vmul.f32 %v1425, 1.442695
  %v1638 = vpow.pop %v1637
  %v1639 = vmul.f32 %v1426, 1.442695
  %v1640 = vpow.pop %v1639
  %v1641 = vmul.f32 %v1427, 1.442695
  %v1642 = vpow.pop %v1641
  %v1643 = vmul.f32 %v1428, 1.442695
  %v1644 = vpow.pop %v1643
  %v1645 = vmul.f32 %v1429, 1.442695
  %v1646 = vpow.pop %v1645
  %v1647 = vmul.f32 %v1430, 1.442695
  %v1648 = vpow.pop %v1647
  %v1649 = vmul.f32 %v1431, 1.442695
  %v1650 = vpow.pop %v1649
  %v1651 = vmul.f32 %v1432, 1.442695
  %v1652 = vpow.pop %v1651
  %v1653 = vmul.f32 %v1433, 1.442695
  %v1654 = vpow.pop %v1653
  %v1655 = vmul.f32 %v1434, 1.442695
  %v1656 = vpow.pop %v1655
  %v1657 = vmul.f32 %v1435, 1.442695
  %v1658 = vpow.pop %v1657
  %v1659 = vmul.f32 %v1436, 1.442695
  %v1660 = vpow.pop %v1659
  %v1661 = vmul.f32 %v1437, 1.442695
  %v1662 = vpow.pop %v1661
  %v1663 = vmul.f32 %v1438, 1.442695
  %v1664 = vpow.pop %v1663
  %v1665 = vmul.f32 %v1439, 1.442695
  %v1666 = vpow.pop %v1665
  %v1667 = vmul.f32 %v1440, 1.442695
  %v1668 = vpow.pop %v1667
  %v1669 = vmul.f32 %v1441, 1.442695
  %v1670 = vpow.pop %v1669
  %v1671 = vmul.f32 %v1442, 1.442695
  %v1672 = vpow.pop %v1671
  %v1673 = vmul.f32 %v1443, 1.442695
  %v1674 = vpow.pop %v1673
  %v1675 = vmul.f32 %v1444, 1.442695
  %v1676 = vpow.pop %v1675
  %v1677 = vmul.f32 %v1445, 1.442695
  %v1678 = vpow.pop %v1677
  %v1679 = vmul.f32 %v1446, 1.442695
  %v1680 = vpow.pop %v1679
  %v1681 = vmul.f32 %v1447, 1.442695
  %v1682 = vpow.pop %v1681
  %v1683 = vmul.f32 %v1448, 1.442695
  %v1684 = vpow.pop %v1683
  %v1685 = vmul.f32 %v1449, 1.442695
  %v1686 = vpow.pop %v1685
  %v1687 = vmul.f32 %v1450, 1.442695
  %v1688 = vpow.pop %v1687
  %v1689 = vmul.f32 %v1451, 1.442695
  %v1690 = vpow.pop %v1689
  %v1691 = vmul.f32 %v1452, 1.442695
  %v1692 = vpow.pop %v1691
  %v1693 = vmul.f32 %v1453, 1.442695
  %v1694 = vpow.pop %v1693
  %v1695 = vmul.f32 %v1454, 1.442695
  %v1696 = vpow.pop %v1695
  %v1697 = vmul.f32 %v1455, 1.442695
  %v1698 = vpow.pop %v1697
  %v1699 = vmul.f32 %v1456, 1.442695
  %v1700 = vpow.pop %v1699
  %v1701 = vmul.f32 %v1457, 1.442695
  %v1702 = vpow.pop %v1701
  %v1703 = vmul.f32 %v1458, 1.442695
  %v1704 = vpow.pop %v1703
  %v1705 = vmul.f32 %v1459, 1.442695
  %v1706 = vpow.pop %v1705
  %v1707 = vmul.f32 %v1460, 1.442695
  %v1708 = vpow.pop %v1707
  %v1709 = vmul.f32 %v1461, 1.442695
  %v1710 = vpow.pop %v1709
  %v1711 = vmul.f32 %v1462, 1.442695
  %v1712 = vpow.pop %v1711
  %v1713 = vadd.f32 %v1464, 1.0
  %v1714 = vadd.f32 %v1466, 1.0
  %v1715 = vadd.f32 %v1468, 1.0
  %v1716 = vadd.f32 %v1470, 1.0
  %v1717 = vadd.f32 %v1472, 1.0
  %v1718 = vadd.f32 %v1474, 1.0
  %v1719 = vadd.f32 %v1476, 1.0
  %v1720 = vadd.f32 %v1478, 1.0
  %v1721 = vadd.f32 %v1480, 1.0
  %v1722 = vadd.f32 %v1482, 1.0
  %v1723 = vadd.f32 %v1484, 1.0
  %v1724 = vadd.f32 %v1486, 1.0
  %v1725 = vadd.f32 %v1488, 1.0
  %v1726 = vadd.f32 %v1490, 1.0
  %v1727 = vadd.f32 %v1492, 1.0
  %v1728 = vadd.f32 %v1494, 1.0
  %v1729 = vadd.f32 %v1496, 1.0
  %v1730 = vadd.f32 %v1498, 1.0
  %v1731 = vadd.f32 %v1500, 1.0
  %v1732 = vadd.f32 %v1502, 1.0
  %v1733 = vadd.f32 %v1504, 1.0
  %v1734 = vadd.f32 %v1506, 1.0
  %v1735 = vadd.f32 %v1508, 1.0
  %v1736 = vadd.f32 %v1510, 1.0
  %v1737 = vadd.f32 %v1512, 1.0
  %v1738 = vadd.f32 %v1514, 1.0
  %v1739 = vadd.f32 %v1516, 1.0
  %v1740 = vadd.f32 %v1518, 1.0
  %v1741 = vadd.f32 %v1520, 1.0
  %v1742 = vadd.f32 %v1522, 1.0
  %v1743 = vadd.f32 %v1524, 1.0
  %v1744 = vadd.f32 %v1526, 1.0
  %v1745 = vadd.f32 %v1528, 1.0
  %v1746 = vadd.f32 %v1530, 1.0
  %v1747 = vadd.f32 %v1532, 1.0
  %v1748 = vadd.f32 %v1534, 1.0
  %v1749 = vadd.f32 %v1536, 1.0
  %v1750 = vadd.f32 %v1538, 1.0
  %v1751 = vadd.f32 %v1540, 1.0
  %v1752 = vadd.f32 %v1542, 1.0
  %v1753 = vadd.f32 %v1544, 1.0
  %v1754 = vadd.f32 %v1546, 1.0
  %v1755 = vadd.f32 %v1548, 1.0
  %v1756 = vadd.f32 %v1550, 1.0
  %v1757 = vadd.f32 %v1552, 1.0
  %v1758 = vadd.f32 %v1554, 1.0
  %v1759 = vadd.f32 %v1556, 1.0
  %v1760 = vadd.f32 %v1558, 1.0
  %v1761 = vadd.f32 %v1560, 1.0
  %v1762 = vadd.f32 %v1562, 1.0
  %v1763 = vadd.f32 %v1564, 1.0
  %v1764 = vadd.f32 %v1566, 1.0
  %v1765 = vadd.f32 %v1568, 1.0
  %v1766 = vadd.f32 %v1570, 1.0
  %v1767 = vadd.f32 %v1572, 1.0
  %v1768 = vadd.f32 %v1574, 1.0
  %v1769 = vadd.f32 %v1576, 1.0
  %v1770 = vadd.f32 %v1578, 1.0
  %v1771 = vadd.f32 %v1580, 1.0
  %v1772 = vadd.f32 %v1582, 1.0
  %v1773 = vadd.f32 %v1584, 1.0
  %v1774 = vadd.f32 %v1586, 1.0
  %v1775 = vadd.f32 %v1588, 1.0
  %v1776 = vadd.f32 %v1590, 1.0
  %v1777 = vadd.f32 %v1592, 1.0
  %v1778 = vadd.f32 %v1594, 1.0
  %v1779 = vadd.f32 %v1596, 1.0
  %v1780 = vadd.f32 %v1598, 1.0
  %v1781 = vadd.f32 %v1600, 1.0
  %v1782 = vadd.f32 %v1602, 1.0
  %v1783 = vadd.f32 %v1604, 1.0
  %v1784 = vadd.f32 %v1606, 1.0
  %v1785 = vadd.f32 %v1608, 1.0
  %v1786 = vadd.f32 %v1610, 1.0
  %v1787 = vadd.f32 %v1612, 1.0
  %v1788 = vadd.f32 %v1614, 1.0
  %v1789 = vadd.f32 %v1616, 1.0
  %v1790 = vadd.f32 %v1618, 1.0
  %v1791 = vadd.f32 %v1620, 1.0
  %v1792 = vadd.f32 %v1622, 1.0
  %v1793 = vadd.f32 %v1624, 1.0
  %v1794 = vadd.f32 %v1626, 1.0
  %v1795 = vadd.f32 %v1628, 1.0
  %v1796 = vadd.f32 %v1630, 1.0
  %v1797 = vadd.f32 %v1632, 1.0
  %v1798 = vadd.f32 %v1634, 1.0
  %v1799 = vadd.f32 %v1636, 1.0
  %v1800 = vadd.f32 %v1638, 1.0
  %v1801 = vadd.f32 %v1640, 1.0
  %v1802 = vadd.f32 %v1642, 1.0
  %v1803 = vadd.f32 %v1644, 1.0
  %v1804 = vadd.f32 %v1646, 1.0
  %v1805 = vadd.f32 %v1648, 1.0
  %v1806 = vadd.f32 %v1650, 1.0
  %v1807 = vadd.f32 %v1652, 1.0
  %v1808 = vadd.f32 %v1654, 1.0
  %v1809 = vadd.f32 %v1656, 1.0
  %v1810 = vadd.f32 %v1658, 1.0
  %v1811 = vadd.f32 %v1660, 1.0
  %v1812 = vadd.f32 %v1662, 1.0
  %v1813 = vadd.f32 %v1664, 1.0
  %v1814 = vadd.f32 %v1666, 1.0
  %v1815 = vadd.f32 %v1668, 1.0
  %v1816 = vadd.f32 %v1670, 1.0
  %v1817 = vadd.f32 %v1672, 1.0
  %v1818 = vadd.f32 %v1674, 1.0
  %v1819 = vadd.f32 %v1676, 1.0
  %v1820 = vadd.f32 %v1678, 1.0
  %v1821 = vadd.f32 %v1680, 1.0
  %v1822 = vadd.f32 %v1682, 1.0
  %v1823 = vadd.f32 %v1684, 1.0
  %v1824 = vadd.f32 %v1686, 1.0
  %v1825 = vadd.f32 %v1688, 1.0
  %v1826 = vadd.f32 %v1690, 1.0
  %v1827 = vadd.f32 %v1692, 1.0
  %v1828 = vadd.f32 %v1694, 1.0
  %v1829 = vadd.f32 %v1696, 1.0
  %v1830 = vadd.f32 %v1698, 1.0
  %v1831 = vadd.f32 %v1700, 1.0
  %v1832 = vadd.f32 %v1702, 1.0
  %v1833 = vadd.f32 %v1704, 1.0
  %v1834 = vadd.f32 %v1706, 1.0
  %v1835 = vadd.f32 %v1708, 1.0
  %v1836 = vadd.f32 %v1710, 1.0
  %v1837 = vadd.f32 %v1712, 1.0
  %v1838 = vrcp.pop %v1713
  %v1839 = vmul.f32 1.0, %v1838
  %v1840 = vrcp.pop %v1714
  %v1841 = vmul.f32 1.0, %v1840
  %v1842 = vrcp.pop %v1715
  %v1843 = vmul.f32 1.0, %v1842
  %v1844 = vrcp.pop %v1716
  %v1845 = vmul.f32 1.0, %v1844
  %v1846 = vrcp.pop %v1717
  %v1847 = vmul.f32 1.0, %v1846
  %v1848 = vrcp.pop %v1718
  %v1849 = vmul.f32 1.0, %v1848
  %v1850 = vrcp.pop %v1719
  %v1851 = vmul.f32 1.0, %v1850
  %v1852 = vrcp.pop %v1720
  %v1853 = vmul.f32 1.0, %v1852
  %v1854 = vrcp.pop %v1721
  %v1855 = vmul.f32 1.0, %v1854
  %v1856 = vrcp.pop %v1722
  %v1857 = vmul.f32 1.0, %v1856
  %v1858 = vrcp.pop %v1723
  %v1859 = vmul.f32 1.0, %v1858
  %v1860 = vrcp.pop %v1724
  %v1861 = vmul.f32 1.0, %v1860
  %v1862 = vrcp.pop %v1725
  %v1863 = vmul.f32 1.0, %v1862
  %v1864 = vrcp.pop %v1726
  %v1865 = vmul.f32 1.0, %v1864
  %v1866 = vrcp.pop %v1727
  %v1867 = vmul.f32 1.0, %v1866
  %v1868 = vrcp.pop %v1728
  %v1869 = vmul.f32 1.0, %v1868
  %v1870 = vrcp.pop %v1729
  %v1871 = vmul.f32 1.0, %v1870
  %v1872 = vrcp.pop %v1730
  %v1873 = vmul.f32 1.0, %v1872
  %v1874 = vrcp.pop %v1731
  %v1875 = vmul.f32 1.0, %v1874
  %v1876 = vrcp.pop %v1732
  %v1877 = vmul.f32 1.0, %v1876
  %v1878 = vrcp.pop %v1733
  %v1879 = vmul.f32 1.0, %v1878
  %v1880 = vrcp.pop %v1734
  %v1881 = vmul.f32 1.0, %v1880
  %v1882 = vrcp.pop %v1735
  %v1883 = vmul.f32 1.0, %v1882
  %v1884 = vrcp.pop %v1736
  %v1885 = vmul.f32 1.0, %v1884
  %v1886 = vrcp.pop %v1737
  %v1887 = vmul.f32 1.0, %v1886
  %v1888 = vrcp.pop %v1738
  %v1889 = vmul.f32 1.0, %v1888
  %v1890 = vrcp.pop %v1739
  %v1891 = vmul.f32 1.0, %v1890
  %v1892 = vrcp.pop %v1740
  %v1893 = vmul.f32 1.0, %v1892
  %v1894 = vrcp.pop %v1741
  %v1895 = vmul.f32 1.0, %v1894
  %v1896 = vrcp.pop %v1742
  %v1897 = vmul.f32 1.0, %v1896
  %v1898 = vrcp.pop %v1743
  %v1899 = vmul.f32 1.0, %v1898
  %v1900 = vrcp.pop %v1744
  %v1901 = vmul.f32 1.0, %v1900
  %v1902 = vrcp.pop %v1745
  %v1903 = vmul.f32 1.0, %v1902
  %v1904 = vrcp.pop %v1746
  %v1905 = vmul.f32 1.0, %v1904
  %v1906 = vrcp.pop %v1747
  %v1907 = vmul.f32 1.0, %v1906
  %v1908 = vrcp.pop %v1748
  %v1909 = vmul.f32 1.0, %v1908
  %v1910 = vrcp.pop %v1749
  %v1911 = vmul.f32 1.0, %v1910
  %v1912 = vrcp.pop %v1750
  %v1913 = vmul.f32 1.0, %v1912
  %v1914 = vrcp.pop %v1751
  %v1915 = vmul.f32 1.0, %v1914
  %v1916 = vrcp.pop %v1752
  %v1917 = vmul.f32 1.0, %v1916
  %v1918 = vrcp.pop %v1753
  %v1919 = vmul.f32 1.0, %v1918
  %v1920 = vrcp.pop %v1754
  %v1921 = vmul.f32 1.0, %v1920
  %v1922 = vrcp.pop %v1755
  %v1923 = vmul.f32 1.0, %v1922
  %v1924 = vrcp.pop %v1756
  %v1925 = vmul.f32 1.0, %v1924
  %v1926 = vrcp.pop %v1757
  %v1927 = vmul.f32 1.0, %v1926
  %v1928 = vrcp.pop %v1758
  %v1929 = vmul.f32 1.0, %v1928
  %v1930 = vrcp.pop %v1759
  %v1931 = vmul.f32 1.0, %v1930
  %v1932 = vrcp.pop %v1760
  %v1933 = vmul.f32 1.0, %v1932
  %v1934 = vrcp.pop %v1761
  %v1935 = vmul.f32 1.0, %v1934
  %v1936 = vrcp.pop %v1762
  %v1937 = vmul.f32 1.0, %v1936
  %v1938 = vrcp.pop %v1763
  %v1939 = vmul.f32 1.0, %v1938
  %v1940 = vrcp.pop %v1764
  %v1941 = vmul.f32 1.0, %v1940
  %v1942 = vrcp.pop %v1765
  %v1943 = vmul.f32 1.0, %v1942
  %v1944 = vrcp.pop %v1766
  %v1945 = vmul.f32 1.0, %v1944
  %v1946 = vrcp.pop %v1767
  %v1947 = vmul.f32 1.0, %v1946
  %v1948 = vrcp.pop %v1768
  %v1949 = vmul.f32 1.0, %v1948
  %v1950 = vrcp.pop %v1769
  %v1951 = vmul.f32 1.0, %v1950
  %v1952 = vrcp.pop %v1770
  %v1953 = vmul.f32 1.0, %v1952
  %v1954 = vrcp.pop %v1771
  %v1955 = vmul.f32 1.0, %v1954
  %v1956 = vrcp.pop %v1772
  %v1957 = vmul.f32 1.0, %v1956
  %v1958 = vrcp.pop %v1773
  %v1959 = vmul.f32 1.0, %v1958
  %v1960 = vrcp.pop %v1774
  %v1961 = vmul.f32 1.0, %v1960
  %v1962 = vrcp.pop %v1775
  %v1963 = vmul.f32 1.0, %v1962
  %v1964 = vrcp.pop %v1776
  %v1965 = vmul.f32 1.0, %v1964
  %v1966 = vrcp.pop %v1777
  %v1967 = vmul.f32 1.0, %v1966
  %v1968 = vrcp.pop %v1778
  %v1969 = vmul.f32 1.0, %v1968
  %v1970 = vrcp.pop %v1779
  %v1971 = vmul.f32 1.0, %v1970
  %v1972 = vrcp.pop %v1780
  %v1973 = vmul.f32 1.0, %v1972
  %v1974 = vrcp.pop %v1781
  %v1975 = vmul.f32 1.0, %v1974
  %v1976 = vrcp.pop %v1782
  %v1977 = vmul.f32 1.0, %v1976
  %v1978 = vrcp.pop %v1783
  %v1979 = vmul.f32 1.0, %v1978
  %v1980 = vrcp.pop %v1784
  %v1981 = vmul.f32 1.0, %v1980
  %v1982 = vrcp.pop %v1785
  %v1983 = vmul.f32 1.0, %v1982
  %v1984 = vrcp.pop %v1786
  %v1985 = vmul.f32 1.0, %v1984
  %v1986 = vrcp.pop %v1787
  %v1987 = vmul.f32 1.0, %v1986
  %v1988 = vrcp.pop %v1788
  %v1989 = vmul.f32 1.0, %v1988
  %v1990 = vrcp.pop %v1789
  %v1991 = vmul.f32 1.0, %v1990
  %v1992 = vrcp.pop %v1790
  %v1993 = vmul.f32 1.0, %v1992
  %v1994 = vrcp.pop %v1791
  %v1995 = vmul.f32 1.0, %v1994
  %v1996 = vrcp.pop %v1792
  %v1997 = vmul.f32 1.0, %v1996
  %v1998 = vrcp.pop %v1793
  %v1999 = vmul.f32 1.0, %v1998
  %v2000 = vrcp.pop %v1794
  %v2001 = vmul.f32 1.0, %v2000
  %v2002 = vrcp.pop %v1795
  %v2003 = vmul.f32 1.0, %v2002
  %v2004 = vrcp.pop %v1796
  %v2005 = vmul.f32 1.0, %v2004
  %v2006 = vrcp.pop %v1797
  %v2007 = vmul.f32 1.0, %v2006
  %v2008 = vrcp.pop %v1798
  %v2009 = vmul.f32 1.0, %v2008
  %v2010 = vrcp.pop %v1799
  %v2011 = vmul.f32 1.0, %v2010
  %v2012 = vrcp.pop %v1800
  %v2013 = vmul.f32 1.0, %v2012
  %v2014 = vrcp.pop %v1801
  %v2015 = vmul.f32 1.0, %v2014
  %v2016 = vrcp.pop %v1802
  %v2017 = vmul.f32 1.0, %v2016
  %v2018 = vrcp.pop %v1803
  %v2019 = vmul.f32 1.0, %v2018
  %v2020 = vrcp.pop %v1804
  %v2021 = vmul.f32 1.0, %v2020
  %v2022 = vrcp.pop %v1805
  %v2023 = vmul.f32 1.0, %v2022
  %v2024 = vrcp.pop %v1806
  %v2025 = vmul.f32 1.0, %v2024
  %v2026 = vrcp.pop %v1807
  %v2027 = vmul.f32 1.0, %v2026
  %v2028 = vrcp.pop %v1808
  %v2029 = vmul.f32 1.0, %v2028
  %v2030 = vrcp.pop %v1809
  %v2031 = vmul.f32 1.0, %v2030
  %v2032 = vrcp.pop %v1810
  %v2033 = vmul.f32 1.0, %v2032
  %v2034 = vrcp.pop %v1811
  %v2035 = vmul.f32 1.0, %v2034
  %v2036 = vrcp.pop %v1812
  %v2037 = vmul.f32 1.0, %v2036
  %v2038 = vrcp.pop %v1813
  %v2039 = vmul.f32 1.0, %v2038
  %v2040 = vrcp.pop %v1814
  %v2041 = vmul.f32 1.0, %v2040
  %v2042 = vrcp.pop %v1815
  %v2043 = vmul.f32 1.0, %v2042
  %v2044 = vrcp.pop %v1816
  %v2045 = vmul.f32 1.0, %v2044
  %v2046 = vrcp.pop %v1817
  %v2047 = vmul.f32 1.0, %v2046
  %v2048 = vrcp.pop %v1818
  %v2049 = vmul.f32 1.0, %v2048
  %v2050 = vrcp.pop %v1819
  %v2051 = vmul.f32 1.0, %v2050
  %v2052 = vrcp.pop %v1820
  %v2053 = vmul.f32 1.0, %v2052
  %v2054 = vrcp.pop %v1821
  %v2055 = vmul.f32 1.0, %v2054
  %v2056 = vrcp.pop %v1822
  %v2057 = vmul.f32 1.0, %v2056
  %v2058 = vrcp.pop %v1823
  %v2059 = vmul.f32 1.0, %v2058
  %v2060 = vrcp.pop %v1824
  %v2061 = vmul.f32 1.0, %v2060
  %v2062 = vrcp.pop %v1825
  %v2063 = vmul.f32 1.0, %v2062
  %v2064 = vrcp.pop %v1826
  %v2065 = vmul.f32 1.0, %v2064
  %v2066 = vrcp.pop %v1827
  %v2067 = vmul.f32 1.0, %v2066
  %v2068 = vrcp.pop %v1828
  %v2069 = vmul.f32 1.0, %v2068
  %v2070 = vrcp.pop %v1829
  %v2071 = vmul.f32 1.0, %v2070
  %v2072 = vrcp.pop %v1830
  %v2073 = vmul.f32 1.0, %v2072
  %v2074 = vrcp.pop %v1831
  %v2075 = vmul.f32 1.0, %v2074
  %v2076 = vrcp.pop %v1832
  %v2077 = vmul.f32 1.0, %v2076
  %v2078 = vrcp.pop %v1833
  %v2079 = vmul.f32 1.0, %v2078
  %v2080 = vrcp.pop %v1834
  %v2081 = vmul.f32 1.0, %v2080
  %v2082 = vrcp.pop %v1835
  %v2083 = vmul.f32 1.0, %v2082
  %v2084 = vrcp.pop %v1836
  %v2085 = vmul.f32 1.0, %v2084
  %v2086 = vrcp.pop %v1837
  %v2087 = vmul.f32 1.0, %v2086
  %vm2088 = vcmask 7168
  %2089 = vst.msk [vmem:[%s6] sm:$0xff] %vm2088, %v1839
  %2090 = vst.msk [vmem:[%s6 + $0x8] sm:$0xff] %vm2088, %v1841
  %2091 = vst.msk [vmem:[%s6 + $0x10] sm:$0xff] %vm2088, %v1843
  %2092 = vst.msk [vmem:[%s6 + $0x18] sm:$0xff] %vm2088, %v1845
  %2093 = vst.msk [vmem:[%s6 + $0x20] sm:$0xff] %vm2088, %v1847
  %2094 = vst.msk [vmem:[%s6 + $0x28] sm:$0xff] %vm2088, %v1849
  %2095 = vst.msk [vmem:[%s6 + $0x30] sm:$0xff] %vm2088, %v1851
  %2096 = vst.msk [vmem:[%s6 + $0x38] sm:$0xff] %vm2088, %v1853
  %2097 = vst.msk [vmem:[%s6 + $0x40] sm:$0xff] %vm2088, %v1855
  %2098 = vst.msk [vmem:[%s6 + $0x48] sm:$0xff] %vm2088, %v1857
  %2099 = vst.msk [vmem:[%s6 + $0x50] sm:$0xff] %vm2088, %v1859
  %2100 = vst.msk [vmem:[%s6 + $0x58] sm:$0xff] %vm2088, %v1861
  %2101 = vst.msk [vmem:[%s6 + $0x60] sm:$0xff] %vm2088, %v1863
  %2102 = vst.msk [vmem:[%s6 + $0x68] sm:$0xff] %vm2088, %v1865
  %2103 = vst.msk [vmem:[%s6 + $0x70] sm:$0xff] %vm2088, %v1867
  %2104 = vst.msk [vmem:[%s6 + $0x78] sm:$0xff] %vm2088, %v1869
  %2105 = vst.msk [vmem:[%s6 + $0x80] sm:$0xff] %vm2088, %v1871
  %2106 = vst.msk [vmem:[%s6 + $0x88] sm:$0xff] %vm2088, %v1873
  %2107 = vst.msk [vmem:[%s6 + $0x90] sm:$0xff] %vm2088, %v1875
  %2108 = vst.msk [vmem:[%s6 + $0x98] sm:$0xff] %vm2088, %v1877
  %2109 = vst.msk [vmem:[%s6 + $0xa0] sm:$0xff] %vm2088, %v1879
  %2110 = vst.msk [vmem:[%s6 + $0xa8] sm:$0xff] %vm2088, %v1881
  %2111 = vst.msk [vmem:[%s6 + $0xb0] sm:$0xff] %vm2088, %v1883
  %2112 = vst.msk [vmem:[%s6 + $0xb8] sm:$0xff] %vm2088, %v1885
  %2113 = vst.msk [vmem:[%s6 + $0xc0] sm:$0xff] %vm2088, %v1887
  %2114 = vst.msk [vmem:[%s6 + $0xc8] sm:$0xff] %vm2088, %v1889
  %2115 = vst.msk [vmem:[%s6 + $0xd0] sm:$0xff] %vm2088, %v1891
  %2116 = vst.msk [vmem:[%s6 + $0xd8] sm:$0xff] %vm2088, %v1893
  %2117 = vst.msk [vmem:[%s6 + $0xe0] sm:$0xff] %vm2088, %v1895
  %2118 = vst.msk [vmem:[%s6 + $0xe8] sm:$0xff] %vm2088, %v1897
  %2119 = vst.msk [vmem:[%s6 + $0xf0] sm:$0xff] %vm2088, %v1899
  %2120 = vst.msk [vmem:[%s6 + $0xf8] sm:$0xff] %vm2088, %v1901
  %2121 = vst.msk [vmem:[%s6 + $0x100] sm:$0xff] %vm2088, %v1903
  %2122 = vst.msk [vmem:[%s6 + $0x108] sm:$0xff] %vm2088, %v1905
  %2123 = vst.msk [vmem:[%s6 + $0x110] sm:$0xff] %vm2088, %v1907
  %2124 = vst.msk [vmem:[%s6 + $0x118] sm:$0xff] %vm2088, %v1909
  %2125 = vst.msk [vmem:[%s6 + $0x120] sm:$0xff] %vm2088, %v1911
  %2126 = vst.msk [vmem:[%s6 + $0x128] sm:$0xff] %vm2088, %v1913
  %2127 = vst.msk [vmem:[%s6 + $0x130] sm:$0xff] %vm2088, %v1915
  %2128 = vst.msk [vmem:[%s6 + $0x138] sm:$0xff] %vm2088, %v1917
  %2129 = vst.msk [vmem:[%s6 + $0x140] sm:$0xff] %vm2088, %v1919
  %2130 = vst.msk [vmem:[%s6 + $0x148] sm:$0xff] %vm2088, %v1921
  %2131 = vst.msk [vmem:[%s6 + $0x150] sm:$0xff] %vm2088, %v1923
  %2132 = vst.msk [vmem:[%s6 + $0x158] sm:$0xff] %vm2088, %v1925
  %2133 = vst.msk [vmem:[%s6 + $0x160] sm:$0xff] %vm2088, %v1927
  %2134 = vst.msk [vmem:[%s6 + $0x168] sm:$0xff] %vm2088, %v1929
  %2135 = vst.msk [vmem:[%s6 + $0x170] sm:$0xff] %vm2088, %v1931
  %2136 = vst.msk [vmem:[%s6 + $0x178] sm:$0xff] %vm2088, %v1933
  %2137 = vst.msk [vmem:[%s6 + $0x180] sm:$0xff] %vm2088, %v1935
  %2138 = vst.msk [vmem:[%s6 + $0x188] sm:$0xff] %vm2088, %v1937
  %2139 = vst.msk [vmem:[%s6 + $0x190] sm:$0xff] %vm2088, %v1939
  %2140 = vst.msk [vmem:[%s6 + $0x198] sm:$0xff] %vm2088, %v1941
  %2141 = vst.msk [vmem:[%s6 + $0x1a0] sm:$0xff] %vm2088, %v1943
  %2142 = vst.msk [vmem:[%s6 + $0x1a8] sm:$0xff] %vm2088, %v1945
  %2143 = vst.msk [vmem:[%s6 + $0x1b0] sm:$0xff] %vm2088, %v1947
  %2144 = vst.msk [vmem:[%s6 + $0x1b8] sm:$0xff] %vm2088, %v1949
  %2145 = vst.msk [vmem:[%s6 + $0x1c0] sm:$0xff] %vm2088, %v1951
  %2146 = vst.msk [vmem:[%s6 + $0x1c8] sm:$0xff] %vm2088, %v1953
  %2147 = vst.msk [vmem:[%s6 + $0x1d0] sm:$0xff] %vm2088, %v1955
  %2148 = vst.msk [vmem:[%s6 + $0x1d8] sm:$0xff] %vm2088, %v1957
  %2149 = vst.msk [vmem:[%s6 + $0x1e0] sm:$0xff] %vm2088, %v1959
  %2150 = vst.msk [vmem:[%s6 + $0x1e8] sm:$0xff] %vm2088, %v1961
  %2151 = vst.msk [vmem:[%s6 + $0x1f0] sm:$0xff] %vm2088, %v1963
  %2152 = vst.msk [vmem:[%s6 + $0x1f8] sm:$0xff] %vm2088, %v1965
  %2153 = vst.msk [vmem:[%s6 + $0x200] sm:$0xff] %vm2088, %v1967
  %2154 = vst.msk [vmem:[%s6 + $0x208] sm:$0xff] %vm2088, %v1969
  %2155 = vst.msk [vmem:[%s6 + $0x210] sm:$0xff] %vm2088, %v1971
  %2156 = vst.msk [vmem:[%s6 + $0x218] sm:$0xff] %vm2088, %v1973
  %2157 = vst.msk [vmem:[%s6 + $0x220] sm:$0xff] %vm2088, %v1975
  %2158 = vst.msk [vmem:[%s6 + $0x228] sm:$0xff] %vm2088, %v1977
  %2159 = vst.msk [vmem:[%s6 + $0x230] sm:$0xff] %vm2088, %v1979
  %2160 = vst.msk [vmem:[%s6 + $0x238] sm:$0xff] %vm2088, %v1981
  %2161 = vst.msk [vmem:[%s6 + $0x240] sm:$0xff] %vm2088, %v1983
  %2162 = vst.msk [vmem:[%s6 + $0x248] sm:$0xff] %vm2088, %v1985
  %2163 = vst.msk [vmem:[%s6 + $0x250] sm:$0xff] %vm2088, %v1987
  %2164 = vst.msk [vmem:[%s6 + $0x258] sm:$0xff] %vm2088, %v1989
  %2165 = vst.msk [vmem:[%s6 + $0x260] sm:$0xff] %vm2088, %v1991
  %2166 = vst.msk [vmem:[%s6 + $0x268] sm:$0xff] %vm2088, %v1993
  %2167 = vst.msk [vmem:[%s6 + $0x270] sm:$0xff] %vm2088, %v1995
  %2168 = vst.msk [vmem:[%s6 + $0x278] sm:$0xff] %vm2088, %v1997
  %2169 = vst.msk [vmem:[%s6 + $0x280] sm:$0xff] %vm2088, %v1999
  %2170 = vst.msk [vmem:[%s6 + $0x288] sm:$0xff] %vm2088, %v2001
  %2171 = vst.msk [vmem:[%s6 + $0x290] sm:$0xff] %vm2088, %v2003
  %2172 = vst.msk [vmem:[%s6 + $0x298] sm:$0xff] %vm2088, %v2005
  %2173 = vst.msk [vmem:[%s6 + $0x2a0] sm:$0xff] %vm2088, %v2007
  %2174 = vst.msk [vmem:[%s6 + $0x2a8] sm:$0xff] %vm2088, %v2009
  %2175 = vst.msk [vmem:[%s6 + $0x2b0] sm:$0xff] %vm2088, %v2011
  %2176 = vst.msk [vmem:[%s6 + $0x2b8] sm:$0xff] %vm2088, %v2013
  %2177 = vst.msk [vmem:[%s6 + $0x2c0] sm:$0xff] %vm2088, %v2015
  %2178 = vst.msk [vmem:[%s6 + $0x2c8] sm:$0xff] %vm2088, %v2017
  %2179 = vst.msk [vmem:[%s6 + $0x2d0] sm:$0xff] %vm2088, %v2019
  %2180 = vst.msk [vmem:[%s6 + $0x2d8] sm:$0xff] %vm2088, %v2021
  %2181 = vst.msk [vmem:[%s6 + $0x2e0] sm:$0xff] %vm2088, %v2023
  %2182 = vst.msk [vmem:[%s6 + $0x2e8] sm:$0xff] %vm2088, %v2025
  %2183 = vst.msk [vmem:[%s6 + $0x2f0] sm:$0xff] %vm2088, %v2027
  %2184 = vst.msk [vmem:[%s6 + $0x2f8] sm:$0xff] %vm2088, %v2029
  %2185 = vst.msk [vmem:[%s6 + $0x300] sm:$0xff] %vm2088, %v2031
  %2186 = vst.msk [vmem:[%s6 + $0x308] sm:$0xff] %vm2088, %v2033
  %2187 = vst.msk [vmem:[%s6 + $0x310] sm:$0xff] %vm2088, %v2035
  %2188 = vst.msk [vmem:[%s6 + $0x318] sm:$0xff] %vm2088, %v2037
  %2189 = vst.msk [vmem:[%s6 + $0x320] sm:$0xff] %vm2088, %v2039
  %2190 = vst.msk [vmem:[%s6 + $0x328] sm:$0xff] %vm2088, %v2041
  %2191 = vst.msk [vmem:[%s6 + $0x330] sm:$0xff] %vm2088, %v2043
  %2192 = vst.msk [vmem:[%s6 + $0x338] sm:$0xff] %vm2088, %v2045
  %2193 = vst.msk [vmem:[%s6 + $0x340] sm:$0xff] %vm2088, %v2047
  %2194 = vst.msk [vmem:[%s6 + $0x348] sm:$0xff] %vm2088, %v2049
  %2195 = vst.msk [vmem:[%s6 + $0x350] sm:$0xff] %vm2088, %v2051
  %2196 = vst.msk [vmem:[%s6 + $0x358] sm:$0xff] %vm2088, %v2053
  %2197 = vst.msk [vmem:[%s6 + $0x360] sm:$0xff] %vm2088, %v2055
  %2198 = vst.msk [vmem:[%s6 + $0x368] sm:$0xff] %vm2088, %v2057
  %2199 = vst.msk [vmem:[%s6 + $0x370] sm:$0xff] %vm2088, %v2059
  %2200 = vst.msk [vmem:[%s6 + $0x378] sm:$0xff] %vm2088, %v2061
  %2201 = vst.msk [vmem:[%s6 + $0x380] sm:$0xff] %vm2088, %v2063
  %2202 = vst.msk [vmem:[%s6 + $0x388] sm:$0xff] %vm2088, %v2065
  %2203 = vst.msk [vmem:[%s6 + $0x390] sm:$0xff] %vm2088, %v2067
  %2204 = vst.msk [vmem:[%s6 + $0x398] sm:$0xff] %vm2088, %v2069
  %2205 = vst.msk [vmem:[%s6 + $0x3a0] sm:$0xff] %vm2088, %v2071
  %2206 = vst.msk [vmem:[%s6 + $0x3a8] sm:$0xff] %vm2088, %v2073
  %2207 = vst.msk [vmem:[%s6 + $0x3b0] sm:$0xff] %vm2088, %v2075
  %2208 = vst.msk [vmem:[%s6 + $0x3b8] sm:$0xff] %vm2088, %v2077
  %2209 = vst.msk [vmem:[%s6 + $0x3c0] sm:$0xff] %vm2088, %v2079
  %2210 = vst.msk [vmem:[%s6 + $0x3c8] sm:$0xff] %vm2088, %v2081
  %2211 = vst.msk [vmem:[%s6 + $0x3d0] sm:$0xff] %vm2088, %v2083
  %2212 = vst.msk [vmem:[%s6 + $0x3d8] sm:$0xff] %vm2088, %v2085
  %2213 = vst.msk [vmem:[%s6 + $0x3e0] sm:$0xff] %vm2088, %v2087
  %v2214 = vmax.f32 %v459, 0.0
  %v2215 = vmax.f32 %v462, 0.0
  %v2216 = vmax.f32 %v467, 0.0
  %v2217 = vmax.f32 %v470, 0.0
  %v2218 = vmax.f32 %v475, 0.0
  %v2219 = vmax.f32 %v478, 0.0
  %v2220 = vmax.f32 %v483, 0.0
  %v2221 = vmax.f32 %v486, 0.0
  %v2222 = vmax.f32 %v491, 0.0
  %v2223 = vmax.f32 %v494, 0.0
  %v2224 = vmax.f32 %v499, 0.0
  %v2225 = vmax.f32 %v502, 0.0
  %v2226 = vmax.f32 %v507, 0.0
  %v2227 = vmax.f32 %v510, 0.0
  %v2228 = vmax.f32 %v515, 0.0
  %v2229 = vmax.f32 %v518, 0.0
  %v2230 = vmax.f32 %v523, 0.0
  %v2231 = vmax.f32 %v526, 0.0
  %v2232 = vmax.f32 %v531, 0.0
  %v2233 = vmax.f32 %v534, 0.0
  %v2234 = vmax.f32 %v539, 0.0
  %v2235 = vmax.f32 %v542, 0.0
  %v2236 = vmax.f32 %v547, 0.0
  %v2237 = vmax.f32 %v550, 0.0
  %v2238 = vmax.f32 %v555, 0.0
  %v2239 = vmax.f32 %v558, 0.0
  %v2240 = vmax.f32 %v563, 0.0
  %v2241 = vmax.f32 %v566, 0.0
  %v2242 = vmax.f32 %v571, 0.0
  %v2243 = vmax.f32 %v574, 0.0
  %v2244 = vmax.f32 %v579, 0.0
  %v2245 = vmax.f32 %v582, 0.0
  %v2246 = vmax.f32 %v587, 0.0
  %v2247 = vmax.f32 %v590, 0.0
  %v2248 = vmax.f32 %v595, 0.0
  %v2249 = vmax.f32 %v598, 0.0
  %v2250 = vmax.f32 %v603, 0.0
  %v2251 = vmax.f32 %v606, 0.0
  %v2252 = vmax.f32 %v611, 0.0
  %v2253 = vmax.f32 %v614, 0.0
  %v2254 = vmax.f32 %v619, 0.0
  %v2255 = vmax.f32 %v622, 0.0
  %v2256 = vmax.f32 %v627, 0.0
  %v2257 = vmax.f32 %v630, 0.0
  %v2258 = vmax.f32 %v635, 0.0
  %v2259 = vmax.f32 %v638, 0.0
  %v2260 = vmax.f32 %v643, 0.0
  %v2261 = vmax.f32 %v646, 0.0
  %v2262 = vmax.f32 %v651, 0.0
  %v2263 = vmax.f32 %v654, 0.0
  %v2264 = vmax.f32 %v659, 0.0
  %v2265 = vmax.f32 %v662, 0.0
  %v2266 = vmax.f32 %v667, 0.0
  %v2267 = vmax.f32 %v670, 0.0
  %v2268 = vmax.f32 %v675, 0.0
  %v2269 = vmax.f32 %v678, 0.0
  %v2270 = vmax.f32 %v683, 0.0
  %v2271 = vmax.f32 %v686, 0.0
  %v2272 = vmax.f32 %v691, 0.0
  %v2273 = vmax.f32 %v694, 0.0
  %v2274 = vmax.f32 %v699, 0.0
  %v2275 = vmax.f32 %v702, 0.0
  %v2276 = vmax.f32 %v707, 0.0
  %v2277 = vmax.f32 %v710, 0.0
  %v2278 = vmax.f32 %v715, 0.0
  %v2279 = vmax.f32 %v718, 0.0
  %v2280 = vmax.f32 %v723, 0.0
  %v2281 = vmax.f32 %v726, 0.0
  %v2282 = vmax.f32 %v731, 0.0
  %v2283 = vmax.f32 %v734, 0.0
  %v2284 = vmax.f32 %v739, 0.0
  %v2285 = vmax.f32 %v742, 0.0
  %v2286 = vmax.f32 %v747, 0.0
  %v2287 = vmax.f32 %v750, 0.0
  %v2288 = vmax.f32 %v755, 0.0
  %v2289 = vmax.f32 %v758, 0.0
  %v2290 = vmax.f32 %v763, 0.0
  %v2291 = vmax.f32 %v766, 0.0
  %v2292 = vmax.f32 %v771, 0.0
  %v2293 = vmax.f32 %v774, 0.0
  %v2294 = vmax.f32 %v779, 0.0
  %v2295 = vmax.f32 %v782, 0.0
  %v2296 = vmax.f32 %v787, 0.0
  %v2297 = vmax.f32 %v790, 0.0
  %v2298 = vmax.f32 %v795, 0.0
  %v2299 = vmax.f32 %v798, 0.0
  %v2300 = vmax.f32 %v803, 0.0
  %v2301 = vmax.f32 %v806, 0.0
  %v2302 = vmax.f32 %v811, 0.0
  %v2303 = vmax.f32 %v814, 0.0
  %v2304 = vmax.f32 %v819, 0.0
  %v2305 = vmax.f32 %v822, 0.0
  %v2306 = vmax.f32 %v827, 0.0
  %v2307 = vmax.f32 %v830, 0.0
  %v2308 = vmax.f32 %v835, 0.0
  %v2309 = vmax.f32 %v838, 0.0
  %v2310 = vmax.f32 %v843, 0.0
  %v2311 = vmax.f32 %v846, 0.0
  %v2312 = vmax.f32 %v851, 0.0
  %v2313 = vmax.f32 %v854, 0.0
  %v2314 = vmax.f32 %v859, 0.0
  %v2315 = vmax.f32 %v862, 0.0
  %v2316 = vmax.f32 %v867, 0.0
  %v2317 = vmax.f32 %v870, 0.0
  %v2318 = vmax.f32 %v875, 0.0
  %v2319 = vmax.f32 %v878, 0.0
  %v2320 = vmax.f32 %v883, 0.0
  %v2321 = vmax.f32 %v886, 0.0
  %v2322 = vmax.f32 %v891, 0.0
  %v2323 = vmax.f32 %v894, 0.0
  %v2324 = vmax.f32 %v899, 0.0
  %v2325 = vmax.f32 %v902, 0.0
  %v2326 = vmax.f32 %v907, 0.0
  %v2327 = vmax.f32 %v910, 0.0
  %v2328 = vmax.f32 %v915, 0.0
  %v2329 = vmax.f32 %v918, 0.0
  %v2330 = vmax.f32 %v923, 0.0
  %v2331 = vmax.f32 %v926, 0.0
  %v2332 = vmax.f32 %v931, 0.0
  %v2333 = vmax.f32 %v934, 0.0
  %v2334 = vmax.f32 %v939, 0.0
  %v2335 = vmax.f32 %v942, 0.0
  %v2336 = vmax.f32 %v947, 0.0
  %v2337 = vmax.f32 %v950, 0.0
  %v2338 = vmax.f32 %v955, 0.0
  %v2339 = vpack.c.bf16 %v2215, %v2214
  %v2340 = vpack.c.bf16 %v2217, %v2216
  %v2341 = vpack.c.bf16 %v2219, %v2218
  %v2342 = vpack.c.bf16 %v2221, %v2220
  %v2343 = vpack.c.bf16 %v2223, %v2222
  %v2344 = vpack.c.bf16 %v2225, %v2224
  %v2345 = vpack.c.bf16 %v2227, %v2226
  %v2346 = vpack.c.bf16 %v2229, %v2228
  %v2347 = vpack.c.bf16 %v2231, %v2230
  %v2348 = vpack.c.bf16 %v2233, %v2232
  %v2349 = vpack.c.bf16 %v2235, %v2234
  %v2350 = vpack.c.bf16 %v2237, %v2236
  %v2351 = vpack.c.bf16 %v2239, %v2238
  %v2352 = vpack.c.bf16 %v2241, %v2240
  %v2353 = vpack.c.bf16 %v2243, %v2242
  %v2354 = vpack.c.bf16 %v2245, %v2244
  %v2355 = vpack.c.bf16 %v2247, %v2246
  %v2356 = vpack.c.bf16 %v2249, %v2248
  %v2357 = vpack.c.bf16 %v2251, %v2250
  %v2358 = vpack.c.bf16 %v2253, %v2252
  %v2359 = vpack.c.bf16 %v2255, %v2254
  %v2360 = vpack.c.bf16 %v2257, %v2256
  %v2361 = vpack.c.bf16 %v2259, %v2258
  %v2362 = vpack.c.bf16 %v2261, %v2260
  %v2363 = vpack.c.bf16 %v2263, %v2262
  %v2364 = vpack.c.bf16 %v2265, %v2264
  %v2365 = vpack.c.bf16 %v2267, %v2266
  %v2366 = vpack.c.bf16 %v2269, %v2268
  %v2367 = vpack.c.bf16 %v2271, %v2270
  %v2368 = vpack.c.bf16 %v2273, %v2272
  %v2369 = vpack.c.bf16 %v2275, %v2274
  %v2370 = vpack.c.bf16 %v2277, %v2276
  %v2371 = vpack.c.bf16 %v2279, %v2278
  %v2372 = vpack.c.bf16 %v2281, %v2280
  %v2373 = vpack.c.bf16 %v2283, %v2282
  %v2374 = vpack.c.bf16 %v2285, %v2284
  %v2375 = vpack.c.bf16 %v2287, %v2286
  %v2376 = vpack.c.bf16 %v2289, %v2288
  %v2377 = vpack.c.bf16 %v2291, %v2290
  %v2378 = vpack.c.bf16 %v2293, %v2292
  %v2379 = vpack.c.bf16 %v2295, %v2294
  %v2380 = vpack.c.bf16 %v2297, %v2296
  %v2381 = vpack.c.bf16 %v2299, %v2298
  %v2382 = vpack.c.bf16 %v2301, %v2300
  %v2383 = vpack.c.bf16 %v2303, %v2302
  %v2384 = vpack.c.bf16 %v2305, %v2304
  %v2385 = vpack.c.bf16 %v2307, %v2306
  %v2386 = vpack.c.bf16 %v2309, %v2308
  %v2387 = vpack.c.bf16 %v2311, %v2310
  %v2388 = vpack.c.bf16 %v2313, %v2312
  %v2389 = vpack.c.bf16 %v2315, %v2314
  %v2390 = vpack.c.bf16 %v2317, %v2316
  %v2391 = vpack.c.bf16 %v2319, %v2318
  %v2392 = vpack.c.bf16 %v2321, %v2320
  %v2393 = vpack.c.bf16 %v2323, %v2322
  %v2394 = vpack.c.bf16 %v2325, %v2324
  %v2395 = vpack.c.bf16 %v2327, %v2326
  %v2396 = vpack.c.bf16 %v2329, %v2328
  %v2397 = vpack.c.bf16 %v2331, %v2330
  %v2398 = vpack.c.bf16 %v2333, %v2332
  %v2399 = vpack.c.bf16 %v2335, %v2334
  %v2400 = vpack.c.bf16 %v2337, %v2336
  %v2401 = vpack.c.bf16 %v2338, %v2338
  %v2402 = vld [vmem:[%s3] sm:$0xf]
  %v2403 = vld [vmem:[%s3 + $0x4] sm:$0xf]
  %v2404 = vld [vmem:[%s3 + $0x8] sm:$0xf]
  %v2405 = vld [vmem:[%s3 + $0xc] sm:$0xf]
  %v2406 = vld [vmem:[%s3 + $0x10] sm:$0xf]
  %v2407 = vld [vmem:[%s3 + $0x14] sm:$0xf]
  %v2408 = vld [vmem:[%s3 + $0x18] sm:$0xf]
  %v2409 = vld [vmem:[%s3 + $0x1c] sm:$0xf]
  %v2410 = vld [vmem:[%s3 + $0x20] sm:$0xf]
  %v2411 = vld [vmem:[%s3 + $0x24] sm:$0xf]
  %v2412 = vld [vmem:[%s3 + $0x28] sm:$0xf]
  %v2413 = vld [vmem:[%s3 + $0x2c] sm:$0xf]
  %v2414 = vld [vmem:[%s3 + $0x30] sm:$0xf]
  %v2415 = vld [vmem:[%s3 + $0x34] sm:$0xf]
  %v2416 = vld [vmem:[%s3 + $0x38] sm:$0xf]
  %v2417 = vld [vmem:[%s3 + $0x3c] sm:$0xf]
  %v2418 = vld [vmem:[%s4] sm:$0x1]
  %v2420 = vlaneseq
  %v2421 = vshrl.u32 %v2420, 7
  %v2422 = vsub.s32 0, %v2421
  %v2423 = vrot.slane %v2418, %v2422
  %v2441 = vunpack.c.l.b16 %v2402
  %v2442 = vunpack.c.l.b16 %v2403
  %v2443 = vunpack.c.l.b16 %v2404
  %v2444 = vunpack.c.l.b16 %v2405
  %v2445 = vunpack.c.l.b16 %v2406
  %v2446 = vunpack.c.l.b16 %v2407
  %v2447 = vunpack.c.l.b16 %v2408
  %v2448 = vunpack.c.l.b16 %v2409
  %v2449 = vunpack.c.l.b16 %v2410
  %v2450 = vunpack.c.l.b16 %v2411
  %v2451 = vunpack.c.l.b16 %v2412
  %v2452 = vunpack.c.l.b16 %v2413
  %v2453 = vunpack.c.l.b16 %v2414
  %v2454 = vunpack.c.l.b16 %v2415
  %v2455 = vunpack.c.l.b16 %v2416
  %v2456 = vunpack.c.l.b16 %v2417
  %v2457 = vpack.c.b16 %v2442, %v2441
  %v2458 = vpack.c.b16 %v2444, %v2443
  %v2459 = vpack.c.b16 %v2446, %v2445
  %v2460 = vpack.c.b16 %v2448, %v2447
  %v2461 = vpack.c.b16 %v2450, %v2449
  %v2462 = vpack.c.b16 %v2452, %v2451
  %v2463 = vpack.c.b16 %v2454, %v2453
  %v2464 = vpack.c.b16 %v2456, %v2455
  %2473 = vmatprep.subr.bf16.mxu0 0
  %2474 = vmatpush1.bf16.msra.mxu0 %v2464
  %2475 = vmatprep.subr.bf16.mxu0 0
  %2476 = vmatpush1.bf16.msra.mxu0 %v2463
  %2477 = vmatprep.subr.bf16.mxu0 0
  %2478 = vmatpush1.bf16.msra.mxu0 %v2462
  %2479 = vmatprep.subr.bf16.mxu0 0
  %2480 = vmatpush1.bf16.msra.mxu0 %v2461
  %2481 = vmatprep.subr.bf16.mxu0 0
  %2482 = vmatpush1.bf16.msra.mxu0 %v2460
  %2483 = vmatprep.subr.bf16.mxu0 0
  %2484 = vmatpush1.bf16.msra.mxu0 %v2459
  %2485 = vmatprep.subr.bf16.mxu0 0
  %2486 = vmatpush1.bf16.msra.mxu0 %v2458
  %2487 = vmatprep.subr.bf16.mxu0 0
  %2488 = vmatpush1.bf16.msra.mxu0 %v2457
  %2489 = vmatprep.subr.bf16.mxu0 0
  %2490 = vmatpush2.bf16.msra.mxu0 0
  %2491 = vmatprep.subr.bf16.mxu0 0
  %2492 = vmatpush2.bf16.msra.mxu0 0
  %2493 = vmatprep.subr.bf16.mxu0 0
  %2494 = vmatpush2.bf16.msra.mxu0 0
  %2495 = vmatprep.subr.bf16.mxu0 0
  %2496 = vmatpush2.bf16.msra.mxu0 0
  %2497 = vmatprep.subr.bf16.mxu0 0
  %2498 = vmatpush2.bf16.msra.mxu0 0
  %2499 = vmatprep.subr.bf16.mxu0 0
  %2500 = vmatpush2.bf16.msra.mxu0 0
  %2501 = vmatprep.subr.bf16.mxu0 0
  %2502 = vmatpush2.bf16.msra.mxu0 0
  %2503 = vmatprep.subr.bf16.mxu0 0
  %2504 = vmatpush2.bf16.msra.mxu0 0
  %2505 = vmatprep.mubr.bf16.mxu0 0
  %2506 = vmatmul.mubr.bf16.gmra.mxu0 %v2339
  %v2507 = vpop.f32.mrf.mxu0
  %v2508 = vadd.f32 %v2423, %v2507
  %v2509 = vpop.f32.mrf.mxu0
  %v2510 = vpop.f32.mrf.mxu0
  %v2511 = vadd.f32 %v2423, %v2510
  %v2512 = vpop.f32.mrf.mxu0
  %2513 = vmatprep.mubr.bf16.mxu0 0
  %2514 = vmatmul.mubr.bf16.gmra.mxu0 %v2340
  %v2515 = vpop.f32.mrf.mxu0
  %v2516 = vadd.f32 %v2423, %v2515
  %v2517 = vpop.f32.mrf.mxu0
  %v2518 = vpop.f32.mrf.mxu0
  %v2519 = vadd.f32 %v2423, %v2518
  %v2520 = vpop.f32.mrf.mxu0
  %2521 = vmatprep.mubr.bf16.mxu0 0
  %2522 = vmatmul.mubr.bf16.gmra.mxu0 %v2341
  %v2523 = vpop.f32.mrf.mxu0
  %v2524 = vadd.f32 %v2423, %v2523
  %v2525 = vpop.f32.mrf.mxu0
  %v2526 = vpop.f32.mrf.mxu0
  %v2527 = vadd.f32 %v2423, %v2526
  %v2528 = vpop.f32.mrf.mxu0
  %2529 = vmatprep.mubr.bf16.mxu0 0
  %2530 = vmatmul.mubr.bf16.gmra.mxu0 %v2342
  %v2531 = vpop.f32.mrf.mxu0
  %v2532 = vadd.f32 %v2423, %v2531
  %v2533 = vpop.f32.mrf.mxu0
  %v2534 = vpop.f32.mrf.mxu0
  %v2535 = vadd.f32 %v2423, %v2534
  %v2536 = vpop.f32.mrf.mxu0
  %2537 = vmatprep.mubr.bf16.mxu0 0
  %2538 = vmatmul.mubr.bf16.gmra.mxu0 %v2343
  %v2539 = vpop.f32.mrf.mxu0
  %v2540 = vadd.f32 %v2423, %v2539
  %v2541 = vpop.f32.mrf.mxu0
  %v2542 = vpop.f32.mrf.mxu0
  %v2543 = vadd.f32 %v2423, %v2542
  %v2544 = vpop.f32.mrf.mxu0
  %2545 = vmatprep.mubr.bf16.mxu0 0
  %2546 = vmatmul.mubr.bf16.gmra.mxu0 %v2344
  %v2547 = vpop.f32.mrf.mxu0
  %v2548 = vadd.f32 %v2423, %v2547
  %v2549 = vpop.f32.mrf.mxu0
  %v2550 = vpop.f32.mrf.mxu0
  %v2551 = vadd.f32 %v2423, %v2550
  %v2552 = vpop.f32.mrf.mxu0
  %2553 = vmatprep.mubr.bf16.mxu0 0
  %2554 = vmatmul.mubr.bf16.gmra.mxu0 %v2345
  %v2555 = vpop.f32.mrf.mxu0
  %v2556 = vadd.f32 %v2423, %v2555
  %v2557 = vpop.f32.mrf.mxu0
  %v2558 = vpop.f32.mrf.mxu0
  %v2559 = vadd.f32 %v2423, %v2558
  %v2560 = vpop.f32.mrf.mxu0
  %2561 = vmatprep.mubr.bf16.mxu0 0
  %2562 = vmatmul.mubr.bf16.gmra.mxu0 %v2346
  %v2563 = vpop.f32.mrf.mxu0
  %v2564 = vadd.f32 %v2423, %v2563
  %v2565 = vpop.f32.mrf.mxu0
  %v2566 = vpop.f32.mrf.mxu0
  %v2567 = vadd.f32 %v2423, %v2566
  %v2568 = vpop.f32.mrf.mxu0
  %2569 = vmatprep.mubr.bf16.mxu0 0
  %2570 = vmatmul.mubr.bf16.gmra.mxu0 %v2347
  %v2571 = vpop.f32.mrf.mxu0
  %v2572 = vadd.f32 %v2423, %v2571
  %v2573 = vpop.f32.mrf.mxu0
  %v2574 = vpop.f32.mrf.mxu0
  %v2575 = vadd.f32 %v2423, %v2574
  %v2576 = vpop.f32.mrf.mxu0
  %2577 = vmatprep.mubr.bf16.mxu0 0
  %2578 = vmatmul.mubr.bf16.gmra.mxu0 %v2348
  %v2579 = vpop.f32.mrf.mxu0
  %v2580 = vadd.f32 %v2423, %v2579
  %v2581 = vpop.f32.mrf.mxu0
  %v2582 = vpop.f32.mrf.mxu0
  %v2583 = vadd.f32 %v2423, %v2582
  %v2584 = vpop.f32.mrf.mxu0
  %2585 = vmatprep.mubr.bf16.mxu0 0
  %2586 = vmatmul.mubr.bf16.gmra.mxu0 %v2349
  %v2587 = vpop.f32.mrf.mxu0
  %v2588 = vadd.f32 %v2423, %v2587
  %v2589 = vpop.f32.mrf.mxu0
  %v2590 = vpop.f32.mrf.mxu0
  %v2591 = vadd.f32 %v2423, %v2590
  %v2592 = vpop.f32.mrf.mxu0
  %2593 = vmatprep.mubr.bf16.mxu0 0
  %2594 = vmatmul.mubr.bf16.gmra.mxu0 %v2350
  %v2595 = vpop.f32.mrf.mxu0
  %v2596 = vadd.f32 %v2423, %v2595
  %v2597 = vpop.f32.mrf.mxu0
  %v2598 = vpop.f32.mrf.mxu0
  %v2599 = vadd.f32 %v2423, %v2598
  %v2600 = vpop.f32.mrf.mxu0
  %2601 = vmatprep.mubr.bf16.mxu0 0
  %2602 = vmatmul.mubr.bf16.gmra.mxu0 %v2351
  %v2603 = vpop.f32.mrf.mxu0
  %v2604 = vadd.f32 %v2423, %v2603
  %v2605 = vpop.f32.mrf.mxu0
  %v2606 = vpop.f32.mrf.mxu0
  %v2607 = vadd.f32 %v2423, %v2606
  %v2608 = vpop.f32.mrf.mxu0
  %2609 = vmatprep.mubr.bf16.mxu0 0
  %2610 = vmatmul.mubr.bf16.gmra.mxu0 %v2352
  %v2611 = vpop.f32.mrf.mxu0
  %v2612 = vadd.f32 %v2423, %v2611
  %v2613 = vpop.f32.mrf.mxu0
  %v2614 = vpop.f32.mrf.mxu0
  %v2615 = vadd.f32 %v2423, %v2614
  %v2616 = vpop.f32.mrf.mxu0
  %2617 = vmatprep.mubr.bf16.mxu0 0
  %2618 = vmatmul.mubr.bf16.gmra.mxu0 %v2353
  %v2619 = vpop.f32.mrf.mxu0
  %v2620 = vadd.f32 %v2423, %v2619
  %v2621 = vpop.f32.mrf.mxu0
  %v2622 = vpop.f32.mrf.mxu0
  %v2623 = vadd.f32 %v2423, %v2622
  %v2624 = vpop.f32.mrf.mxu0
  %2625 = vmatprep.mubr.bf16.mxu0 0
  %2626 = vmatmul.mubr.bf16.gmra.mxu0 %v2354
  %v2627 = vpop.f32.mrf.mxu0
  %v2628 = vadd.f32 %v2423, %v2627
  %v2629 = vpop.f32.mrf.mxu0
  %v2630 = vpop.f32.mrf.mxu0
  %v2631 = vadd.f32 %v2423, %v2630
  %v2632 = vpop.f32.mrf.mxu0
  %2633 = vmatprep.mubr.bf16.mxu0 0
  %2634 = vmatmul.mubr.bf16.gmra.mxu0 %v2355
  %v2635 = vpop.f32.mrf.mxu0
  %v2636 = vadd.f32 %v2423, %v2635
  %v2637 = vpop.f32.mrf.mxu0
  %v2638 = vpop.f32.mrf.mxu0
  %v2639 = vadd.f32 %v2423, %v2638
  %v2640 = vpop.f32.mrf.mxu0
  %2641 = vmatprep.mubr.bf16.mxu0 0
  %2642 = vmatmul.mubr.bf16.gmra.mxu0 %v2356
  %v2643 = vpop.f32.mrf.mxu0
  %v2644 = vadd.f32 %v2423, %v2643
  %v2645 = vpop.f32.mrf.mxu0
  %v2646 = vpop.f32.mrf.mxu0
  %v2647 = vadd.f32 %v2423, %v2646
  %v2648 = vpop.f32.mrf.mxu0
  %2649 = vmatprep.mubr.bf16.mxu0 0
  %2650 = vmatmul.mubr.bf16.gmra.mxu0 %v2357
  %v2651 = vpop.f32.mrf.mxu0
  %v2652 = vadd.f32 %v2423, %v2651
  %v2653 = vpop.f32.mrf.mxu0
  %v2654 = vpop.f32.mrf.mxu0
  %v2655 = vadd.f32 %v2423, %v2654
  %v2656 = vpop.f32.mrf.mxu0
  %2657 = vmatprep.mubr.bf16.mxu0 0
  %2658 = vmatmul.mubr.bf16.gmra.mxu0 %v2358
  %v2659 = vpop.f32.mrf.mxu0
  %v2660 = vadd.f32 %v2423, %v2659
  %v2661 = vpop.f32.mrf.mxu0
  %v2662 = vpop.f32.mrf.mxu0
  %v2663 = vadd.f32 %v2423, %v2662
  %v2664 = vpop.f32.mrf.mxu0
  %2665 = vmatprep.mubr.bf16.mxu0 0
  %2666 = vmatmul.mubr.bf16.gmra.mxu0 %v2359
  %v2667 = vpop.f32.mrf.mxu0
  %v2668 = vadd.f32 %v2423, %v2667
  %v2669 = vpop.f32.mrf.mxu0
  %v2670 = vpop.f32.mrf.mxu0
  %v2671 = vadd.f32 %v2423, %v2670
  %v2672 = vpop.f32.mrf.mxu0
  %2673 = vmatprep.mubr.bf16.mxu0 0
  %2674 = vmatmul.mubr.bf16.gmra.mxu0 %v2360
  %v2675 = vpop.f32.mrf.mxu0
  %v2676 = vadd.f32 %v2423, %v2675
  %v2677 = vpop.f32.mrf.mxu0
  %v2678 = vpop.f32.mrf.mxu0
  %v2679 = vadd.f32 %v2423, %v2678
  %v2680 = vpop.f32.mrf.mxu0
  %2681 = vmatprep.mubr.bf16.mxu0 0
  %2682 = vmatmul.mubr.bf16.gmra.mxu0 %v2361
  %v2683 = vpop.f32.mrf.mxu0
  %v2684 = vadd.f32 %v2423, %v2683
  %v2685 = vpop.f32.mrf.mxu0
  %v2686 = vpop.f32.mrf.mxu0
  %v2687 = vadd.f32 %v2423, %v2686
  %v2688 = vpop.f32.mrf.mxu0
  %2689 = vmatprep.mubr.bf16.mxu0 0
  %2690 = vmatmul.mubr.bf16.gmra.mxu0 %v2362
  %v2691 = vpop.f32.mrf.mxu0
  %v2692 = vadd.f32 %v2423, %v2691
  %v2693 = vpop.f32.mrf.mxu0
  %v2694 = vpop.f32.mrf.mxu0
  %v2695 = vadd.f32 %v2423, %v2694
  %v2696 = vpop.f32.mrf.mxu0
  %2697 = vmatprep.mubr.bf16.mxu0 0
  %2698 = vmatmul.mubr.bf16.gmra.mxu0 %v2363
  %v2699 = vpop.f32.mrf.mxu0
  %v2700 = vadd.f32 %v2423, %v2699
  %v2701 = vpop.f32.mrf.mxu0
  %v2702 = vpop.f32.mrf.mxu0
  %v2703 = vadd.f32 %v2423, %v2702
  %v2704 = vpop.f32.mrf.mxu0
  %2705 = vmatprep.mubr.bf16.mxu0 0
  %2706 = vmatmul.mubr.bf16.gmra.mxu0 %v2364
  %v2707 = vpop.f32.mrf.mxu0
  %v2708 = vadd.f32 %v2423, %v2707
  %v2709 = vpop.f32.mrf.mxu0
  %v2710 = vpop.f32.mrf.mxu0
  %v2711 = vadd.f32 %v2423, %v2710
  %v2712 = vpop.f32.mrf.mxu0
  %2713 = vmatprep.mubr.bf16.mxu0 0
  %2714 = vmatmul.mubr.bf16.gmra.mxu0 %v2365
  %v2715 = vpop.f32.mrf.mxu0
  %v2716 = vadd.f32 %v2423, %v2715
  %v2717 = vpop.f32.mrf.mxu0
  %v2718 = vpop.f32.mrf.mxu0
  %v2719 = vadd.f32 %v2423, %v2718
  %v2720 = vpop.f32.mrf.mxu0
  %2721 = vmatprep.mubr.bf16.mxu0 0
  %2722 = vmatmul.mubr.bf16.gmra.mxu0 %v2366
  %v2723 = vpop.f32.mrf.mxu0
  %v2724 = vadd.f32 %v2423, %v2723
  %v2725 = vpop.f32.mrf.mxu0
  %v2726 = vpop.f32.mrf.mxu0
  %v2727 = vadd.f32 %v2423, %v2726
  %v2728 = vpop.f32.mrf.mxu0
  %2729 = vmatprep.mubr.bf16.mxu0 0
  %2730 = vmatmul.mubr.bf16.gmra.mxu0 %v2367
  %v2731 = vpop.f32.mrf.mxu0
  %v2732 = vadd.f32 %v2423, %v2731
  %v2733 = vpop.f32.mrf.mxu0
  %v2734 = vpop.f32.mrf.mxu0
  %v2735 = vadd.f32 %v2423, %v2734
  %v2736 = vpop.f32.mrf.mxu0
  %2737 = vmatprep.mubr.bf16.mxu0 0
  %2738 = vmatmul.mubr.bf16.gmra.mxu0 %v2368
  %v2739 = vpop.f32.mrf.mxu0
  %v2740 = vadd.f32 %v2423, %v2739
  %v2741 = vpop.f32.mrf.mxu0
  %v2742 = vpop.f32.mrf.mxu0
  %v2743 = vadd.f32 %v2423, %v2742
  %v2744 = vpop.f32.mrf.mxu0
  %2745 = vmatprep.mubr.bf16.mxu0 0
  %2746 = vmatmul.mubr.bf16.gmra.mxu0 %v2369
  %v2747 = vpop.f32.mrf.mxu0
  %v2748 = vadd.f32 %v2423, %v2747
  %v2749 = vpop.f32.mrf.mxu0
  %v2750 = vpop.f32.mrf.mxu0
  %v2751 = vadd.f32 %v2423, %v2750
  %v2752 = vpop.f32.mrf.mxu0
  %2753 = vmatprep.mubr.bf16.mxu0 0
  %2754 = vmatmul.mubr.bf16.gmra.mxu0 %v2370
  %v2755 = vpop.f32.mrf.mxu0
  %v2756 = vadd.f32 %v2423, %v2755
  %v2757 = vpop.f32.mrf.mxu0
  %v2758 = vpop.f32.mrf.mxu0
  %v2759 = vadd.f32 %v2423, %v2758
  %v2760 = vpop.f32.mrf.mxu0
  %2761 = vmatprep.mubr.bf16.mxu0 0
  %2762 = vmatmul.mubr.bf16.gmra.mxu0 %v2371
  %v2763 = vpop.f32.mrf.mxu0
  %v2764 = vadd.f32 %v2423, %v2763
  %v2765 = vpop.f32.mrf.mxu0
  %v2766 = vpop.f32.mrf.mxu0
  %v2767 = vadd.f32 %v2423, %v2766
  %v2768 = vpop.f32.mrf.mxu0
  %2769 = vmatprep.mubr.bf16.mxu0 0
  %2770 = vmatmul.mubr.bf16.gmra.mxu0 %v2372
  %v2771 = vpop.f32.mrf.mxu0
  %v2772 = vadd.f32 %v2423, %v2771
  %v2773 = vpop.f32.mrf.mxu0
  %v2774 = vpop.f32.mrf.mxu0
  %v2775 = vadd.f32 %v2423, %v2774
  %v2776 = vpop.f32.mrf.mxu0
  %2777 = vmatprep.mubr.bf16.mxu0 0
  %2778 = vmatmul.mubr.bf16.gmra.mxu0 %v2373
  %v2779 = vpop.f32.mrf.mxu0
  %v2780 = vadd.f32 %v2423, %v2779
  %v2781 = vpop.f32.mrf.mxu0
  %v2782 = vpop.f32.mrf.mxu0
  %v2783 = vadd.f32 %v2423, %v2782
  %v2784 = vpop.f32.mrf.mxu0
  %2785 = vmatprep.mubr.bf16.mxu0 0
  %2786 = vmatmul.mubr.bf16.gmra.mxu0 %v2374
  %v2787 = vpop.f32.mrf.mxu0
  %v2788 = vadd.f32 %v2423, %v2787
  %v2789 = vpop.f32.mrf.mxu0
  %v2790 = vpop.f32.mrf.mxu0
  %v2791 = vadd.f32 %v2423, %v2790
  %v2792 = vpop.f32.mrf.mxu0
  %2793 = vmatprep.mubr.bf16.mxu0 0
  %2794 = vmatmul.mubr.bf16.gmra.mxu0 %v2375
  %v2795 = vpop.f32.mrf.mxu0
  %v2796 = vadd.f32 %v2423, %v2795
  %v2797 = vpop.f32.mrf.mxu0
  %v2798 = vpop.f32.mrf.mxu0
  %v2799 = vadd.f32 %v2423, %v2798
  %v2800 = vpop.f32.mrf.mxu0
  %2801 = vmatprep.mubr.bf16.mxu0 0
  %2802 = vmatmul.mubr.bf16.gmra.mxu0 %v2376
  %v2803 = vpop.f32.mrf.mxu0
  %v2804 = vadd.f32 %v2423, %v2803
  %v2805 = vpop.f32.mrf.mxu0
  %v2806 = vpop.f32.mrf.mxu0
  %v2807 = vadd.f32 %v2423, %v2806
  %v2808 = vpop.f32.mrf.mxu0
  %2809 = vmatprep.mubr.bf16.mxu0 0
  %2810 = vmatmul.mubr.bf16.gmra.mxu0 %v2377
  %v2811 = vpop.f32.mrf.mxu0
  %v2812 = vadd.f32 %v2423, %v2811
  %v2813 = vpop.f32.mrf.mxu0
  %v2814 = vpop.f32.mrf.mxu0
  %v2815 = vadd.f32 %v2423, %v2814
  %v2816 = vpop.f32.mrf.mxu0
  %2817 = vmatprep.mubr.bf16.mxu0 0
  %2818 = vmatmul.mubr.bf16.gmra.mxu0 %v2378
  %v2819 = vpop.f32.mrf.mxu0
  %v2820 = vadd.f32 %v2423, %v2819
  %v2821 = vpop.f32.mrf.mxu0
  %v2822 = vpop.f32.mrf.mxu0
  %v2823 = vadd.f32 %v2423, %v2822
  %v2824 = vpop.f32.mrf.mxu0
  %2825 = vmatprep.mubr.bf16.mxu0 0
  %2826 = vmatmul.mubr.bf16.gmra.mxu0 %v2379
  %v2827 = vpop.f32.mrf.mxu0
  %v2828 = vadd.f32 %v2423, %v2827
  %v2829 = vpop.f32.mrf.mxu0
  %v2830 = vpop.f32.mrf.mxu0
  %v2831 = vadd.f32 %v2423, %v2830
  %v2832 = vpop.f32.mrf.mxu0
  %2833 = vmatprep.mubr.bf16.mxu0 0
  %2834 = vmatmul.mubr.bf16.gmra.mxu0 %v2380
  %v2835 = vpop.f32.mrf.mxu0
  %v2836 = vadd.f32 %v2423, %v2835
  %v2837 = vpop.f32.mrf.mxu0
  %v2838 = vpop.f32.mrf.mxu0
  %v2839 = vadd.f32 %v2423, %v2838
  %v2840 = vpop.f32.mrf.mxu0
  %2841 = vmatprep.mubr.bf16.mxu0 0
  %2842 = vmatmul.mubr.bf16.gmra.mxu0 %v2381
  %v2843 = vpop.f32.mrf.mxu0
  %v2844 = vadd.f32 %v2423, %v2843
  %v2845 = vpop.f32.mrf.mxu0
  %v2846 = vpop.f32.mrf.mxu0
  %v2847 = vadd.f32 %v2423, %v2846
  %v2848 = vpop.f32.mrf.mxu0
  %2849 = vmatprep.mubr.bf16.mxu0 0
  %2850 = vmatmul.mubr.bf16.gmra.mxu0 %v2382
  %v2851 = vpop.f32.mrf.mxu0
  %v2852 = vadd.f32 %v2423, %v2851
  %v2853 = vpop.f32.mrf.mxu0
  %v2854 = vpop.f32.mrf.mxu0
  %v2855 = vadd.f32 %v2423, %v2854
  %v2856 = vpop.f32.mrf.mxu0
  %2857 = vmatprep.mubr.bf16.mxu0 0
  %2858 = vmatmul.mubr.bf16.gmra.mxu0 %v2383
  %v2859 = vpop.f32.mrf.mxu0
  %v2860 = vadd.f32 %v2423, %v2859
  %v2861 = vpop.f32.mrf.mxu0
  %v2862 = vpop.f32.mrf.mxu0
  %v2863 = vadd.f32 %v2423, %v2862
  %v2864 = vpop.f32.mrf.mxu0
  %2865 = vmatprep.mubr.bf16.mxu0 0
  %2866 = vmatmul.mubr.bf16.gmra.mxu0 %v2384
  %v2867 = vpop.f32.mrf.mxu0
  %v2868 = vadd.f32 %v2423, %v2867
  %v2869 = vpop.f32.mrf.mxu0
  %v2870 = vpop.f32.mrf.mxu0
  %v2871 = vadd.f32 %v2423, %v2870
  %v2872 = vpop.f32.mrf.mxu0
  %2873 = vmatprep.mubr.bf16.mxu0 0
  %2874 = vmatmul.mubr.bf16.gmra.mxu0 %v2385
  %v2875 = vpop.f32.mrf.mxu0
  %v2876 = vadd.f32 %v2423, %v2875
  %v2877 = vpop.f32.mrf.mxu0
  %v2878 = vpop.f32.mrf.mxu0
  %v2879 = vadd.f32 %v2423, %v2878
  %v2880 = vpop.f32.mrf.mxu0
  %2881 = vmatprep.mubr.bf16.mxu0 0
  %2882 = vmatmul.mubr.bf16.gmra.mxu0 %v2386
  %v2883 = vpop.f32.mrf.mxu0
  %v2884 = vadd.f32 %v2423, %v2883
  %v2885 = vpop.f32.mrf.mxu0
  %v2886 = vpop.f32.mrf.mxu0
  %v2887 = vadd.f32 %v2423, %v2886
  %v2888 = vpop.f32.mrf.mxu0
  %2889 = vmatprep.mubr.bf16.mxu0 0
  %2890 = vmatmul.mubr.bf16.gmra.mxu0 %v2387
  %v2891 = vpop.f32.mrf.mxu0
  %v2892 = vadd.f32 %v2423, %v2891
  %v2893 = vpop.f32.mrf.mxu0
  %v2894 = vpop.f32.mrf.mxu0
  %v2895 = vadd.f32 %v2423, %v2894
  %v2896 = vpop.f32.mrf.mxu0
  %2897 = vmatprep.mubr.bf16.mxu0 0
  %2898 = vmatmul.mubr.bf16.gmra.mxu0 %v2388
  %v2899 = vpop.f32.mrf.mxu0
  %v2900 = vadd.f32 %v2423, %v2899
  %v2901 = vpop.f32.mrf.mxu0
  %v2902 = vpop.f32.mrf.mxu0
  %v2903 = vadd.f32 %v2423, %v2902
  %v2904 = vpop.f32.mrf.mxu0
  %2905 = vmatprep.mubr.bf16.mxu0 0
  %2906 = vmatmul.mubr.bf16.gmra.mxu0 %v2389
  %v2907 = vpop.f32.mrf.mxu0
  %v2908 = vadd.f32 %v2423, %v2907
  %v2909 = vpop.f32.mrf.mxu0
  %v2910 = vpop.f32.mrf.mxu0
  %v2911 = vadd.f32 %v2423, %v2910
  %v2912 = vpop.f32.mrf.mxu0
  %2913 = vmatprep.mubr.bf16.mxu0 0
  %2914 = vmatmul.mubr.bf16.gmra.mxu0 %v2390
  %v2915 = vpop.f32.mrf.mxu0
  %v2916 = vadd.f32 %v2423, %v2915
  %v2917 = vpop.f32.mrf.mxu0
  %v2918 = vpop.f32.mrf.mxu0
  %v2919 = vadd.f32 %v2423, %v2918
  %v2920 = vpop.f32.mrf.mxu0
  %2921 = vmatprep.mubr.bf16.mxu0 0
  %2922 = vmatmul.mubr.bf16.gmra.mxu0 %v2391
  %v2923 = vpop.f32.mrf.mxu0
  %v2924 = vadd.f32 %v2423, %v2923
  %v2925 = vpop.f32.mrf.mxu0
  %v2926 = vpop.f32.mrf.mxu0
  %v2927 = vadd.f32 %v2423, %v2926
  %v2928 = vpop.f32.mrf.mxu0
  %2929 = vmatprep.mubr.bf16.mxu0 0
  %2930 = vmatmul.mubr.bf16.gmra.mxu0 %v2392
  %v2931 = vpop.f32.mrf.mxu0
  %v2932 = vadd.f32 %v2423, %v2931
  %v2933 = vpop.f32.mrf.mxu0
  %v2934 = vpop.f32.mrf.mxu0
  %v2935 = vadd.f32 %v2423, %v2934
  %v2936 = vpop.f32.mrf.mxu0
  %2937 = vmatprep.mubr.bf16.mxu0 0
  %2938 = vmatmul.mubr.bf16.gmra.mxu0 %v2393
  %v2939 = vpop.f32.mrf.mxu0
  %v2940 = vadd.f32 %v2423, %v2939
  %v2941 = vpop.f32.mrf.mxu0
  %v2942 = vpop.f32.mrf.mxu0
  %v2943 = vadd.f32 %v2423, %v2942
  %v2944 = vpop.f32.mrf.mxu0
  %2945 = vmatprep.mubr.bf16.mxu0 0
  %2946 = vmatmul.mubr.bf16.gmra.mxu0 %v2394
  %v2947 = vpop.f32.mrf.mxu0
  %v2948 = vadd.f32 %v2423, %v2947
  %v2949 = vpop.f32.mrf.mxu0
  %v2950 = vpop.f32.mrf.mxu0
  %v2951 = vadd.f32 %v2423, %v2950
  %v2952 = vpop.f32.mrf.mxu0
  %2953 = vmatprep.mubr.bf16.mxu0 0
  %2954 = vmatmul.mubr.bf16.gmra.mxu0 %v2395
  %v2955 = vpop.f32.mrf.mxu0
  %v2956 = vadd.f32 %v2423, %v2955
  %v2957 = vpop.f32.mrf.mxu0
  %v2958 = vpop.f32.mrf.mxu0
  %v2959 = vadd.f32 %v2423, %v2958
  %v2960 = vpop.f32.mrf.mxu0
  %2961 = vmatprep.mubr.bf16.mxu0 0
  %2962 = vmatmul.mubr.bf16.gmra.mxu0 %v2396
  %v2963 = vpop.f32.mrf.mxu0
  %v2964 = vadd.f32 %v2423, %v2963
  %v2965 = vpop.f32.mrf.mxu0
  %v2966 = vpop.f32.mrf.mxu0
  %v2967 = vadd.f32 %v2423, %v2966
  %v2968 = vpop.f32.mrf.mxu0
  %2969 = vmatprep.mubr.bf16.mxu0 0
  %2970 = vmatmul.mubr.bf16.gmra.mxu0 %v2397
  %v2971 = vpop.f32.mrf.mxu0
  %v2972 = vadd.f32 %v2423, %v2971
  %v2973 = vpop.f32.mrf.mxu0
  %v2974 = vpop.f32.mrf.mxu0
  %v2975 = vadd.f32 %v2423, %v2974
  %v2976 = vpop.f32.mrf.mxu0
  %2977 = vmatprep.mubr.bf16.mxu0 0
  %2978 = vmatmul.mubr.bf16.gmra.mxu0 %v2398
  %v2979 = vpop.f32.mrf.mxu0
  %v2980 = vadd.f32 %v2423, %v2979
  %v2981 = vpop.f32.mrf.mxu0
  %v2982 = vpop.f32.mrf.mxu0
  %v2983 = vadd.f32 %v2423, %v2982
  %v2984 = vpop.f32.mrf.mxu0
  %2985 = vmatprep.mubr.bf16.mxu0 0
  %2986 = vmatmul.mubr.bf16.gmra.mxu0 %v2399
  %v2987 = vpop.f32.mrf.mxu0
  %v2988 = vadd.f32 %v2423, %v2987
  %v2989 = vpop.f32.mrf.mxu0
  %v2990 = vpop.f32.mrf.mxu0
  %v2991 = vadd.f32 %v2423, %v2990
  %v2992 = vpop.f32.mrf.mxu0
  %2993 = vmatprep.mubr.bf16.mxu0 0
  %2994 = vmatmul.mubr.bf16.gmra.mxu0 %v2400
  %v2995 = vpop.f32.mrf.mxu0
  %v2996 = vadd.f32 %v2423, %v2995
  %v2997 = vpop.f32.mrf.mxu0
  %v2998 = vpop.f32.mrf.mxu0
  %v2999 = vadd.f32 %v2423, %v2998
  %v3000 = vpop.f32.mrf.mxu0
  %3001 = vmatprep.mubr.bf16.mxu0 0
  %3002 = vmatmul.mubr.bf16.gmra.mxu0 %v2401
  %v3003 = vpop.f32.mrf.mxu0
  %v3004 = vadd.f32 %v2423, %v3003
  %v3005 = vpop.f32.mrf.mxu0
  %v3006 = vpop.f32.mrf.mxu0
  %v3007 = vpop.f32.mrf.mxu0
  %3008 = vdwg.mxu0
  %3009 = vst.msk [vmem:[%s5] sm:$0xff] %vm234, %v2508
  %3010 = vst.msk [vmem:[%s5 + $0x8] sm:$0xff] %vm234, %v2511
  %3011 = vst.msk [vmem:[%s5 + $0x10] sm:$0xff] %vm234, %v2516
  %3012 = vst.msk [vmem:[%s5 + $0x18] sm:$0xff] %vm234, %v2519
  %3013 = vst.msk [vmem:[%s5 + $0x20] sm:$0xff] %vm234, %v2524
  %3014 = vst.msk [vmem:[%s5 + $0x28] sm:$0xff] %vm234, %v2527
  %3015 = vst.msk [vmem:[%s5 + $0x30] sm:$0xff] %vm234, %v2532
  %3016 = vst.msk [vmem:[%s5 + $0x38] sm:$0xff] %vm234, %v2535
  %3017 = vst.msk [vmem:[%s5 + $0x40] sm:$0xff] %vm234, %v2540
  %3018 = vst.msk [vmem:[%s5 + $0x48] sm:$0xff] %vm234, %v2543
  %3019 = vst.msk [vmem:[%s5 + $0x50] sm:$0xff] %vm234, %v2548
  %3020 = vst.msk [vmem:[%s5 + $0x58] sm:$0xff] %vm234, %v2551
  %3021 = vst.msk [vmem:[%s5 + $0x60] sm:$0xff] %vm234, %v2556
  %3022 = vst.msk [vmem:[%s5 + $0x68] sm:$0xff] %vm234, %v2559
  %3023 = vst.msk [vmem:[%s5 + $0x70] sm:$0xff] %vm234, %v2564
  %3024 = vst.msk [vmem:[%s5 + $0x78] sm:$0xff] %vm234, %v2567
  %3025 = vst.msk [vmem:[%s5 + $0x80] sm:$0xff] %vm234, %v2572
  %3026 = vst.msk [vmem:[%s5 + $0x88] sm:$0xff] %vm234, %v2575
  %3027 = vst.msk [vmem:[%s5 + $0x90] sm:$0xff] %vm234, %v2580
  %3028 = vst.msk [vmem:[%s5 + $0x98] sm:$0xff] %vm234, %v2583
  %3029 = vst.msk [vmem:[%s5 + $0xa0] sm:$0xff] %vm234, %v2588
  %3030 = vst.msk [vmem:[%s5 + $0xa8] sm:$0xff] %vm234, %v2591
  %3031 = vst.msk [vmem:[%s5 + $0xb0] sm:$0xff] %vm234, %v2596
  %3032 = vst.msk [vmem:[%s5 + $0xb8] sm:$0xff] %vm234, %v2599
  %3033 = vst.msk [vmem:[%s5 + $0xc0] sm:$0xff] %vm234, %v2604
  %3034 = vst.msk [vmem:[%s5 + $0xc8] sm:$0xff] %vm234, %v2607
  %3035 = vst.msk [vmem:[%s5 + $0xd0] sm:$0xff] %vm234, %v2612
  %3036 = vst.msk [vmem:[%s5 + $0xd8] sm:$0xff] %vm234, %v2615
  %3037 = vst.msk [vmem:[%s5 + $0xe0] sm:$0xff] %vm234, %v2620
  %3038 = vst.msk [vmem:[%s5 + $0xe8] sm:$0xff] %vm234, %v2623
  %3039 = vst.msk [vmem:[%s5 + $0xf0] sm:$0xff] %vm234, %v2628
  %3040 = vst.msk [vmem:[%s5 + $0xf8] sm:$0xff] %vm234, %v2631
  %3041 = vst.msk [vmem:[%s5 + $0x100] sm:$0xff] %vm234, %v2636
  %3042 = vst.msk [vmem:[%s5 + $0x108] sm:$0xff] %vm234, %v2639
  %3043 = vst.msk [vmem:[%s5 + $0x110] sm:$0xff] %vm234, %v2644
  %3044 = vst.msk [vmem:[%s5 + $0x118] sm:$0xff] %vm234, %v2647
  %3045 = vst.msk [vmem:[%s5 + $0x120] sm:$0xff] %vm234, %v2652
  %3046 = vst.msk [vmem:[%s5 + $0x128] sm:$0xff] %vm234, %v2655
  %3047 = vst.msk [vmem:[%s5 + $0x130] sm:$0xff] %vm234, %v2660
  %3048 = vst.msk [vmem:[%s5 + $0x138] sm:$0xff] %vm234, %v2663
  %3049 = vst.msk [vmem:[%s5 + $0x140] sm:$0xff] %vm234, %v2668
  %3050 = vst.msk [vmem:[%s5 + $0x148] sm:$0xff] %vm234, %v2671
  %3051 = vst.msk [vmem:[%s5 + $0x150] sm:$0xff] %vm234, %v2676
  %3052 = vst.msk [vmem:[%s5 + $0x158] sm:$0xff] %vm234, %v2679
  %3053 = vst.msk [vmem:[%s5 + $0x160] sm:$0xff] %vm234, %v2684
  %3054 = vst.msk [vmem:[%s5 + $0x168] sm:$0xff] %vm234, %v2687
  %3055 = vst.msk [vmem:[%s5 + $0x170] sm:$0xff] %vm234, %v2692
  %3056 = vst.msk [vmem:[%s5 + $0x178] sm:$0xff] %vm234, %v2695
  %3057 = vst.msk [vmem:[%s5 + $0x180] sm:$0xff] %vm234, %v2700
  %3058 = vst.msk [vmem:[%s5 + $0x188] sm:$0xff] %vm234, %v2703
  %3059 = vst.msk [vmem:[%s5 + $0x190] sm:$0xff] %vm234, %v2708
  %3060 = vst.msk [vmem:[%s5 + $0x198] sm:$0xff] %vm234, %v2711
  %3061 = vst.msk [vmem:[%s5 + $0x1a0] sm:$0xff] %vm234, %v2716
  %3062 = vst.msk [vmem:[%s5 + $0x1a8] sm:$0xff] %vm234, %v2719
  %3063 = vst.msk [vmem:[%s5 + $0x1b0] sm:$0xff] %vm234, %v2724
  %3064 = vst.msk [vmem:[%s5 + $0x1b8] sm:$0xff] %vm234, %v2727
  %3065 = vst.msk [vmem:[%s5 + $0x1c0] sm:$0xff] %vm234, %v2732
  %3066 = vst.msk [vmem:[%s5 + $0x1c8] sm:$0xff] %vm234, %v2735
  %3067 = vst.msk [vmem:[%s5 + $0x1d0] sm:$0xff] %vm234, %v2740
  %3068 = vst.msk [vmem:[%s5 + $0x1d8] sm:$0xff] %vm234, %v2743
  %3069 = vst.msk [vmem:[%s5 + $0x1e0] sm:$0xff] %vm234, %v2748
  %3070 = vst.msk [vmem:[%s5 + $0x1e8] sm:$0xff] %vm234, %v2751
  %3071 = vst.msk [vmem:[%s5 + $0x1f0] sm:$0xff] %vm234, %v2756
  %3072 = vst.msk [vmem:[%s5 + $0x1f8] sm:$0xff] %vm234, %v2759
  %3073 = vst.msk [vmem:[%s5 + $0x200] sm:$0xff] %vm234, %v2764
  %3074 = vst.msk [vmem:[%s5 + $0x208] sm:$0xff] %vm234, %v2767
  %3075 = vst.msk [vmem:[%s5 + $0x210] sm:$0xff] %vm234, %v2772
  %3076 = vst.msk [vmem:[%s5 + $0x218] sm:$0xff] %vm234, %v2775
  %3077 = vst.msk [vmem:[%s5 + $0x220] sm:$0xff] %vm234, %v2780
  %3078 = vst.msk [vmem:[%s5 + $0x228] sm:$0xff] %vm234, %v2783
  %3079 = vst.msk [vmem:[%s5 + $0x230] sm:$0xff] %vm234, %v2788
  %3080 = vst.msk [vmem:[%s5 + $0x238] sm:$0xff] %vm234, %v2791
  %3081 = vst.msk [vmem:[%s5 + $0x240] sm:$0xff] %vm234, %v2796
  %3082 = vst.msk [vmem:[%s5 + $0x248] sm:$0xff] %vm234, %v2799
  %3083 = vst.msk [vmem:[%s5 + $0x250] sm:$0xff] %vm234, %v2804
  %3084 = vst.msk [vmem:[%s5 + $0x258] sm:$0xff] %vm234, %v2807
  %3085 = vst.msk [vmem:[%s5 + $0x260] sm:$0xff] %vm234, %v2812
  %3086 = vst.msk [vmem:[%s5 + $0x268] sm:$0xff] %vm234, %v2815
  %3087 = vst.msk [vmem:[%s5 + $0x270] sm:$0xff] %vm234, %v2820
  %3088 = vst.msk [vmem:[%s5 + $0x278] sm:$0xff] %vm234, %v2823
  %3089 = vst.msk [vmem:[%s5 + $0x280] sm:$0xff] %vm234, %v2828
  %3090 = vst.msk [vmem:[%s5 + $0x288] sm:$0xff] %vm234, %v2831
  %3091 = vst.msk [vmem:[%s5 + $0x290] sm:$0xff] %vm234, %v2836
  %3092 = vst.msk [vmem:[%s5 + $0x298] sm:$0xff] %vm234, %v2839
  %3093 = vst.msk [vmem:[%s5 + $0x2a0] sm:$0xff] %vm234, %v2844
  %3094 = vst.msk [vmem:[%s5 + $0x2a8] sm:$0xff] %vm234, %v2847
  %3095 = vst.msk [vmem:[%s5 + $0x2b0] sm:$0xff] %vm234, %v2852
  %3096 = vst.msk [vmem:[%s5 + $0x2b8] sm:$0xff] %vm234, %v2855
  %3097 = vst.msk [vmem:[%s5 + $0x2c0] sm:$0xff] %vm234, %v2860
  %3098 = vst.msk [vmem:[%s5 + $0x2c8] sm:$0xff] %vm234, %v2863
  %3099 = vst.msk [vmem:[%s5 + $0x2d0] sm:$0xff] %vm234, %v2868
  %3100 = vst.msk [vmem:[%s5 + $0x2d8] sm:$0xff] %vm234, %v2871
  %3101 = vst.msk [vmem:[%s5 + $0x2e0] sm:$0xff] %vm234, %v2876
  %3102 = vst.msk [vmem:[%s5 + $0x2e8] sm:$0xff] %vm234, %v2879
  %3103 = vst.msk [vmem:[%s5 + $0x2f0] sm:$0xff] %vm234, %v2884
  %3104 = vst.msk [vmem:[%s5 + $0x2f8] sm:$0xff] %vm234, %v2887
  %3105 = vst.msk [vmem:[%s5 + $0x300] sm:$0xff] %vm234, %v2892
  %3106 = vst.msk [vmem:[%s5 + $0x308] sm:$0xff] %vm234, %v2895
  %3107 = vst.msk [vmem:[%s5 + $0x310] sm:$0xff] %vm234, %v2900
  %3108 = vst.msk [vmem:[%s5 + $0x318] sm:$0xff] %vm234, %v2903
  %3109 = vst.msk [vmem:[%s5 + $0x320] sm:$0xff] %vm234, %v2908
  %3110 = vst.msk [vmem:[%s5 + $0x328] sm:$0xff] %vm234, %v2911
  %3111 = vst.msk [vmem:[%s5 + $0x330] sm:$0xff] %vm234, %v2916
  %3112 = vst.msk [vmem:[%s5 + $0x338] sm:$0xff] %vm234, %v2919
  %3113 = vst.msk [vmem:[%s5 + $0x340] sm:$0xff] %vm234, %v2924
  %3114 = vst.msk [vmem:[%s5 + $0x348] sm:$0xff] %vm234, %v2927
  %3115 = vst.msk [vmem:[%s5 + $0x350] sm:$0xff] %vm234, %v2932
  %3116 = vst.msk [vmem:[%s5 + $0x358] sm:$0xff] %vm234, %v2935
  %3117 = vst.msk [vmem:[%s5 + $0x360] sm:$0xff] %vm234, %v2940
  %3118 = vst.msk [vmem:[%s5 + $0x368] sm:$0xff] %vm234, %v2943
  %3119 = vst.msk [vmem:[%s5 + $0x370] sm:$0xff] %vm234, %v2948
  %3120 = vst.msk [vmem:[%s5 + $0x378] sm:$0xff] %vm234, %v2951
  %3121 = vst.msk [vmem:[%s5 + $0x380] sm:$0xff] %vm234, %v2956
  %3122 = vst.msk [vmem:[%s5 + $0x388] sm:$0xff] %vm234, %v2959
  %3123 = vst.msk [vmem:[%s5 + $0x390] sm:$0xff] %vm234, %v2964
  %3124 = vst.msk [vmem:[%s5 + $0x398] sm:$0xff] %vm234, %v2967
  %3125 = vst.msk [vmem:[%s5 + $0x3a0] sm:$0xff] %vm234, %v2972
  %3126 = vst.msk [vmem:[%s5 + $0x3a8] sm:$0xff] %vm234, %v2975
  %3127 = vst.msk [vmem:[%s5 + $0x3b0] sm:$0xff] %vm234, %v2980
  %3128 = vst.msk [vmem:[%s5 + $0x3b8] sm:$0xff] %vm234, %v2983
  %3129 = vst.msk [vmem:[%s5 + $0x3c0] sm:$0xff] %vm234, %v2988
  %3130 = vst.msk [vmem:[%s5 + $0x3c8] sm:$0xff] %vm234, %v2991
  %3131 = vst.msk [vmem:[%s5 + $0x3d0] sm:$0xff] %vm234, %v2996
  %3132 = vst.msk [vmem:[%s5 + $0x3d8] sm:$0xff] %vm234, %v2999
  %3133 = vst.msk [vmem:[%s5 + $0x3e0] sm:$0xff] %vm234, %v3004
  // Predicated region
  $region22: #{tpu_custom_call.1} parent=0 // pred_check
    _
  $region23: #{tpu_custom_call.1} parent=0 // pred_check_branch
    %3135 = sbr.rel (0) target = $region25
  $region24: #{tpu_custom_call.1} parent=0 // pred_region
    _
  $region25: #{tpu_custom_call.1} parent=0 // pred_fallthru
    _
  // Predicated region
  $region26: #{tpu_custom_call.1} parent=0 // pred_check
    _
  $region27: #{tpu_custom_call.1} parent=0 // pred_check_branch
    %3137 = sbr.rel (0) target = $region29
  $region28: #{tpu_custom_call.1} parent=0 // pred_region
    _
  $region29: #{tpu_custom_call.1} parent=0 // pred_fallthru
    _
  // Predicated region
  $region30: #{tpu_custom_call.1} parent=0 // pred_check
    _
  $region31: #{tpu_custom_call.1} parent=0 // pred_check_branch
    %3139 = sbr.rel (0) target = $region33
  $region32: #{tpu_custom_call.1} parent=0 // pred_region
    _
  $region33: #{tpu_custom_call.1} parent=0 // pred_fallthru
    _
  // Predicated region
  $region34: #{tpu_custom_call.1} parent=0 // pred_check
    _
  $region35: #{tpu_custom_call.1} parent=0 // pred_check_branch
    %3141 = sbr.rel (0) target = $region37
  $region36: #{tpu_custom_call.1} parent=0 // pred_region
    _
  $region37: #{tpu_custom_call.1} parent=0 // pred_fallthru
    _

</llo_original>
